<compile_context>
chip_gen: v7x
topology: tpu7x:2x2x1
jax: 0.10.0
libtpu: 0.0.40
codegen_flags: <defaults>
</compile_context>

<pallas_src>
from functools import partial

import jax
import jax.numpy as jnp
from jax.experimental import pallas as pl
from jax.experimental.pallas import tpu as pltpu

# ---- problem sizes (consistent with the module's forward) ----
H = 32     # hidden_dim
NWM = 16   # num_nodes_wm   (wm_features: [B, NWM, NWM])
NGM = 8    # num_nodes_gm   (gm_features: [B, NGM, NGM])
B = 2      # batch

VMEM_SPEC = pl.BlockSpec(memory_space=pltpu.MemorySpace.VMEM)

# dot_general dimension numbers: contract dim 0 of both operands (== lhs.T @ rhs)
_DN_T0 = (((0,), (0,)), ((), ()))


# ----------------------------- fused kernel -----------------------------

def _make_bm3_kernel(apply_transform: bool):
    """Build the fused BM3Layer forward kernel (apply_transform == (i == 0))."""

    def kernel(wm_in_ref, gm_in_ref, conn_ref,
               wm_t_w_ref, wm_t_b_ref, gm_t_w_ref, gm_t_b_ref,
               sage_w1_ref, sage_b1_ref, sage_w2_ref, sage_b2_ref,
               wm_u_w_ref, wm_u_b_ref, gm_u_w_ref, gm_u_b_ref,
               ln_wm_g_ref, ln_wm_b_ref, ln_gm_g_ref, ln_gm_b_ref,
               wm_out_ref, gm_out_ref):
        f32 = jnp.float32

        # ---------------- node translation (only when i == 0) ----------------
        if apply_transform:
            wm_h = jnp.dot(wm_in_ref[...], wm_t_w_ref[...],
                           preferred_element_type=f32) + wm_t_b_ref[...]
            gm_h = jnp.dot(gm_in_ref[...], gm_t_w_ref[...],
                           preferred_element_type=f32) + gm_t_b_ref[...]
        else:
            wm_h = wm_in_ref[...]
            gm_h = gm_in_ref[...]

        x = jnp.concatenate([wm_h, gm_h], axis=0)          # [B*(NWM+NGM), H]

        # ---- normalized bipartite mean-aggregation operators (in-kernel) ----
        conn = conn_ref[...]                               # [B*NWM, NGM]
        mask = (conn > 0.0).astype(f32)
        mn_fwd, mn_rev = [], []
        for b in range(B):
            m_b = mask[b * NWM:(b + 1) * NWM, :]           # [NWM, NGM]
            deg_f = jnp.maximum(jnp.sum(m_b, axis=0, keepdims=True), 1.0)  # [1, NGM]
            deg_r = jnp.maximum(jnp.sum(m_b, axis=1, keepdims=True), 1.0)  # [NWM, 1]
            mn_fwd.append(m_b / deg_f)   # column-normalized (dst = gm-index col)
            mn_rev.append(m_b / deg_r)   # row-normalized    (dst = wm-index row)

        zeros_f = jnp.zeros((B * NWM, H), f32)
        zeros_r = jnp.zeros((B * NGM, H), f32)

        def aggregate(src_f, src_r):
            """Mean aggregation for both edge directions on the 48-node array.

            Reproduces _prepare_graph_input's node offsets exactly:
              fwd: dst = col + b*NGM,  src = row + b*NWM
              rev: dst = row + b*NWM,  src = col + b*NGM
            (both src/dst index the concatenated [wm; gm] node array).
            """
            fb, rb = [], []
            for b in range(B):
                # fwd block: [NGM, H] = mn_fwd[b].T @ src_f[b*NWM:(b+1)*NWM]
                fb.append(jax.lax.dot_general(
                    mn_fwd[b], src_f[b * NWM:(b + 1) * NWM, :], _DN_T0,
                    preferred_element_type=f32))
                # rev block: [NWM, H] = mn_rev[b] @ src_r[b*NGM:(b+1)*NGM]
                rb.append(jnp.dot(
                    mn_rev[b], src_r[b * NGM:(b + 1) * NGM, :],
                    preferred_element_type=f32))
            aggr_f = jnp.concatenate(fb + [zeros_f], axis=0)   # rows >= B*NGM: deg 0
            aggr_r = jnp.concatenate(rb + [zeros_r], axis=0)   # rows >= B*NWM: deg 0
            return aggr_f, aggr_r

        def norm_relu(v):
            # F.normalize(v, p=2, dim=-1) then ReLU; rsqrt runs on the EUP.
            ssq = jnp.sum(v * v, axis=-1, keepdims=True)
            return jnp.maximum(v * jax.lax.rsqrt(jnp.maximum(ssq, 1e-24)), 0.0)

        def sage_level(in_f, in_r, w_packed, b_packed):
            # Both directions of one SAGE level in a single lane-dense matmul:
            #   [aggr_f | aggr_r | in_f | in_r] [48, 4H] @ W_packed [4H, 2H]
            aggr_f, aggr_r = aggregate(in_f, in_r)
            lhs = jnp.concatenate([aggr_f, aggr_r, in_f, in_r], axis=1)
            y = jnp.dot(lhs, w_packed, preferred_element_type=f32) + b_packed
            return norm_relu(y[:, :H]), norm_relu(y[:, H:])

        h1, g1 = sage_level(x, x, sage_w1_ref[...], sage_b1_ref[...])
        h2, g2 = sage_level(h1, g1, sage_w2_ref[...], sage_b2_ref[...])

        wm_msg = h2[:B * NWM, :]                           # [B*NWM, H]
        gm_msg = g2[B * NWM:, :]                           # [B*NGM, H]

        # ---- connectivity matmuls (transpose folded into dot_general) -------
        cg, cw = [], []
        for b in range(B):
            c_b = conn[b * NWM:(b + 1) * NWM, :]           # [NWM, NGM]
            cg.append(jnp.dot(c_b, gm_h[b * NGM:(b + 1) * NGM, :],
                              preferred_element_type=f32))              # [NWM, H]
            cw.append(jax.lax.dot_general(
                c_b, wm_h[b * NWM:(b + 1) * NWM, :], _DN_T0,
                preferred_element_type=f32))                            # [NGM, H]
        conn_gm = jnp.concatenate(cg, axis=0)              # [B*NWM, H]
        connT_wm = jnp.concatenate(cw, axis=0)             # [B*NGM, H]

        def ln_relu(y, g, bta):
            mean = jnp.mean(y, axis=-1, keepdims=True)
            d = y - mean
            var = jnp.mean(d * d, axis=-1, keepdims=True)
            return jnp.maximum(d * jax.lax.rsqrt(var + 1e-5) * g + bta, 0.0)

        # ---- update linears: concat removed, three K=H matmuls each ---------
        wu = wm_u_w_ref[...]                               # [3H, H]
        y_wm = (jnp.dot(wm_h, wu[0:H, :], preferred_element_type=f32)
                + jnp.dot(wm_msg, wu[H:2 * H, :], preferred_element_type=f32)
                + jnp.dot(conn_gm, wu[2 * H:3 * H, :], preferred_element_type=f32)
                + wm_u_b_ref[...])
        wm_out_ref[...] = ln_relu(y_wm, ln_wm_g_ref[...], ln_wm_b_ref[...])

        gu = gm_u_w_ref[...]                               # [3H, H]
        y_gm = (jnp.dot(gm_h, gu[0:H, :], preferred_element_type=f32)
                + jnp.dot(gm_msg, gu[H:2 * H, :], preferred_element_type=f32)
                + jnp.dot(connT_wm, gu[2 * H:3 * H, :], preferred_element_type=f32)
                + gm_u_b_ref[...])
        gm_out_ref[...] = ln_relu(y_gm, ln_gm_g_ref[...], ln_gm_b_ref[...])

    return kernel


@partial(jax.jit, static_argnames=("i",))
def bm3_forward(params, wm_features, gm_features, connectivity, i=0):
    """Fused BM3Layer forward: one pallas_call, all intermediates in VMEM."""
    wm2d = wm_features.astype(jnp.float32).reshape(B * NWM, -1)
    gm2d = gm_features.astype(jnp.float32).reshape(B * NGM, -1)
    conn2d = connectivity.astype(jnp.float32).reshape(B * NWM, NGM)

    wm_out, gm_out = pl.pallas_call(
        _make_bm3_kernel(apply_transform=(i == 0)),
        out_shape=(jax.ShapeDtypeStruct((B * NWM, H), jnp.float32),
                   jax.ShapeDtypeStruct((B * NGM, H), jnp.float32)),
        in_specs=[VMEM_SPEC] * 19,
        out_specs=(VMEM_SPEC, VMEM_SPEC),
    )(wm2d, gm2d, conn2d,
      params["wm_t_wT"], params["wm_t_b"], params["gm_t_wT"], params["gm_t_b"],
      params["sage_w1"], params["sage_b1"], params["sage_w2"], params["sage_b2"],
      params["wm_u_wT"], params["wm_u_b"], params["gm_u_wT"], params["gm_u_b"],
      params["ln_wm_g"], params["ln_wm_b"], params["ln_gm_g"], params["ln_gm_b"])

    return wm_out.reshape(B, NWM, H), gm_out.reshape(B, NGM, H)


# ---------------- deterministic init (torch-style) + one-time packing ----------------

def init_linear(key, in_f, out_f, bias=True):
    kw, kb = jax.random.split(key)
    bound = 1.0 / (in_f ** 0.5)
    w = jax.random.uniform(kw, (out_f, in_f), jnp.float32, -bound, bound)
    if bias:
        b = jax.random.uniform(kb, (out_f,), jnp.float32, -bound, bound)
        return w, b
    return w


def init_params(key):
    """Raw torch-layout parameters (used by the pure-JAX reference)."""
    ks = iter(jax.random.split(key, 12))
    p = {}
    p["wm_t_w"], p["wm_t_b"] = init_linear(next(ks), NWM, H)
    p["gm_t_w"], p["gm_t_b"] = init_linear(next(ks), NGM, H)
    for name in ["sage_wm_to_gm_1", "sage_wm_to_gm_2",
                 "sage_gm_to_wm_1", "sage_gm_to_wm_2"]:
        wl, bl = init_linear(next(ks), H, H)             # lin_l (with bias)
        wr = init_linear(next(ks), H, H, bias=False)     # lin_r (no bias)
        p[name] = (wl, bl, wr)
    p["wm_u_w"], p["wm_u_b"] = init_linear(next(ks), 3 * H, H)
    p["gm_u_w"], p["gm_u_b"] = init_linear(next(ks), 3 * H, H)
    p["ln_wm_g"] = jnp.ones((H,), jnp.float32)
    p["ln_wm_b"] = jnp.zeros((H,), jnp.float32)
    p["ln_gm_g"] = jnp.ones((H,), jnp.float32)
    p["ln_gm_b"] = jnp.zeros((H,), jnp.float32)
    return p


def pack_params(raw):
    """Pre-transpose / pre-pack weights ONCE so the forward has no glue ops."""
    f32 = jnp.float32

    def pack_sage(fwd, rev):
        wl_f, bl_f, wr_f = fwd
        wl_r, bl_r, wr_r = rev
        z = jnp.zeros((H, H), f32)
        # LHS order in the kernel: [aggr_f | aggr_r | in_f | in_r]
        w = jnp.concatenate([
            jnp.concatenate([wl_f.T, z], axis=1),
            jnp.concatenate([z, wl_r.T], axis=1),
            jnp.concatenate([wr_f.T, z], axis=1),
            jnp.concatenate([z, wr_r.T], axis=1)], axis=0)   # [4H, 2H]
        bb = jnp.concatenate([bl_f, bl_r])[None, :]          # [1, 2H]
        return w, bb

    sw1, sb1 = pack_sage(raw["sage_wm_to_gm_1"], raw["sage_gm_to_wm_1"])
    sw2, sb2 = pack_sage(raw["sage_wm_to_gm_2"], raw["sage_gm_to_wm_2"])
    return {
        "wm_t_wT": raw["wm_t_w"].T, "wm_t_b": raw["wm_t_b"][None, :],
        "gm_t_wT": raw["gm_t_w"].T, "gm_t_b": raw["gm_t_b"][None, :],
        "sage_w1": sw1, "sage_b1": sb1,
        "sage_w2": sw2, "sage_b2": sb2,
        "wm_u_wT": raw["wm_u_w"].T, "wm_u_b": raw["wm_u_b"][None, :],
        "gm_u_wT": raw["gm_u_w"].T, "gm_u_b": raw["gm_u_b"][None, :],
        "ln_wm_g": raw["ln_wm_g"][None, :], "ln_wm_b": raw["ln_wm_b"][None, :],
        "ln_gm_g": raw["ln_gm_g"][None, :], "ln_gm_b": raw["ln_gm_b"][None, :],
    }


# ---------------- pure-JAX reference (mirrors the PyTorch module) ----------------

def reference_forward(raw, wm_features, gm_features, connectivity, i=0):
    f32 = jnp.float32
    wm_features = wm_features.astype(f32)
    gm_features = gm_features.astype(f32)
    connectivity = connectivity.astype(f32)

    if i == 0:
        wm_h = wm_features @ raw["wm_t_w"].T + raw["wm_t_b"]
        gm_h = gm_features @ raw["gm_t_w"].T + raw["gm_t_b"]
    else:
        wm_h, gm_h = wm_features, gm_features

    x = jnp.concatenate([wm_h.reshape(-1, H), gm_h.reshape(-1, H)], axis=0)

    n_total = B * (NWM + NGM)
    mask = (connectivity > 0).astype(f32)
    a_fwd = jnp.zeros((n_total, n_total), f32)
    a_rev = jnp.zeros((n_total, n_total), f32)
    for b in range(B):
        a_fwd = a_fwd.at[b * NGM:(b + 1) * NGM, b * NWM:(b + 1) * NWM].set(mask[b].T)
        a_rev = a_rev.at[b * NWM:(b + 1) * NWM, b * NGM:(b + 1) * NGM].set(mask[b])

    def row_norm(a):
        deg = jnp.sum(a, axis=1, keepdims=True)
        return a / jnp.maximum(deg, 1.0)
    a_fwd, a_rev = row_norm(a_fwd), row_norm(a_rev)

    def sage(a, xin, wl, bl, wr):
        out = (a @ xin) @ wl.T + bl + xin @ wr.T
        nrm = jnp.sqrt(jnp.sum(out * out, axis=-1, keepdims=True))
        out = out / jnp.maximum(nrm, 1e-12)
        return jnp.maximum(out, 0.0)

    h1 = sage(a_fwd, x, *raw["sage_wm_to_gm_1"])
    h2 = sage(a_fwd, h1, *raw["sage_wm_to_gm_2"])
    g1 = sage(a_rev, x, *raw["sage_gm_to_wm_1"])
    g2 = sage(a_rev, g1, *raw["sage_gm_to_wm_2"])

    wm_msg = h2[:B * NWM].reshape(B, NWM, H)
    gm_msg = g2[B * NWM:].reshape(B, NGM, H)

    conn_gm = jnp.einsum('bij,bjh->bih', connectivity, gm_h)
    connT_wm = jnp.einsum('bij,bih->bjh', connectivity, wm_h)

    def upd(comb, w, bb, g, beta):
        y = comb @ w.T + bb
        mean = jnp.mean(y, -1, keepdims=True)
        var = jnp.mean((y - mean) ** 2, -1, keepdims=True)
        yn = (y - mean) / jnp.sqrt(var + 1e-5) * g + beta
        return jnp.maximum(yn, 0.0)

    wm_comb = jnp.concatenate([wm_h, wm_msg, conn_gm], axis=-1)
    gm_comb = jnp.concatenate([gm_h, gm_msg, connT_wm], axis=-1)
    wm_out = upd(wm_comb, raw["wm_u_w"], raw["wm_u_b"], raw["ln_wm_g"], raw["ln_wm_b"])
    gm_out = upd(gm_comb, raw["gm_u_w"], raw["gm_u_b"], raw["ln_gm_g"], raw["ln_gm_b"])
    return wm_out, gm_out


# ------------------------------------ main ------------------------------------

if __name__ == "__main__":
    key = jax.random.PRNGKey(0)
    k_wm, k_gm, k_mask, k_val, k_par = jax.random.split(key, 5)

    wm_features = jax.random.normal(k_wm, (B, NWM, NWM), jnp.float32)
    gm_features = jax.random.normal(k_gm, (B, NGM, NGM), jnp.float32)
    conn_mask = (jax.random.uniform(k_mask, (B, NWM, NGM)) > 0.6).astype(jnp.float32)
    connectivity = conn_mask * jax.random.uniform(k_val, (B, NWM, NGM), jnp.float32,
                                                  0.1, 1.0)

    raw = init_params(k_par)
    params = pack_params(raw)   # one-time packing; reused every forward

    wm_out, gm_out = bm3_forward(params, wm_features, gm_features, connectivity, i=0)
    jax.block_until_ready((wm_out, gm_out))

    assert wm_out.shape == (B, NWM, H) and gm_out.shape == (B, NGM, H)
    assert bool(jnp.all(jnp.isfinite(wm_out))) and bool(jnp.all(jnp.isfinite(gm_out)))

    # correctness check against a pure-JAX reference of the PyTorch module
    wm_ref, gm_ref = reference_forward(raw, wm_features, gm_features, connectivity, i=0)
    err = max(float(jnp.max(jnp.abs(wm_out - wm_ref))),
              float(jnp.max(jnp.abs(gm_out - gm_ref))))
    assert err < 5e-2, f"mismatch vs reference: {err}"

    print("KERNEL_OK")
</pallas_src>

<mosaic_0001>
module attributes {stable_mosaic.version = 11 : i64} {
  func.func @kernel(%arg0: memref<32x16xf32, #tpu.memory_space<vmem>>, %arg1: memref<16x8xf32, #tpu.memory_space<vmem>>, %arg2: memref<32x8xf32, #tpu.memory_space<vmem>>, %arg3: memref<16x32xf32, #tpu.memory_space<vmem>>, %arg4: memref<1x32xf32, #tpu.memory_space<vmem>>, %arg5: memref<8x32xf32, #tpu.memory_space<vmem>>, %arg6: memref<1x32xf32, #tpu.memory_space<vmem>>, %arg7: memref<128x64xf32, #tpu.memory_space<vmem>>, %arg8: memref<1x64xf32, #tpu.memory_space<vmem>>, %arg9: memref<128x64xf32, #tpu.memory_space<vmem>>, %arg10: memref<1x64xf32, #tpu.memory_space<vmem>>, %arg11: memref<96x32xf32, #tpu.memory_space<vmem>>, %arg12: memref<1x32xf32, #tpu.memory_space<vmem>>, %arg13: memref<96x32xf32, #tpu.memory_space<vmem>>, %arg14: memref<1x32xf32, #tpu.memory_space<vmem>>, %arg15: memref<1x32xf32, #tpu.memory_space<vmem>>, %arg16: memref<1x32xf32, #tpu.memory_space<vmem>>, %arg17: memref<1x32xf32, #tpu.memory_space<vmem>>, %arg18: memref<1x32xf32, #tpu.memory_space<vmem>>, %arg19: memref<32x32xf32, #tpu.memory_space<vmem>>, %arg20: memref<16x32xf32, #tpu.memory_space<vmem>>) attributes {dimension_semantics = [], scalar_prefetch = 0 : i64, scratch_operands = 0 : i64, tpu.core_type = #tpu.core_type<tc>} {
    %c0 = arith.constant 0 : index
    %c0_0 = arith.constant 0 : index
    %0 = vector.load %arg0[%c0, %c0_0] : memref<32x16xf32, #tpu.memory_space<vmem>>, vector<32x16xf32>
    %c0_1 = arith.constant 0 : index
    %c0_2 = arith.constant 0 : index
    %1 = vector.load %arg3[%c0_1, %c0_2] : memref<16x32xf32, #tpu.memory_space<vmem>>, vector<16x32xf32>
    %cst = arith.constant dense<0.000000e+00> : vector<32x32xf32>
    %2 = tpu.matmul %0, %1, %cst {dimension_numbers = #tpu.dot_dimension_numbers<[1], [0], [0], [1], [0, 0, 1, 1], [], []>} : vector<32x16xf32>, vector<16x32xf32>, vector<32x32xf32> -> vector<32x32xf32>
    %c0_3 = arith.constant 0 : index
    %c0_4 = arith.constant 0 : index
    %3 = vector.load %arg4[%c0_3, %c0_4] : memref<1x32xf32, #tpu.memory_space<vmem>>, vector<1x32xf32>
    %4 = vector.broadcast %3 : vector<1x32xf32> to vector<32x32xf32>
    %5 = arith.addf %2, %4 : vector<32x32xf32>
    %c0_5 = arith.constant 0 : index
    %c0_6 = arith.constant 0 : index
    %6 = vector.load %arg1[%c0_5, %c0_6] : memref<16x8xf32, #tpu.memory_space<vmem>>, vector<16x8xf32>
    %c0_7 = arith.constant 0 : index
    %c0_8 = arith.constant 0 : index
    %7 = vector.load %arg5[%c0_7, %c0_8] : memref<8x32xf32, #tpu.memory_space<vmem>>, vector<8x32xf32>
    %cst_9 = arith.constant dense<0.000000e+00> : vector<16x32xf32>
    %8 = tpu.matmul %6, %7, %cst_9 {dimension_numbers = #tpu.dot_dimension_numbers<[1], [0], [0], [1], [0, 0, 1, 1], [], []>} : vector<16x8xf32>, vector<8x32xf32>, vector<16x32xf32> -> vector<16x32xf32>
    %c0_10 = arith.constant 0 : index
    %c0_11 = arith.constant 0 : index
    %9 = vector.load %arg6[%c0_10, %c0_11] : memref<1x32xf32, #tpu.memory_space<vmem>>, vector<1x32xf32>
    %10 = vector.broadcast %9 : vector<1x32xf32> to vector<16x32xf32>
    %11 = arith.addf %8, %10 : vector<16x32xf32>
    %12 = tpu.concatenate %5, %11 in 0 : vector<32x32xf32>, vector<16x32xf32> -> vector<48x32xf32>
    %c0_12 = arith.constant 0 : index
    %c0_13 = arith.constant 0 : index
    %13 = vector.load %arg2[%c0_12, %c0_13] : memref<32x8xf32, #tpu.memory_space<vmem>>, vector<32x8xf32>
    %cst_14 = arith.constant 0.000000e+00 : f32
    %14 = vector.broadcast %cst_14 : f32 to vector<32x8xf32>
    %15 = arith.cmpf ogt, %13, %14 : vector<32x8xf32>
    %16 = arith.extui %15 : vector<32x8xi1> to vector<32x8xi32>
    %17 = arith.sitofp %16 : vector<32x8xi32> to vector<32x8xf32>
    %18 = vector.extract_strided_slice %17 {offsets = [0, 0], sizes = [16, 8], strides = [1, 1]} : vector<32x8xf32> to vector<16x8xf32>
    %cst_15 = arith.constant dense<0.000000e+00> : vector<8xf32>
    %19 = vector.multi_reduction <add>, %18, %cst_15 [0] : vector<16x8xf32> to vector<8xf32>
    %20 = vector.shape_cast %19 : vector<8xf32> to vector<1x8xf32>
    %cst_16 = arith.constant 1.000000e+00 : f32
    %21 = vector.broadcast %cst_16 : f32 to vector<1x8xf32>
    %22 = arith.maximumf %20, %21 : vector<1x8xf32>
    %cst_17 = arith.constant dense<0.000000e+00> : vector<16xf32>
    %23 = vector.multi_reduction <add>, %18, %cst_17 [1] : vector<16x8xf32> to vector<16xf32>
    %24 = vector.shape_cast %23 : vector<16xf32> to vector<16x1xf32>
    %cst_18 = arith.constant 1.000000e+00 : f32
    %25 = vector.broadcast %cst_18 : f32 to vector<16x1xf32>
    %26 = arith.maximumf %24, %25 : vector<16x1xf32>
    %27 = vector.broadcast %22 : vector<1x8xf32> to vector<16x8xf32>
    %28 = arith.divf %18, %27 : vector<16x8xf32>
    %29 = vector.broadcast %26 : vector<16x1xf32> to vector<16x8xf32>
    %30 = arith.divf %18, %29 : vector<16x8xf32>
    %31 = vector.extract_strided_slice %17 {offsets = [16, 0], sizes = [16, 8], strides = [1, 1]} : vector<32x8xf32> to vector<16x8xf32>
    %cst_19 = arith.constant dense<0.000000e+00> : vector<8xf32>
    %32 = vector.multi_reduction <add>, %31, %cst_19 [0] : vector<16x8xf32> to vector<8xf32>
    %33 = vector.shape_cast %32 : vector<8xf32> to vector<1x8xf32>
    %cst_20 = arith.constant 1.000000e+00 : f32
    %34 = vector.broadcast %cst_20 : f32 to vector<1x8xf32>
    %35 = arith.maximumf %33, %34 : vector<1x8xf32>
    %cst_21 = arith.constant dense<0.000000e+00> : vector<16xf32>
    %36 = vector.multi_reduction <add>, %31, %cst_21 [1] : vector<16x8xf32> to vector<16xf32>
    %37 = vector.shape_cast %36 : vector<16xf32> to vector<16x1xf32>
    %cst_22 = arith.constant 1.000000e+00 : f32
    %38 = vector.broadcast %cst_22 : f32 to vector<16x1xf32>
    %39 = arith.maximumf %37, %38 : vector<16x1xf32>
    %40 = vector.broadcast %35 : vector<1x8xf32> to vector<16x8xf32>
    %41 = arith.divf %31, %40 : vector<16x8xf32>
    %42 = vector.broadcast %39 : vector<16x1xf32> to vector<16x8xf32>
    %43 = arith.divf %31, %42 : vector<16x8xf32>
    %cst_23 = arith.constant 0.000000e+00 : f32
    %44 = vector.broadcast %cst_23 : f32 to vector<32x32xf32>
    %cst_24 = arith.constant 0.000000e+00 : f32
    %45 = vector.broadcast %cst_24 : f32 to vector<16x32xf32>
    %c0_25 = arith.constant 0 : index
    %c0_26 = arith.constant 0 : index
    %46 = vector.load %arg7[%c0_25, %c0_26] : memref<128x64xf32, #tpu.memory_space<vmem>>, vector<128x64xf32>
    %c0_27 = arith.constant 0 : index
    %c0_28 = arith.constant 0 : index
    %47 = vector.load %arg8[%c0_27, %c0_28] : memref<1x64xf32, #tpu.memory_space<vmem>>, vector<1x64xf32>
    %48 = vector.extract_strided_slice %12 {offsets = [0, 0], sizes = [16, 32], strides = [1, 1]} : vector<48x32xf32> to vector<16x32xf32>
    %cst_29 = arith.constant dense<0.000000e+00> : vector<8x32xf32>
    %49 = tpu.matmul %28, %48, %cst_29 {dimension_numbers = #tpu.dot_dimension_numbers<[0], [0], [1], [1], [0, 1, 1, 1], [], []>} : vector<16x8xf32>, vector<16x32xf32>, vector<8x32xf32> -> vector<8x32xf32>
    %50 = vector.extract_strided_slice %12 {offsets = [0, 0], sizes = [8, 32], strides = [1, 1]} : vector<48x32xf32> to vector<8x32xf32>
    %cst_30 = arith.constant dense<0.000000e+00> : vector<16x32xf32>
    %51 = tpu.matmul %30, %50, %cst_30 {dimension_numbers = #tpu.dot_dimension_numbers<[1], [0], [0], [1], [0, 0, 1, 1], [], []>} : vector<16x8xf32>, vector<8x32xf32>, vector<16x32xf32> -> vector<16x32xf32>
    %52 = vector.extract_strided_slice %12 {offsets = [16, 0], sizes = [16, 32], strides = [1, 1]} : vector<48x32xf32> to vector<16x32xf32>
    %cst_31 = arith.constant dense<0.000000e+00> : vector<8x32xf32>
    %53 = tpu.matmul %41, %52, %cst_31 {dimension_numbers = #tpu.dot_dimension_numbers<[0], [0], [1], [1], [0, 1, 1, 1], [], []>} : vector<16x8xf32>, vector<16x32xf32>, vector<8x32xf32> -> vector<8x32xf32>
    %54 = vector.extract_strided_slice %12 {offsets = [8, 0], sizes = [8, 32], strides = [1, 1]} : vector<48x32xf32> to vector<8x32xf32>
    %cst_32 = arith.constant dense<0.000000e+00> : vector<16x32xf32>
    %55 = tpu.matmul %43, %54, %cst_32 {dimension_numbers = #tpu.dot_dimension_numbers<[1], [0], [0], [1], [0, 0, 1, 1], [], []>} : vector<16x8xf32>, vector<8x32xf32>, vector<16x32xf32> -> vector<16x32xf32>
    %56 = tpu.concatenate %49, %53, %44 in 0 : vector<8x32xf32>, vector<8x32xf32>, vector<32x32xf32> -> vector<48x32xf32>
    %57 = tpu.concatenate %51, %55, %45 in 0 : vector<16x32xf32>, vector<16x32xf32>, vector<16x32xf32> -> vector<48x32xf32>
    %58 = tpu.concatenate %56, %57, %12, %12 in 1 : vector<48x32xf32>, vector<48x32xf32>, vector<48x32xf32>, vector<48x32xf32> -> vector<48x128xf32>
    %cst_33 = arith.constant dense<0.000000e+00> : vector<48x64xf32>
    %59 = tpu.matmul %58, %46, %cst_33 {dimension_numbers = #tpu.dot_dimension_numbers<[1], [0], [0], [1], [0, 0, 1, 1], [], []>} : vector<48x128xf32>, vector<128x64xf32>, vector<48x64xf32> -> vector<48x64xf32>
    %60 = vector.broadcast %47 : vector<1x64xf32> to vector<48x64xf32>
    %61 = arith.addf %59, %60 : vector<48x64xf32>
    %62 = vector.extract_strided_slice %61 {offsets = [0, 0], sizes = [48, 32], strides = [1, 1]} : vector<48x64xf32> to vector<48x32xf32>
    %63 = arith.mulf %62, %62 : vector<48x32xf32>
    %cst_34 = arith.constant dense<0.000000e+00> : vector<48xf32>
    %64 = vector.multi_reduction <add>, %63, %cst_34 [1] : vector<48x32xf32> to vector<48xf32>
    %65 = vector.shape_cast %64 : vector<48xf32> to vector<48x1xf32>
    %cst_35 = arith.constant 1.000000e-24 : f32
    %66 = vector.broadcast %cst_35 : f32 to vector<48x1xf32>
    %67 = arith.maximumf %65, %66 : vector<48x1xf32>
    %68 = math.rsqrt %67 : vector<48x1xf32>
    %69 = vector.broadcast %68 : vector<48x1xf32> to vector<48x32xf32>
    %70 = arith.mulf %62, %69 : vector<48x32xf32>
    %cst_36 = arith.constant 0.000000e+00 : f32
    %71 = vector.broadcast %cst_36 : f32 to vector<48x32xf32>
    %72 = arith.maximumf %70, %71 : vector<48x32xf32>
    %73 = vector.extract_strided_slice %61 {offsets = [0, 32], sizes = [48, 32], strides = [1, 1]} : vector<48x64xf32> to vector<48x32xf32>
    %74 = arith.mulf %73, %73 : vector<48x32xf32>
    %cst_37 = arith.constant dense<0.000000e+00> : vector<48xf32>
    %75 = vector.multi_reduction <add>, %74, %cst_37 [1] : vector<48x32xf32> to vector<48xf32>
    %76 = vector.shape_cast %75 : vector<48xf32> to vector<48x1xf32>
    %cst_38 = arith.constant 1.000000e-24 : f32
    %77 = vector.broadcast %cst_38 : f32 to vector<48x1xf32>
    %78 = arith.maximumf %76, %77 : vector<48x1xf32>
    %79 = math.rsqrt %78 : vector<48x1xf32>
    %80 = vector.broadcast %79 : vector<48x1xf32> to vector<48x32xf32>
    %81 = arith.mulf %73, %80 : vector<48x32xf32>
    %cst_39 = arith.constant 0.000000e+00 : f32
    %82 = vector.broadcast %cst_39 : f32 to vector<48x32xf32>
    %83 = arith.maximumf %81, %82 : vector<48x32xf32>
    %c0_40 = arith.constant 0 : index
    %c0_41 = arith.constant 0 : index
    %84 = vector.load %arg9[%c0_40, %c0_41] : memref<128x64xf32, #tpu.memory_space<vmem>>, vector<128x64xf32>
    %c0_42 = arith.constant 0 : index
    %c0_43 = arith.constant 0 : index
    %85 = vector.load %arg10[%c0_42, %c0_43] : memref<1x64xf32, #tpu.memory_space<vmem>>, vector<1x64xf32>
    %86 = vector.extract_strided_slice %72 {offsets = [0, 0], sizes = [16, 32], strides = [1, 1]} : vector<48x32xf32> to vector<16x32xf32>
    %cst_44 = arith.constant dense<0.000000e+00> : vector<8x32xf32>
    %87 = tpu.matmul %28, %86, %cst_44 {dimension_numbers = #tpu.dot_dimension_numbers<[0], [0], [1], [1], [0, 1, 1, 1], [], []>} : vector<16x8xf32>, vector<16x32xf32>, vector<8x32xf32> -> vector<8x32xf32>
    %88 = vector.extract_strided_slice %83 {offsets = [0, 0], sizes = [8, 32], strides = [1, 1]} : vector<48x32xf32> to vector<8x32xf32>
    %cst_45 = arith.constant dense<0.000000e+00> : vector<16x32xf32>
    %89 = tpu.matmul %30, %88, %cst_45 {dimension_numbers = #tpu.dot_dimension_numbers<[1], [0], [0], [1], [0, 0, 1, 1], [], []>} : vector<16x8xf32>, vector<8x32xf32>, vector<16x32xf32> -> vector<16x32xf32>
    %90 = vector.extract_strided_slice %72 {offsets = [16, 0], sizes = [16, 32], strides = [1, 1]} : vector<48x32xf32> to vector<16x32xf32>
    %cst_46 = arith.constant dense<0.000000e+00> : vector<8x32xf32>
    %91 = tpu.matmul %41, %90, %cst_46 {dimension_numbers = #tpu.dot_dimension_numbers<[0], [0], [1], [1], [0, 1, 1, 1], [], []>} : vector<16x8xf32>, vector<16x32xf32>, vector<8x32xf32> -> vector<8x32xf32>
    %92 = vector.extract_strided_slice %83 {offsets = [8, 0], sizes = [8, 32], strides = [1, 1]} : vector<48x32xf32> to vector<8x32xf32>
    %cst_47 = arith.constant dense<0.000000e+00> : vector<16x32xf32>
    %93 = tpu.matmul %43, %92, %cst_47 {dimension_numbers = #tpu.dot_dimension_numbers<[1], [0], [0], [1], [0, 0, 1, 1], [], []>} : vector<16x8xf32>, vector<8x32xf32>, vector<16x32xf32> -> vector<16x32xf32>
    %94 = tpu.concatenate %87, %91, %44 in 0 : vector<8x32xf32>, vector<8x32xf32>, vector<32x32xf32> -> vector<48x32xf32>
    %95 = tpu.concatenate %89, %93, %45 in 0 : vector<16x32xf32>, vector<16x32xf32>, vector<16x32xf32> -> vector<48x32xf32>
    %96 = tpu.concatenate %94, %95, %72, %83 in 1 : vector<48x32xf32>, vector<48x32xf32>, vector<48x32xf32>, vector<48x32xf32> -> vector<48x128xf32>
    %cst_48 = arith.constant dense<0.000000e+00> : vector<48x64xf32>
    %97 = tpu.matmul %96, %84, %cst_48 {dimension_numbers = #tpu.dot_dimension_numbers<[1], [0], [0], [1], [0, 0, 1, 1], [], []>} : vector<48x128xf32>, vector<128x64xf32>, vector<48x64xf32> -> vector<48x64xf32>
    %98 = vector.broadcast %85 : vector<1x64xf32> to vector<48x64xf32>
    %99 = arith.addf %97, %98 : vector<48x64xf32>
    %100 = vector.extract_strided_slice %99 {offsets = [0, 0], sizes = [48, 32], strides = [1, 1]} : vector<48x64xf32> to vector<48x32xf32>
    %101 = arith.mulf %100, %100 : vector<48x32xf32>
    %cst_49 = arith.constant dense<0.000000e+00> : vector<48xf32>
    %102 = vector.multi_reduction <add>, %101, %cst_49 [1] : vector<48x32xf32> to vector<48xf32>
    %103 = vector.shape_cast %102 : vector<48xf32> to vector<48x1xf32>
    %cst_50 = arith.constant 1.000000e-24 : f32
    %104 = vector.broadcast %cst_50 : f32 to vector<48x1xf32>
    %105 = arith.maximumf %103, %104 : vector<48x1xf32>
    %106 = math.rsqrt %105 : vector<48x1xf32>
    %107 = vector.broadcast %106 : vector<48x1xf32> to vector<48x32xf32>
    %108 = arith.mulf %100, %107 : vector<48x32xf32>
    %cst_51 = arith.constant 0.000000e+00 : f32
    %109 = vector.broadcast %cst_51 : f32 to vector<48x32xf32>
    %110 = arith.maximumf %108, %109 : vector<48x32xf32>
    %111 = vector.extract_strided_slice %99 {offsets = [0, 32], sizes = [48, 32], strides = [1, 1]} : vector<48x64xf32> to vector<48x32xf32>
    %112 = arith.mulf %111, %111 : vector<48x32xf32>
    %cst_52 = arith.constant dense<0.000000e+00> : vector<48xf32>
    %113 = vector.multi_reduction <add>, %112, %cst_52 [1] : vector<48x32xf32> to vector<48xf32>
    %114 = vector.shape_cast %113 : vector<48xf32> to vector<48x1xf32>
    %cst_53 = arith.constant 1.000000e-24 : f32
    %115 = vector.broadcast %cst_53 : f32 to vector<48x1xf32>
    %116 = arith.maximumf %114, %115 : vector<48x1xf32>
    %117 = math.rsqrt %116 : vector<48x1xf32>
    %118 = vector.broadcast %117 : vector<48x1xf32> to vector<48x32xf32>
    %119 = arith.mulf %111, %118 : vector<48x32xf32>
    %cst_54 = arith.constant 0.000000e+00 : f32
    %120 = vector.broadcast %cst_54 : f32 to vector<48x32xf32>
    %121 = arith.maximumf %119, %120 : vector<48x32xf32>
    %122 = vector.extract_strided_slice %110 {offsets = [0, 0], sizes = [32, 32], strides = [1, 1]} : vector<48x32xf32> to vector<32x32xf32>
    %123 = vector.extract_strided_slice %121 {offsets = [32, 0], sizes = [16, 32], strides = [1, 1]} : vector<48x32xf32> to vector<16x32xf32>
    %124 = vector.extract_strided_slice %13 {offsets = [0, 0], sizes = [16, 8], strides = [1, 1]} : vector<32x8xf32> to vector<16x8xf32>
    %125 = vector.extract_strided_slice %11 {offsets = [0, 0], sizes = [8, 32], strides = [1, 1]} : vector<16x32xf32> to vector<8x32xf32>
    %cst_55 = arith.constant dense<0.000000e+00> : vector<16x32xf32>
    %126 = tpu.matmul %124, %125, %cst_55 {dimension_numbers = #tpu.dot_dimension_numbers<[1], [0], [0], [1], [0, 0, 1, 1], [], []>} : vector<16x8xf32>, vector<8x32xf32>, vector<16x32xf32> -> vector<16x32xf32>
    %127 = vector.extract_strided_slice %5 {offsets = [0, 0], sizes = [16, 32], strides = [1, 1]} : vector<32x32xf32> to vector<16x32xf32>
    %cst_56 = arith.constant dense<0.000000e+00> : vector<8x32xf32>
    %128 = tpu.matmul %124, %127, %cst_56 {dimension_numbers = #tpu.dot_dimension_numbers<[0], [0], [1], [1], [0, 1, 1, 1], [], []>} : vector<16x8xf32>, vector<16x32xf32>, vector<8x32xf32> -> vector<8x32xf32>
    %129 = vector.extract_strided_slice %13 {offsets = [16, 0], sizes = [16, 8], strides = [1, 1]} : vector<32x8xf32> to vector<16x8xf32>
    %130 = vector.extract_strided_slice %11 {offsets = [8, 0], sizes = [8, 32], strides = [1, 1]} : vector<16x32xf32> to vector<8x32xf32>
    %cst_57 = arith.constant dense<0.000000e+00> : vector<16x32xf32>
    %131 = tpu.matmul %129, %130, %cst_57 {dimension_numbers = #tpu.dot_dimension_numbers<[1], [0], [0], [1], [0, 0, 1, 1], [], []>} : vector<16x8xf32>, vector<8x32xf32>, vector<16x32xf32> -> vector<16x32xf32>
    %132 = vector.extract_strided_slice %5 {offsets = [16, 0], sizes = [16, 32], strides = [1, 1]} : vector<32x32xf32> to vector<16x32xf32>
    %cst_58 = arith.constant dense<0.000000e+00> : vector<8x32xf32>
    %133 = tpu.matmul %129, %132, %cst_58 {dimension_numbers = #tpu.dot_dimension_numbers<[0], [0], [1], [1], [0, 1, 1, 1], [], []>} : vector<16x8xf32>, vector<16x32xf32>, vector<8x32xf32> -> vector<8x32xf32>
    %134 = tpu.concatenate %126, %131 in 0 : vector<16x32xf32>, vector<16x32xf32> -> vector<32x32xf32>
    %135 = tpu.concatenate %128, %133 in 0 : vector<8x32xf32>, vector<8x32xf32> -> vector<16x32xf32>
    %c0_59 = arith.constant 0 : index
    %c0_60 = arith.constant 0 : index
    %136 = vector.load %arg11[%c0_59, %c0_60] : memref<96x32xf32, #tpu.memory_space<vmem>>, vector<96x32xf32>
    %137 = vector.extract_strided_slice %136 {offsets = [0, 0], sizes = [32, 32], strides = [1, 1]} : vector<96x32xf32> to vector<32x32xf32>
    %cst_61 = arith.constant dense<0.000000e+00> : vector<32x32xf32>
    %138 = tpu.matmul %5, %137, %cst_61 {dimension_numbers = #tpu.dot_dimension_numbers<[1], [0], [0], [1], [0, 0, 1, 1], [], []>} : vector<32x32xf32>, vector<32x32xf32>, vector<32x32xf32> -> vector<32x32xf32>
    %139 = vector.extract_strided_slice %136 {offsets = [32, 0], sizes = [32, 32], strides = [1, 1]} : vector<96x32xf32> to vector<32x32xf32>
    %cst_62 = arith.constant dense<0.000000e+00> : vector<32x32xf32>
    %140 = tpu.matmul %122, %139, %cst_62 {dimension_numbers = #tpu.dot_dimension_numbers<[1], [0], [0], [1], [0, 0, 1, 1], [], []>} : vector<32x32xf32>, vector<32x32xf32>, vector<32x32xf32> -> vector<32x32xf32>
    %141 = arith.addf %138, %140 : vector<32x32xf32>
    %142 = vector.extract_strided_slice %136 {offsets = [64, 0], sizes = [32, 32], strides = [1, 1]} : vector<96x32xf32> to vector<32x32xf32>
    %cst_63 = arith.constant dense<0.000000e+00> : vector<32x32xf32>
    %143 = tpu.matmul %134, %142, %cst_63 {dimension_numbers = #tpu.dot_dimension_numbers<[1], [0], [0], [1], [0, 0, 1, 1], [], []>} : vector<32x32xf32>, vector<32x32xf32>, vector<32x32xf32> -> vector<32x32xf32>
    %144 = arith.addf %141, %143 : vector<32x32xf32>
    %c0_64 = arith.constant 0 : index
    %c0_65 = arith.constant 0 : index
    %145 = vector.load %arg12[%c0_64, %c0_65] : memref<1x32xf32, #tpu.memory_space<vmem>>, vector<1x32xf32>
    %146 = vector.broadcast %145 : vector<1x32xf32> to vector<32x32xf32>
    %147 = arith.addf %144, %146 : vector<32x32xf32>
    %c0_66 = arith.constant 0 : index
    %c0_67 = arith.constant 0 : index
    %148 = vector.load %arg15[%c0_66, %c0_67] : memref<1x32xf32, #tpu.memory_space<vmem>>, vector<1x32xf32>
    %c0_68 = arith.constant 0 : index
    %c0_69 = arith.constant 0 : index
    %149 = vector.load %arg16[%c0_68, %c0_69] : memref<1x32xf32, #tpu.memory_space<vmem>>, vector<1x32xf32>
    %cst_70 = arith.constant dense<0.000000e+00> : vector<32xf32>
    %150 = vector.multi_reduction <add>, %147, %cst_70 [1] : vector<32x32xf32> to vector<32xf32>
    %151 = vector.shape_cast %150 : vector<32xf32> to vector<32x1xf32>
    %cst_71 = arith.constant 3.200000e+01 : f32
    %152 = vector.broadcast %cst_71 : f32 to vector<32x1xf32>
    %153 = arith.divf %151, %152 : vector<32x1xf32>
    %154 = vector.broadcast %153 : vector<32x1xf32> to vector<32x32xf32>
    %155 = arith.subf %147, %154 : vector<32x32xf32>
    %156 = arith.mulf %155, %155 : vector<32x32xf32>
    %cst_72 = arith.constant dense<0.000000e+00> : vector<32xf32>
    %157 = vector.multi_reduction <add>, %156, %cst_72 [1] : vector<32x32xf32> to vector<32xf32>
    %158 = vector.shape_cast %157 : vector<32xf32> to vector<32x1xf32>
    %cst_73 = arith.constant 3.200000e+01 : f32
    %159 = vector.broadcast %cst_73 : f32 to vector<32x1xf32>
    %160 = arith.divf %158, %159 : vector<32x1xf32>
    %cst_74 = arith.constant 9.99999974E-6 : f32
    %161 = vector.broadcast %cst_74 : f32 to vector<32x1xf32>
    %162 = arith.addf %160, %161 : vector<32x1xf32>
    %163 = math.rsqrt %162 : vector<32x1xf32>
    %164 = vector.broadcast %163 : vector<32x1xf32> to vector<32x32xf32>
    %165 = arith.mulf %155, %164 : vector<32x32xf32>
    %166 = vector.broadcast %148 : vector<1x32xf32> to vector<32x32xf32>
    %167 = arith.mulf %165, %166 : vector<32x32xf32>
    %168 = vector.broadcast %149 : vector<1x32xf32> to vector<32x32xf32>
    %169 = arith.addf %167, %168 : vector<32x32xf32>
    %cst_75 = arith.constant 0.000000e+00 : f32
    %170 = vector.broadcast %cst_75 : f32 to vector<32x32xf32>
    %171 = arith.maximumf %169, %170 : vector<32x32xf32>
    %c0_76 = arith.constant 0 : index
    %c0_77 = arith.constant 0 : index
    %172 = vector.load %arg19[%c0_76, %c0_77] : memref<32x32xf32, #tpu.memory_space<vmem>>, vector<32x32xf32>
    tpu.vector_store %arg19[%c0_76, %c0_77], %171 {strides = array<i32>} : memref<32x32xf32, #tpu.memory_space<vmem>>, vector<32x32xf32>,
    %c0_78 = arith.constant 0 : index
    %c0_79 = arith.constant 0 : index
    %173 = vector.load %arg13[%c0_78, %c0_79] : memref<96x32xf32, #tpu.memory_space<vmem>>, vector<96x32xf32>
    %174 = vector.extract_strided_slice %173 {offsets = [0, 0], sizes = [32, 32], strides = [1, 1]} : vector<96x32xf32> to vector<32x32xf32>
    %cst_80 = arith.constant dense<0.000000e+00> : vector<16x32xf32>
    %175 = tpu.matmul %11, %174, %cst_80 {dimension_numbers = #tpu.dot_dimension_numbers<[1], [0], [0], [1], [0, 0, 1, 1], [], []>} : vector<16x32xf32>, vector<32x32xf32>, vector<16x32xf32> -> vector<16x32xf32>
    %176 = vector.extract_strided_slice %173 {offsets = [32, 0], sizes = [32, 32], strides = [1, 1]} : vector<96x32xf32> to vector<32x32xf32>
    %cst_81 = arith.constant dense<0.000000e+00> : vector<16x32xf32>
    %177 = tpu.matmul %123, %176, %cst_81 {dimension_numbers = #tpu.dot_dimension_numbers<[1], [0], [0], [1], [0, 0, 1, 1], [], []>} : vector<16x32xf32>, vector<32x32xf32>, vector<16x32xf32> -> vector<16x32xf32>
    %178 = arith.addf %175, %177 : vector<16x32xf32>
    %179 = vector.extract_strided_slice %173 {offsets = [64, 0], sizes = [32, 32], strides = [1, 1]} : vector<96x32xf32> to vector<32x32xf32>
    %cst_82 = arith.constant dense<0.000000e+00> : vector<16x32xf32>
    %180 = tpu.matmul %135, %179, %cst_82 {dimension_numbers = #tpu.dot_dimension_numbers<[1], [0], [0], [1], [0, 0, 1, 1], [], []>} : vector<16x32xf32>, vector<32x32xf32>, vector<16x32xf32> -> vector<16x32xf32>
    %181 = arith.addf %178, %180 : vector<16x32xf32>
    %c0_83 = arith.constant 0 : index
    %c0_84 = arith.constant 0 : index
    %182 = vector.load %arg14[%c0_83, %c0_84] : memref<1x32xf32, #tpu.memory_space<vmem>>, vector<1x32xf32>
    %183 = vector.broadcast %182 : vector<1x32xf32> to vector<16x32xf32>
    %184 = arith.addf %181, %183 : vector<16x32xf32>
    %c0_85 = arith.constant 0 : index
    %c0_86 = arith.constant 0 : index
    %185 = vector.load %arg17[%c0_85, %c0_86] : memref<1x32xf32, #tpu.memory_space<vmem>>, vector<1x32xf32>
    %c0_87 = arith.constant 0 : index
    %c0_88 = arith.constant 0 : index
    %186 = vector.load %arg18[%c0_87, %c0_88] : memref<1x32xf32, #tpu.memory_space<vmem>>, vector<1x32xf32>
    %cst_89 = arith.constant dense<0.000000e+00> : vector<16xf32>
    %187 = vector.multi_reduction <add>, %184, %cst_89 [1] : vector<16x32xf32> to vector<16xf32>
    %188 = vector.shape_cast %187 : vector<16xf32> to vector<16x1xf32>
    %cst_90 = arith.constant 3.200000e+01 : f32
    %189 = vector.broadcast %cst_90 : f32 to vector<16x1xf32>
    %190 = arith.divf %188, %189 : vector<16x1xf32>
    %191 = vector.broadcast %190 : vector<16x1xf32> to vector<16x32xf32>
    %192 = arith.subf %184, %191 : vector<16x32xf32>
    %193 = arith.mulf %192, %192 : vector<16x32xf32>
    %cst_91 = arith.constant dense<0.000000e+00> : vector<16xf32>
    %194 = vector.multi_reduction <add>, %193, %cst_91 [1] : vector<16x32xf32> to vector<16xf32>
    %195 = vector.shape_cast %194 : vector<16xf32> to vector<16x1xf32>
    %cst_92 = arith.constant 3.200000e+01 : f32
    %196 = vector.broadcast %cst_92 : f32 to vector<16x1xf32>
    %197 = arith.divf %195, %196 : vector<16x1xf32>
    %cst_93 = arith.constant 9.99999974E-6 : f32
    %198 = vector.broadcast %cst_93 : f32 to vector<16x1xf32>
    %199 = arith.addf %197, %198 : vector<16x1xf32>
    %200 = math.rsqrt %199 : vector<16x1xf32>
    %201 = vector.broadcast %200 : vector<16x1xf32> to vector<16x32xf32>
    %202 = arith.mulf %192, %201 : vector<16x32xf32>
    %203 = vector.broadcast %185 : vector<1x32xf32> to vector<16x32xf32>
    %204 = arith.mulf %202, %203 : vector<16x32xf32>
    %205 = vector.broadcast %186 : vector<1x32xf32> to vector<16x32xf32>
    %206 = arith.addf %204, %205 : vector<16x32xf32>
    %cst_94 = arith.constant 0.000000e+00 : f32
    %207 = vector.broadcast %cst_94 : f32 to vector<16x32xf32>
    %208 = arith.maximumf %206, %207 : vector<16x32xf32>
    %c0_95 = arith.constant 0 : index
    %c0_96 = arith.constant 0 : index
    %209 = vector.load %arg20[%c0_95, %c0_96] : memref<16x32xf32, #tpu.memory_space<vmem>>, vector<16x32xf32>
    tpu.vector_store %arg20[%c0_95, %c0_96], %208 {strides = array<i32>} : memref<16x32xf32, #tpu.memory_space<vmem>>, vector<16x32xf32>,
    return
  }
}

</mosaic_0001>

<llo_original>
// kernel: bm3_forward.1
$region0: #{bm3_forward.1}
  #allocation0 [shape = 'u32[]', space=smem, size = 0x4, offset = 0x4, fixed_abs, tag = 'smem constant byte address 0x4 - core index']
  #allocation1 [shape = 'u32[144,128]{1,0:T(1,128)}', space=vmem, size = 0x12000, scoped, tag = 'internal scratch']
  %s0 = inlined_call_operand.vmem [shape: f32[32,16], index: 0, kind: input, shape index: {}]
  %s1 = inlined_call_operand.vmem [shape: f32[16,8], index: 1, kind: input, shape index: {}]
  %s2 = inlined_call_operand.vmem [shape: f32[32,8], index: 2, kind: input, shape index: {}]
  %s3 = inlined_call_operand.vmem [shape: f32[16,32], index: 3, kind: input, shape index: {}]
  %s4 = inlined_call_operand.vmem [shape: f32[1,32], index: 4, kind: input, shape index: {}]
  %s5 = inlined_call_operand.vmem [shape: f32[8,32], index: 5, kind: input, shape index: {}]
  %s6 = inlined_call_operand.vmem [shape: f32[1,32], index: 6, kind: input, shape index: {}]
  %s7 = inlined_call_operand.vmem [shape: f32[128,64], index: 7, kind: input, shape index: {}]
  %s8 = inlined_call_operand.vmem [shape: f32[1,64], index: 8, kind: input, shape index: {}]
  %s9 = inlined_call_operand.vmem [shape: f32[128,64], index: 9, kind: input, shape index: {}]
  %s10 = inlined_call_operand.vmem [shape: f32[1,64], index: 10, kind: input, shape index: {}]
  %s11 = inlined_call_operand.vmem [shape: f32[96,32], index: 11, kind: input, shape index: {}]
  %s12 = inlined_call_operand.vmem [shape: f32[1,32], index: 12, kind: input, shape index: {}]
  %s13 = inlined_call_operand.vmem [shape: f32[96,32], index: 13, kind: input, shape index: {}]
  %s14 = inlined_call_operand.vmem [shape: f32[1,32], index: 14, kind: input, shape index: {}]
  %s15 = inlined_call_operand.vmem [shape: f32[1,32], index: 15, kind: input, shape index: {}]
  %s16 = inlined_call_operand.vmem [shape: f32[1,32], index: 16, kind: input, shape index: {}]
  %s17 = inlined_call_operand.vmem [shape: f32[1,32], index: 17, kind: input, shape index: {}]
  %s18 = inlined_call_operand.vmem [shape: f32[1,32], index: 18, kind: input, shape index: {}]
  %s19 = inlined_call_operand.hbm [shape: f32[32,32], index: 19, kind: output, shape index: {0}]
  %s20 = inlined_call_operand.hbm [shape: f32[16,32], index: 20, kind: output, shape index: {1}]
  %21 = xla_tuple %s19, %s20
  %s22 = sld [smem:[#allocation0]]
  $region94: #{bm3_forward.1} parent=0
    _
  %s24 = ssub.s32 1, %s22
  %s25 = scalar_select 0, %s24, %s22
  $region1: #{bm3_forward.1} parent=0
    #allocation2 [shape = 'u8[16384]{0}', space=vmem, size = 0x4000, scoped, tag = 'output window, operand 0, single buffered']
    #allocation3 [shape = 's32[1]{0}', space=sflag, size = 0x4, scoped, tag = 'scoped memory for bm3_forward.1']
    #allocation4 [shape = 'u8[8192]{0}', space=vmem, size = 0x2000, scoped, tag = 'output window, operand 1, single buffered']
    #allocation5 [shape = 's32[1]{0}', space=sflag, size = 0x4, scoped, tag = 'scoped memory for bm3_forward.1']
    %26 = vsyncpa [#allocation3], 0
    %27 = vsyncpa [#allocation5], 0
    // Predicated region
    $region2: #{bm3_forward.1} parent=1 // pred_check
      _
    $region3: #{bm3_forward.1} parent=1 // pred_check_branch
      %29 = sbr.rel (0) target = $region5
    $region4: #{bm3_forward.1} parent=1 // pred_region
      _
    $region5: #{bm3_forward.1} parent=1 // pred_fallthru
      _
    // Predicated region
    $region6: #{bm3_forward.1} parent=1 // pred_check
      _
    $region7: #{bm3_forward.1} parent=1 // pred_check_branch
      %31 = sbr.rel (0) target = $region9
    $region8: #{bm3_forward.1} parent=1 // pred_region
      _
    $region9: #{bm3_forward.1} parent=1 // pred_fallthru
      _
    // Predicated region
    $region10: #{bm3_forward.1} parent=1 // pred_check
      _
    $region11: #{bm3_forward.1} parent=1 // pred_check_branch
      %33 = sbr.rel (0) target = $region13
    $region12: #{bm3_forward.1} parent=1 // pred_region
      _
    $region13: #{bm3_forward.1} parent=1 // pred_fallthru
      _
    // Predicated region
    $region14: #{bm3_forward.1} parent=1 // pred_check
      _
    $region15: #{bm3_forward.1} parent=1 // pred_check_branch
      %35 = sbr.rel (0) target = $region17
    $region16: #{bm3_forward.1} parent=1 // pred_region
      _
    $region17: #{bm3_forward.1} parent=1 // pred_fallthru
      _
    // Predicated region
    $region18: #{bm3_forward.1} parent=1 // pred_check
      _
    $region19: #{bm3_forward.1} parent=1 // pred_check_branch
      %37 = sbr.rel (0) target = $region21
    $region20: #{bm3_forward.1} parent=1 // pred_region
      _
    $region21: #{bm3_forward.1} parent=1 // pred_fallthru
      _
    // Predicated region
    $region22: #{bm3_forward.1} parent=1 // pred_check
      _
    $region23: #{bm3_forward.1} parent=1 // pred_check_branch
      %39 = sbr.rel (0) target = $region25
    $region24: #{bm3_forward.1} parent=1 // pred_region
      _
    $region25: #{bm3_forward.1} parent=1 // pred_fallthru
      _
    // Predicated region
    $region26: #{bm3_forward.1} parent=1 // pred_check
      _
    $region27: #{bm3_forward.1} parent=1 // pred_check_branch
      %41 = sbr.rel (0) target = $region29
    $region28: #{bm3_forward.1} parent=1 // pred_region
      _
    $region29: #{bm3_forward.1} parent=1 // pred_fallthru
      _
    // Predicated region
    $region30: #{bm3_forward.1} parent=1 // pred_check
      _
    $region31: #{bm3_forward.1} parent=1 // pred_check_branch
      %43 = sbr.rel (0) target = $region33
    $region32: #{bm3_forward.1} parent=1 // pred_region
      _
    $region33: #{bm3_forward.1} parent=1 // pred_fallthru
      _
    // Predicated region
    $region34: #{bm3_forward.1} parent=1 // pred_check
      _
    $region35: #{bm3_forward.1} parent=1 // pred_check_branch
      %45 = sbr.rel (0) target = $region37
    $region36: #{bm3_forward.1} parent=1 // pred_region
      _
    $region37: #{bm3_forward.1} parent=1 // pred_fallthru
      _
    // Predicated region
    $region38: #{bm3_forward.1} parent=1 // pred_check
      _
    $region39: #{bm3_forward.1} parent=1 // pred_check_branch
      %47 = sbr.rel (0) target = $region41
    $region40: #{bm3_forward.1} parent=1 // pred_region
      _
    $region41: #{bm3_forward.1} parent=1 // pred_fallthru
      _
    // Predicated region
    $region42: #{bm3_forward.1} parent=1 // pred_check
      _
    $region43: #{bm3_forward.1} parent=1 // pred_check_branch
      %49 = sbr.rel (0) target = $region45
    $region44: #{bm3_forward.1} parent=1 // pred_region
      _
    $region45: #{bm3_forward.1} parent=1 // pred_fallthru
      _
    // Predicated region
    $region46: #{bm3_forward.1} parent=1 // pred_check
      _
    $region47: #{bm3_forward.1} parent=1 // pred_check_branch
      %51 = sbr.rel (0) target = $region49
    $region48: #{bm3_forward.1} parent=1 // pred_region
      _
    $region49: #{bm3_forward.1} parent=1 // pred_fallthru
      _
    // Predicated region
    $region50: #{bm3_forward.1} parent=1 // pred_check
      _
    $region51: #{bm3_forward.1} parent=1 // pred_check_branch
      %53 = sbr.rel (0) target = $region53
    $region52: #{bm3_forward.1} parent=1 // pred_region
      _
    $region53: #{bm3_forward.1} parent=1 // pred_fallthru
      _
    // Predicated region
    $region54: #{bm3_forward.1} parent=1 // pred_check
      _
    $region55: #{bm3_forward.1} parent=1 // pred_check_branch
      %55 = sbr.rel (0) target = $region57
    $region56: #{bm3_forward.1} parent=1 // pred_region
      _
    $region57: #{bm3_forward.1} parent=1 // pred_fallthru
      _
    // Predicated region
    $region58: #{bm3_forward.1} parent=1 // pred_check
      _
    $region59: #{bm3_forward.1} parent=1 // pred_check_branch
      %57 = sbr.rel (0) target = $region61
    $region60: #{bm3_forward.1} parent=1 // pred_region
      _
    $region61: #{bm3_forward.1} parent=1 // pred_fallthru
      _
    // Predicated region
    $region62: #{bm3_forward.1} parent=1 // pred_check
      _
    $region63: #{bm3_forward.1} parent=1 // pred_check_branch
      %59 = sbr.rel (0) target = $region65
    $region64: #{bm3_forward.1} parent=1 // pred_region
      _
    $region65: #{bm3_forward.1} parent=1 // pred_fallthru
      _
    // Predicated region
    $region66: #{bm3_forward.1} parent=1 // pred_check
      _
    $region67: #{bm3_forward.1} parent=1 // pred_check_branch
      %61 = sbr.rel (0) target = $region69
    $region68: #{bm3_forward.1} parent=1 // pred_region
      _
    $region69: #{bm3_forward.1} parent=1 // pred_fallthru
      _
    // Predicated region
    $region70: #{bm3_forward.1} parent=1 // pred_check
      _
    $region71: #{bm3_forward.1} parent=1 // pred_check_branch
      %63 = sbr.rel (0) target = $region73
    $region72: #{bm3_forward.1} parent=1 // pred_region
      _
    $region73: #{bm3_forward.1} parent=1 // pred_fallthru
      _
    // Predicated region
    $region74: #{bm3_forward.1} parent=1 // pred_check
      _
    $region75: #{bm3_forward.1} parent=1 // pred_check_branch
      %65 = sbr.rel (0) target = $region77
    $region76: #{bm3_forward.1} parent=1 // pred_region
      _
    $region77: #{bm3_forward.1} parent=1 // pred_fallthru
      _
    %v66 = vld [vmem:[%s0] sm:$0xff]
    %v67 = vld [vmem:[%s0 + $0x8] sm:$0xff]
    %v68 = vld [vmem:[%s0 + $0x10] sm:$0xff]
    %v69 = vld [vmem:[%s0 + $0x18] sm:$0xff]
    %v70 = vld [vmem:[%s3] sm:$0xff]
    %v71 = vld [vmem:[%s3 + $0x8] sm:$0xff]
    %v72 = vld [vmem:[%s4] sm:$0x1]
    %v74 = vlaneseq
    %v75 = vshrl.u32 %v74, 7
    %v76 = vsub.s32 0, %v75
    %v77 = vrot.slane %v72, %v76
    %vm79 = vcmask 130048
    %v81 = vsel %vm79, %v66, 0
    %v84 = vsel %vm79, %v67, 0
    %v87 = vsel %vm79, %v68, 0
    %v90 = vsel %vm79, %v69, 0
    %92 = vmatprep.subr.mxu0 0.0
    %93 = vmatpush1.msra.mxu0 %v70
    %94 = vmatprep.subr.mxu0 0.0
    %95 = vmatpush1.msra.mxu0 %v71
    %96 = vmatprep.subr.mxu0 0.0
    %97 = vmatpush1.msra.mxu0 0.0
    %98 = vmatprep.subr.mxu0 0.0
    %99 = vmatpush1.msra.mxu0 0.0
    %100 = vmatprep.subr.mxu0 0.0
    %101 = vmatpush1.msra.mxu0 0.0
    %102 = vmatprep.subr.mxu0 0.0
    %103 = vmatpush1.msra.mxu0 0.0
    %104 = vmatprep.subr.mxu0 0.0
    %105 = vmatpush1.msra.mxu0 0.0
    %106 = vmatprep.subr.mxu0 0.0
    %107 = vmatpush1.msra.mxu0 0.0
    %108 = vmatprep.subr.mxu0 0.0
    %109 = vmatpush1.msra.mxu0 0.0
    %110 = vmatprep.subr.mxu0 0.0
    %111 = vmatpush1.msra.mxu0 0.0
    %112 = vmatprep.subr.mxu0 0.0
    %113 = vmatpush1.msra.mxu0 0.0
    %114 = vmatprep.subr.mxu0 0.0
    %115 = vmatpush1.msra.mxu0 0.0
    %116 = vmatprep.subr.mxu0 0.0
    %117 = vmatpush1.msra.mxu0 0.0
    %118 = vmatprep.subr.mxu0 0.0
    %119 = vmatpush1.msra.mxu0 0.0
    %120 = vmatprep.subr.mxu0 0.0
    %121 = vmatpush1.msra.mxu0 0.0
    %122 = vmatprep.subr.mxu0 0.0
    %123 = vmatpush1.msra.mxu0 0.0
    %124 = vmatprep.subr.mxu0 0.0
    %125 = vmatpush1.msra.mxu0 0.0
    %126 = vmatprep.subr.mxu0 0.0
    %127 = vmatpush1.msra.mxu0 0.0
    %128 = vmatprep.subr.mxu0 0.0
    %129 = vmatpush1.msra.mxu0 0.0
    %130 = vmatprep.subr.mxu0 0.0
    %131 = vmatpush1.msra.mxu0 0.0
    %132 = vmatprep.subr.mxu0 0.0
    %133 = vmatpush1.msra.mxu0 0.0
    %134 = vmatprep.subr.mxu0 0.0
    %135 = vmatpush1.msra.mxu0 0.0
    %136 = vmatprep.subr.mxu0 0.0
    %137 = vmatpush1.msra.mxu0 0.0
    %138 = vmatprep.subr.mxu0 0.0
    %139 = vmatpush1.msra.mxu0 0.0
    %140 = vmatprep.subr.mxu0 0.0
    %141 = vmatpush1.msra.mxu0 0.0
    %142 = vmatprep.subr.mxu0 0.0
    %143 = vmatpush1.msra.mxu0 0.0
    %144 = vmatprep.subr.mxu0 0.0
    %145 = vmatpush1.msra.mxu0 0.0
    %146 = vmatprep.subr.mxu0 0.0
    %147 = vmatpush1.msra.mxu0 0.0
    %148 = vmatprep.subr.mxu0 0.0
    %149 = vmatpush1.msra.mxu0 0.0
    %150 = vmatprep.subr.mxu0 0.0
    %151 = vmatpush1.msra.mxu0 0.0
    %152 = vmatprep.subr.mxu0 0.0
    %153 = vmatpush1.msra.mxu0 0.0
    %154 = vmatprep.subr.mxu0 0.0
    %155 = vmatpush1.msra.mxu0 0.0
    %156 = vmatprep.mubr.f32.mxu0 0.0
    %157 = vmatmul.mubr.f32.gmra.mrb[0].mxu0 %v81
    %v158 = vpop.f32.mrb[0].mxu0
    %v159 = vadd.f32 %v77, %v158
    %v160 = vpop.f32.mrb[0].mxu0
    %161 = vmatprep.mubr.f32.mxu0 0.0
    %162 = vmatmul.mubr.f32.gmra.mrb[0].mxu0 %v84
    %v163 = vpop.f32.mrb[0].mxu0
    %v164 = vadd.f32 %v77, %v163
    %v165 = vpop.f32.mrb[0].mxu0
    %166 = vmatprep.mubr.f32.mxu0 0.0
    %167 = vmatmul.mubr.f32.gmra.mrb[0].mxu0 %v87
    %v168 = vpop.f32.mrb[0].mxu0
    %v169 = vadd.f32 %v77, %v168
    %v170 = vpop.f32.mrb[0].mxu0
    %171 = vmatprep.mubr.f32.mxu0 0.0
    %172 = vmatmul.mubr.f32.gmra.mrb[0].mxu0 %v90
    %v173 = vpop.f32.mrb[0].mxu0
    %v174 = vadd.f32 %v77, %v173
    %v175 = vpop.f32.mrb[0].mxu0
    %176 = vdwg.mxu0
    %v177 = vld [vmem:[%s1] sm:$0xff]
    %v178 = vld [vmem:[%s1 + $0x8] sm:$0xff]
    %v179 = vld [vmem:[%s5] sm:$0xff]
    %v180 = vld [vmem:[%s6] sm:$0x1]
    %v182 = vlaneseq
    %v183 = vshrl.u32 %v182, 7
    %v184 = vsub.s32 0, %v183
    %v185 = vrot.slane %v180, %v184
    %vm187 = vcmask 64512
    %v189 = vsel %vm187, %v177, 0
    %v192 = vsel %vm187, %v178, 0
    %194 = vmatprep.subr.mxu0 0.0
    %195 = vmatpush1.msra.mxu0 %v179
    %196 = vmatprep.subr.mxu0 0.0
    %197 = vmatpush1.msra.mxu0 0.0
    %198 = vmatprep.subr.mxu0 0.0
    %199 = vmatpush1.msra.mxu0 0.0
    %200 = vmatprep.subr.mxu0 0.0
    %201 = vmatpush1.msra.mxu0 0.0
    %202 = vmatprep.subr.mxu0 0.0
    %203 = vmatpush1.msra.mxu0 0.0
    %204 = vmatprep.subr.mxu0 0.0
    %205 = vmatpush1.msra.mxu0 0.0
    %206 = vmatprep.subr.mxu0 0.0
    %207 = vmatpush1.msra.mxu0 0.0
    %208 = vmatprep.subr.mxu0 0.0
    %209 = vmatpush1.msra.mxu0 0.0
    %210 = vmatprep.subr.mxu0 0.0
    %211 = vmatpush1.msra.mxu0 0.0
    %212 = vmatprep.subr.mxu0 0.0
    %213 = vmatpush1.msra.mxu0 0.0
    %214 = vmatprep.subr.mxu0 0.0
    %215 = vmatpush1.msra.mxu0 0.0
    %216 = vmatprep.subr.mxu0 0.0
    %217 = vmatpush1.msra.mxu0 0.0
    %218 = vmatprep.subr.mxu0 0.0
    %219 = vmatpush1.msra.mxu0 0.0
    %220 = vmatprep.subr.mxu0 0.0
    %221 = vmatpush1.msra.mxu0 0.0
    %222 = vmatprep.subr.mxu0 0.0
    %223 = vmatpush1.msra.mxu0 0.0
    %224 = vmatprep.subr.mxu0 0.0
    %225 = vmatpush1.msra.mxu0 0.0
    %226 = vmatprep.subr.mxu0 0.0
    %227 = vmatpush1.msra.mxu0 0.0
    %228 = vmatprep.subr.mxu0 0.0
    %229 = vmatpush1.msra.mxu0 0.0
    %230 = vmatprep.subr.mxu0 0.0
    %231 = vmatpush1.msra.mxu0 0.0
    %232 = vmatprep.subr.mxu0 0.0
    %233 = vmatpush1.msra.mxu0 0.0
    %234 = vmatprep.subr.mxu0 0.0
    %235 = vmatpush1.msra.mxu0 0.0
    %236 = vmatprep.subr.mxu0 0.0
    %237 = vmatpush1.msra.mxu0 0.0
    %238 = vmatprep.subr.mxu0 0.0
    %239 = vmatpush1.msra.mxu0 0.0
    %240 = vmatprep.subr.mxu0 0.0
    %241 = vmatpush1.msra.mxu0 0.0
    %242 = vmatprep.subr.mxu0 0.0
    %243 = vmatpush1.msra.mxu0 0.0
    %244 = vmatprep.subr.mxu0 0.0
    %245 = vmatpush1.msra.mxu0 0.0
    %246 = vmatprep.subr.mxu0 0.0
    %247 = vmatpush1.msra.mxu0 0.0
    %248 = vmatprep.subr.mxu0 0.0
    %249 = vmatpush1.msra.mxu0 0.0
    %250 = vmatprep.subr.mxu0 0.0
    %251 = vmatpush1.msra.mxu0 0.0
    %252 = vmatprep.subr.mxu0 0.0
    %253 = vmatpush1.msra.mxu0 0.0
    %254 = vmatprep.subr.mxu0 0.0
    %255 = vmatpush1.msra.mxu0 0.0
    %256 = vmatprep.subr.mxu0 0.0
    %257 = vmatpush1.msra.mxu0 0.0
    %258 = vmatprep.mubr.f32.mxu0 0.0
    %259 = vmatmul.mubr.f32.gmra.mrb[0].mxu0 %v189
    %v260 = vpop.f32.mrb[0].mxu0
    %v261 = vadd.f32 %v185, %v260
    %v262 = vpop.f32.mrb[0].mxu0
    %263 = vmatprep.mubr.f32.mxu0 0.0
    %264 = vmatmul.mubr.f32.gmra.mrb[0].mxu0 %v192
    %v265 = vpop.f32.mrb[0].mxu0
    %v266 = vadd.f32 %v185, %v265
    %v267 = vpop.f32.mrb[0].mxu0
    %268 = vdwg.mxu0
    %v269 = vld [vmem:[%s2] sm:$0xff]
    %v270 = vld [vmem:[%s2 + $0x8] sm:$0xff]
    %v271 = vld [vmem:[%s2 + $0x10] sm:$0xff]
    %v272 = vld [vmem:[%s2 + $0x18] sm:$0xff]
    %vm273 = vcmp.gt.f32.partialorder %v269, 0.0
    %vm274 = vcmp.gt.f32.partialorder %v270, 0.0
    %vm275 = vcmp.gt.f32.partialorder %v271, 0.0
    %vm276 = vcmp.gt.f32.partialorder %v272, 0.0
    %v277 = vsel %vm273, 1, 0
    %v278 = vsel %vm274, 1, 0
    %v279 = vsel %vm275, 1, 0
    %v280 = vsel %vm276, 1, 0
    %v281 = vcvt.s32.f32 %v277
    %v282 = vcvt.s32.f32 %v278
    %v283 = vcvt.s32.f32 %v279
    %v284 = vcvt.s32.f32 %v280
    %v285 = vsel %vm187, %v281, 0.0
    %v286 = vsel %vm187, %v282, 0.0
    %v287 = vadd.f32 %v285, %v286
    %v288 = vrot.slane %v287, 4
    %v289 = vadd.f32 %v287, %v288
    %v290 = vrot.slane %v289, 2
    %v291 = vadd.f32 %v289, %v290
    %v292 = vrot.slane %v291, 1
    %v293 = vadd.f32 %v291, %v292
    %v294 = vmax.f32 %v293, 1.0
    %295 = vadd.xlane.f32.xlu0 %v285
    %v296 = vpop.xlane.xlu0 %295
    %297 = vadd.xlane.f32.xlu0 %v286
    %v298 = vpop.xlane.xlu0 %297
    %v299 = vmax.f32 %v296, 1.0
    %v300 = vmax.f32 %v298, 1.0
    %v301 = vrcp.pop %v294
    %v302 = vmul.f32 %v281, %v301
    %v303 = vmul.f32 %v282, %v301
    %v304 = vrcp.pop %v299
    %v305 = vmul.f32 %v281, %v304
    %v306 = vrcp.pop %v300
    %v307 = vmul.f32 %v282, %v306
    %v308 = vsel %vm187, %v283, 0.0
    %v309 = vsel %vm187, %v284, 0.0
    %v310 = vadd.f32 %v308, %v309
    %v311 = vrot.slane %v310, 4
    %v312 = vadd.f32 %v310, %v311
    %v313 = vrot.slane %v312, 2
    %v314 = vadd.f32 %v312, %v313
    %v315 = vrot.slane %v314, 1
    %v316 = vadd.f32 %v314, %v315
    %v317 = vmax.f32 %v316, 1.0
    %318 = vadd.xlane.f32.xlu0 %v308
    %v319 = vpop.xlane.xlu0 %318
    %320 = vadd.xlane.f32.xlu0 %v309
    %v321 = vpop.xlane.xlu0 %320
    %v322 = vmax.f32 %v319, 1.0
    %v323 = vmax.f32 %v321, 1.0
    %v324 = vrcp.pop %v317
    %v325 = vmul.f32 %v283, %v324
    %v326 = vmul.f32 %v284, %v324
    %v327 = vrcp.pop %v322
    %v328 = vmul.f32 %v283, %v327
    %v329 = vrcp.pop %v323
    %v330 = vmul.f32 %v284, %v329
    %v331 = vld [vmem:[%s7] sm:$0xff]
    %v332 = vld [vmem:[%s7 + $0x8] sm:$0xff]
    %v333 = vld [vmem:[%s7 + $0x10] sm:$0xff]
    %v334 = vld [vmem:[%s7 + $0x18] sm:$0xff]
    %v335 = vld [vmem:[%s7 + $0x20] sm:$0xff]
    %v336 = vld [vmem:[%s7 + $0x28] sm:$0xff]
    %v337 = vld [vmem:[%s7 + $0x30] sm:$0xff]
    %v338 = vld [vmem:[%s7 + $0x38] sm:$0xff]
    %v339 = vld [vmem:[%s7 + $0x40] sm:$0xff]
    %v340 = vld [vmem:[%s7 + $0x48] sm:$0xff]
    %v341 = vld [vmem:[%s7 + $0x50] sm:$0xff]
    %v342 = vld [vmem:[%s7 + $0x58] sm:$0xff]
    %v343 = vld [vmem:[%s7 + $0x60] sm:$0xff]
    %v344 = vld [vmem:[%s7 + $0x68] sm:$0xff]
    %v345 = vld [vmem:[%s7 + $0x70] sm:$0xff]
    %v346 = vld [vmem:[%s7 + $0x78] sm:$0xff]
    %v347 = vld [vmem:[%s8] sm:$0x1]
    %348 = vxpose.xlu0.b32.start [1/16] %v302, 128
    %349 = vxpose.xlu0.b32.cont [2/16] %v303, 128
    %350 = vxpose.xlu0.b32.cont [3/16] 0.0, 128
    %351 = vxpose.xlu0.b32.cont [4/16] 0.0, 128
    %352 = vxpose.xlu0.b32.cont [5/16] 0.0, 128
    %353 = vxpose.xlu0.b32.cont [6/16] 0.0, 128
    %354 = vxpose.xlu0.b32.cont [7/16] 0.0, 128
    %355 = vxpose.xlu0.b32.cont [8/16] 0.0, 128
    %356 = vxpose.xlu0.b32.cont [9/16] 0.0, 128
    %357 = vxpose.xlu0.b32.cont [10/16] 0.0, 128
    %358 = vxpose.xlu0.b32.cont [11/16] 0.0, 128
    %359 = vxpose.xlu0.b32.cont [12/16] 0.0, 128
    %360 = vxpose.xlu0.b32.cont [13/16] 0.0, 128
    %361 = vxpose.xlu0.b32.cont [14/16] 0.0, 128
    %362 = vxpose.xlu0.b32.cont [15/16] 0.0, 128
    %363 = vxpose.xlu0.b32.end [16/16] 0.0, 128
    %v364 = vpop.trf.xlu0
    %v365 = vpop.trf.xlu0
    %v366 = vpop.trf.xlu0
    %v367 = vpop.trf.xlu0
    %v368 = vpop.trf.xlu0
    %v369 = vpop.trf.xlu0
    %v370 = vpop.trf.xlu0
    %v371 = vpop.trf.xlu0
    %v372 = vpop.trf.xlu0
    %v373 = vpop.trf.xlu0
    %v374 = vpop.trf.xlu0
    %v375 = vpop.trf.xlu0
    %v376 = vpop.trf.xlu0
    %v377 = vpop.trf.xlu0
    %v378 = vpop.trf.xlu0
    %v379 = vpop.trf.xlu0
    %v381 = vsel %vm79, %v364, 0
    %383 = vmatprep.subr.mxu0 0.0
    %384 = vmatpush1.msra.mxu0 %v159
    %385 = vmatprep.subr.mxu0 0.0
    %386 = vmatpush1.msra.mxu0 %v164
    %387 = vmatprep.subr.mxu0 0.0
    %388 = vmatpush1.msra.mxu0 0.0
    %389 = vmatprep.subr.mxu0 0.0
    %390 = vmatpush1.msra.mxu0 0.0
    %391 = vmatprep.subr.mxu0 0.0
    %392 = vmatpush1.msra.mxu0 0.0
    %393 = vmatprep.subr.mxu0 0.0
    %394 = vmatpush1.msra.mxu0 0.0
    %395 = vmatprep.subr.mxu0 0.0
    %396 = vmatpush1.msra.mxu0 0.0
    %397 = vmatprep.subr.mxu0 0.0
    %398 = vmatpush1.msra.mxu0 0.0
    %399 = vmatprep.subr.mxu0 0.0
    %400 = vmatpush1.msra.mxu0 0.0
    %401 = vmatprep.subr.mxu0 0.0
    %402 = vmatpush1.msra.mxu0 0.0
    %403 = vmatprep.subr.mxu0 0.0
    %404 = vmatpush1.msra.mxu0 0.0
    %405 = vmatprep.subr.mxu0 0.0
    %406 = vmatpush1.msra.mxu0 0.0
    %407 = vmatprep.subr.mxu0 0.0
    %408 = vmatpush1.msra.mxu0 0.0
    %409 = vmatprep.subr.mxu0 0.0
    %410 = vmatpush1.msra.mxu0 0.0
    %411 = vmatprep.subr.mxu0 0.0
    %412 = vmatpush1.msra.mxu0 0.0
    %413 = vmatprep.subr.mxu0 0.0
    %414 = vmatpush1.msra.mxu0 0.0
    %415 = vmatprep.subr.mxu0 0.0
    %416 = vmatpush1.msra.mxu0 0.0
    %417 = vmatprep.subr.mxu0 0.0
    %418 = vmatpush1.msra.mxu0 0.0
    %419 = vmatprep.subr.mxu0 0.0
    %420 = vmatpush1.msra.mxu0 0.0
    %421 = vmatprep.subr.mxu0 0.0
    %422 = vmatpush1.msra.mxu0 0.0
    %423 = vmatprep.subr.mxu0 0.0
    %424 = vmatpush1.msra.mxu0 0.0
    %425 = vmatprep.subr.mxu0 0.0
    %426 = vmatpush1.msra.mxu0 0.0
    %427 = vmatprep.subr.mxu0 0.0
    %428 = vmatpush1.msra.mxu0 0.0
    %429 = vmatprep.subr.mxu0 0.0
    %430 = vmatpush1.msra.mxu0 0.0
    %431 = vmatprep.subr.mxu0 0.0
    %432 = vmatpush1.msra.mxu0 0.0
    %433 = vmatprep.subr.mxu0 0.0
    %434 = vmatpush1.msra.mxu0 0.0
    %435 = vmatprep.subr.mxu0 0.0
    %436 = vmatpush1.msra.mxu0 0.0
    %437 = vmatprep.subr.mxu0 0.0
    %438 = vmatpush1.msra.mxu0 0.0
    %439 = vmatprep.subr.mxu0 0.0
    %440 = vmatpush1.msra.mxu0 0.0
    %441 = vmatprep.subr.mxu0 0.0
    %442 = vmatpush1.msra.mxu0 0.0
    %443 = vmatprep.subr.mxu0 0.0
    %444 = vmatpush1.msra.mxu0 0.0
    %445 = vmatprep.subr.mxu0 0.0
    %446 = vmatpush1.msra.mxu0 0.0
    %447 = vmatprep.mubr.f32.mxu0 0.0
    %448 = vmatmul.mubr.f32.gmra.mrb[0].mxu0 %v381
    %v449 = vpop.f32.mrb[0].mxu0
    %v450 = vadd.f32 0.0, %v449
    %v451 = vpop.f32.mrb[0].mxu0
    %452 = vdwg.mxu0
    %v454 = vsel %vm187, %v305, 0
    %v457 = vsel %vm187, %v307, 0
    %459 = vmatprep.subr.mxu0 0.0
    %460 = vmatpush1.msra.mxu0 %v159
    %461 = vmatprep.subr.mxu0 0.0
    %462 = vmatpush1.msra.mxu0 0.0
    %463 = vmatprep.subr.mxu0 0.0
    %464 = vmatpush1.msra.mxu0 0.0
    %465 = vmatprep.subr.mxu0 0.0
    %466 = vmatpush1.msra.mxu0 0.0
    %467 = vmatprep.subr.mxu0 0.0
    %468 = vmatpush1.msra.mxu0 0.0
    %469 = vmatprep.subr.mxu0 0.0
    %470 = vmatpush1.msra.mxu0 0.0
    %471 = vmatprep.subr.mxu0 0.0
    %472 = vmatpush1.msra.mxu0 0.0
    %473 = vmatprep.subr.mxu0 0.0
    %474 = vmatpush1.msra.mxu0 0.0
    %475 = vmatprep.subr.mxu0 0.0
    %476 = vmatpush1.msra.mxu0 0.0
    %477 = vmatprep.subr.mxu0 0.0
    %478 = vmatpush1.msra.mxu0 0.0
    %479 = vmatprep.subr.mxu0 0.0
    %480 = vmatpush1.msra.mxu0 0.0
    %481 = vmatprep.subr.mxu0 0.0
    %482 = vmatpush1.msra.mxu0 0.0
    %483 = vmatprep.subr.mxu0 0.0
    %484 = vmatpush1.msra.mxu0 0.0
    %485 = vmatprep.subr.mxu0 0.0
    %486 = vmatpush1.msra.mxu0 0.0
    %487 = vmatprep.subr.mxu0 0.0
    %488 = vmatpush1.msra.mxu0 0.0
    %489 = vmatprep.subr.mxu0 0.0
    %490 = vmatpush1.msra.mxu0 0.0
    %491 = vmatprep.subr.mxu0 0.0
    %492 = vmatpush1.msra.mxu0 0.0
    %493 = vmatprep.subr.mxu0 0.0
    %494 = vmatpush1.msra.mxu0 0.0
    %495 = vmatprep.subr.mxu0 0.0
    %496 = vmatpush1.msra.mxu0 0.0
    %497 = vmatprep.subr.mxu0 0.0
    %498 = vmatpush1.msra.mxu0 0.0
    %499 = vmatprep.subr.mxu0 0.0
    %500 = vmatpush1.msra.mxu0 0.0
    %501 = vmatprep.subr.mxu0 0.0
    %502 = vmatpush1.msra.mxu0 0.0
    %503 = vmatprep.subr.mxu0 0.0
    %504 = vmatpush1.msra.mxu0 0.0
    %505 = vmatprep.subr.mxu0 0.0
    %506 = vmatpush1.msra.mxu0 0.0
    %507 = vmatprep.subr.mxu0 0.0
    %508 = vmatpush1.msra.mxu0 0.0
    %509 = vmatprep.subr.mxu0 0.0
    %510 = vmatpush1.msra.mxu0 0.0
    %511 = vmatprep.subr.mxu0 0.0
    %512 = vmatpush1.msra.mxu0 0.0
    %513 = vmatprep.subr.mxu0 0.0
    %514 = vmatpush1.msra.mxu0 0.0
    %515 = vmatprep.subr.mxu0 0.0
    %516 = vmatpush1.msra.mxu0 0.0
    %517 = vmatprep.subr.mxu0 0.0
    %518 = vmatpush1.msra.mxu0 0.0
    %519 = vmatprep.subr.mxu0 0.0
    %520 = vmatpush1.msra.mxu0 0.0
    %521 = vmatprep.subr.mxu0 0.0
    %522 = vmatpush1.msra.mxu0 0.0
    %523 = vmatprep.mubr.f32.mxu0 0.0
    %524 = vmatmul.mubr.f32.gmra.mrb[0].mxu0 %v454
    %v525 = vpop.f32.mrb[0].mxu0
    %v526 = vadd.f32 0.0, %v525
    %v527 = vpop.f32.mrb[0].mxu0
    %528 = vmatprep.mubr.f32.mxu0 0.0
    %529 = vmatmul.mubr.f32.gmra.mrb[0].mxu0 %v457
    %v530 = vpop.f32.mrb[0].mxu0
    %v531 = vadd.f32 0.0, %v530
    %v532 = vpop.f32.mrb[0].mxu0
    %533 = vdwg.mxu0
    %534 = vxpose.xlu0.b32.start [1/16] %v325, 128
    %535 = vxpose.xlu0.b32.cont [2/16] %v326, 128
    %536 = vxpose.xlu0.b32.cont [3/16] 0.0, 128
    %537 = vxpose.xlu0.b32.cont [4/16] 0.0, 128
    %538 = vxpose.xlu0.b32.cont [5/16] 0.0, 128
    %539 = vxpose.xlu0.b32.cont [6/16] 0.0, 128
    %540 = vxpose.xlu0.b32.cont [7/16] 0.0, 128
    %541 = vxpose.xlu0.b32.cont [8/16] 0.0, 128
    %542 = vxpose.xlu0.b32.cont [9/16] 0.0, 128
    %543 = vxpose.xlu0.b32.cont [10/16] 0.0, 128
    %544 = vxpose.xlu0.b32.cont [11/16] 0.0, 128
    %545 = vxpose.xlu0.b32.cont [12/16] 0.0, 128
    %546 = vxpose.xlu0.b32.cont [13/16] 0.0, 128
    %547 = vxpose.xlu0.b32.cont [14/16] 0.0, 128
    %548 = vxpose.xlu0.b32.cont [15/16] 0.0, 128
    %549 = vxpose.xlu0.b32.end [16/16] 0.0, 128
    %v550 = vpop.trf.xlu0
    %v551 = vpop.trf.xlu0
    %v552 = vpop.trf.xlu0
    %v553 = vpop.trf.xlu0
    %v554 = vpop.trf.xlu0
    %v555 = vpop.trf.xlu0
    %v556 = vpop.trf.xlu0
    %v557 = vpop.trf.xlu0
    %v558 = vpop.trf.xlu0
    %v559 = vpop.trf.xlu0
    %v560 = vpop.trf.xlu0
    %v561 = vpop.trf.xlu0
    %v562 = vpop.trf.xlu0
    %v563 = vpop.trf.xlu0
    %v564 = vpop.trf.xlu0
    %v565 = vpop.trf.xlu0
    %v567 = vsel %vm79, %v550, 0
    %569 = vmatprep.subr.mxu0 0.0
    %570 = vmatpush1.msra.mxu0 %v169
    %571 = vmatprep.subr.mxu0 0.0
    %572 = vmatpush1.msra.mxu0 %v174
    %573 = vmatprep.subr.mxu0 0.0
    %574 = vmatpush1.msra.mxu0 0.0
    %575 = vmatprep.subr.mxu0 0.0
    %576 = vmatpush1.msra.mxu0 0.0
    %577 = vmatprep.subr.mxu0 0.0
    %578 = vmatpush1.msra.mxu0 0.0
    %579 = vmatprep.subr.mxu0 0.0
    %580 = vmatpush1.msra.mxu0 0.0
    %581 = vmatprep.subr.mxu0 0.0
    %582 = vmatpush1.msra.mxu0 0.0
    %583 = vmatprep.subr.mxu0 0.0
    %584 = vmatpush1.msra.mxu0 0.0
    %585 = vmatprep.subr.mxu0 0.0
    %586 = vmatpush1.msra.mxu0 0.0
    %587 = vmatprep.subr.mxu0 0.0
    %588 = vmatpush1.msra.mxu0 0.0
    %589 = vmatprep.subr.mxu0 0.0
    %590 = vmatpush1.msra.mxu0 0.0
    %591 = vmatprep.subr.mxu0 0.0
    %592 = vmatpush1.msra.mxu0 0.0
    %593 = vmatprep.subr.mxu0 0.0
    %594 = vmatpush1.msra.mxu0 0.0
    %595 = vmatprep.subr.mxu0 0.0
    %596 = vmatpush1.msra.mxu0 0.0
    %597 = vmatprep.subr.mxu0 0.0
    %598 = vmatpush1.msra.mxu0 0.0
    %599 = vmatprep.subr.mxu0 0.0
    %600 = vmatpush1.msra.mxu0 0.0
    %601 = vmatprep.subr.mxu0 0.0
    %602 = vmatpush1.msra.mxu0 0.0
    %603 = vmatprep.subr.mxu0 0.0
    %604 = vmatpush1.msra.mxu0 0.0
    %605 = vmatprep.subr.mxu0 0.0
    %606 = vmatpush1.msra.mxu0 0.0
    %607 = vmatprep.subr.mxu0 0.0
    %608 = vmatpush1.msra.mxu0 0.0
    %609 = vmatprep.subr.mxu0 0.0
    %610 = vmatpush1.msra.mxu0 0.0
    %611 = vmatprep.subr.mxu0 0.0
    %612 = vmatpush1.msra.mxu0 0.0
    %613 = vmatprep.subr.mxu0 0.0
    %614 = vmatpush1.msra.mxu0 0.0
    %615 = vmatprep.subr.mxu0 0.0
    %616 = vmatpush1.msra.mxu0 0.0
    %617 = vmatprep.subr.mxu0 0.0
    %618 = vmatpush1.msra.mxu0 0.0
    %619 = vmatprep.subr.mxu0 0.0
    %620 = vmatpush1.msra.mxu0 0.0
    %621 = vmatprep.subr.mxu0 0.0
    %622 = vmatpush1.msra.mxu0 0.0
    %623 = vmatprep.subr.mxu0 0.0
    %624 = vmatpush1.msra.mxu0 0.0
    %625 = vmatprep.subr.mxu0 0.0
    %626 = vmatpush1.msra.mxu0 0.0
    %627 = vmatprep.subr.mxu0 0.0
    %628 = vmatpush1.msra.mxu0 0.0
    %629 = vmatprep.subr.mxu0 0.0
    %630 = vmatpush1.msra.mxu0 0.0
    %631 = vmatprep.subr.mxu0 0.0
    %632 = vmatpush1.msra.mxu0 0.0
    %633 = vmatprep.mubr.f32.mxu0 0.0
    %634 = vmatmul.mubr.f32.gmra.mrb[0].mxu0 %v567
    %v635 = vpop.f32.mrb[0].mxu0
    %v636 = vadd.f32 0.0, %v635
    %v637 = vpop.f32.mrb[0].mxu0
    %638 = vdwg.mxu0
    %v640 = vsel %vm187, %v328, 0
    %v643 = vsel %vm187, %v330, 0
    %645 = vmatprep.subr.mxu0 0.0
    %646 = vmatpush1.msra.mxu0 %v164
    %647 = vmatprep.subr.mxu0 0.0
    %648 = vmatpush1.msra.mxu0 0.0
    %649 = vmatprep.subr.mxu0 0.0
    %650 = vmatpush1.msra.mxu0 0.0
    %651 = vmatprep.subr.mxu0 0.0
    %652 = vmatpush1.msra.mxu0 0.0
    %653 = vmatprep.subr.mxu0 0.0
    %654 = vmatpush1.msra.mxu0 0.0
    %655 = vmatprep.subr.mxu0 0.0
    %656 = vmatpush1.msra.mxu0 0.0
    %657 = vmatprep.subr.mxu0 0.0
    %658 = vmatpush1.msra.mxu0 0.0
    %659 = vmatprep.subr.mxu0 0.0
    %660 = vmatpush1.msra.mxu0 0.0
    %661 = vmatprep.subr.mxu0 0.0
    %662 = vmatpush1.msra.mxu0 0.0
    %663 = vmatprep.subr.mxu0 0.0
    %664 = vmatpush1.msra.mxu0 0.0
    %665 = vmatprep.subr.mxu0 0.0
    %666 = vmatpush1.msra.mxu0 0.0
    %667 = vmatprep.subr.mxu0 0.0
    %668 = vmatpush1.msra.mxu0 0.0
    %669 = vmatprep.subr.mxu0 0.0
    %670 = vmatpush1.msra.mxu0 0.0
    %671 = vmatprep.subr.mxu0 0.0
    %672 = vmatpush1.msra.mxu0 0.0
    %673 = vmatprep.subr.mxu0 0.0
    %674 = vmatpush1.msra.mxu0 0.0
    %675 = vmatprep.subr.mxu0 0.0
    %676 = vmatpush1.msra.mxu0 0.0
    %677 = vmatprep.subr.mxu0 0.0
    %678 = vmatpush1.msra.mxu0 0.0
    %679 = vmatprep.subr.mxu0 0.0
    %680 = vmatpush1.msra.mxu0 0.0
    %681 = vmatprep.subr.mxu0 0.0
    %682 = vmatpush1.msra.mxu0 0.0
    %683 = vmatprep.subr.mxu0 0.0
    %684 = vmatpush1.msra.mxu0 0.0
    %685 = vmatprep.subr.mxu0 0.0
    %686 = vmatpush1.msra.mxu0 0.0
    %687 = vmatprep.subr.mxu0 0.0
    %688 = vmatpush1.msra.mxu0 0.0
    %689 = vmatprep.subr.mxu0 0.0
    %690 = vmatpush1.msra.mxu0 0.0
    %691 = vmatprep.subr.mxu0 0.0
    %692 = vmatpush1.msra.mxu0 0.0
    %693 = vmatprep.subr.mxu0 0.0
    %694 = vmatpush1.msra.mxu0 0.0
    %695 = vmatprep.subr.mxu0 0.0
    %696 = vmatpush1.msra.mxu0 0.0
    %697 = vmatprep.subr.mxu0 0.0
    %698 = vmatpush1.msra.mxu0 0.0
    %699 = vmatprep.subr.mxu0 0.0
    %700 = vmatpush1.msra.mxu0 0.0
    %701 = vmatprep.subr.mxu0 0.0
    %702 = vmatpush1.msra.mxu0 0.0
    %703 = vmatprep.subr.mxu0 0.0
    %704 = vmatpush1.msra.mxu0 0.0
    %705 = vmatprep.subr.mxu0 0.0
    %706 = vmatpush1.msra.mxu0 0.0
    %707 = vmatprep.subr.mxu0 0.0
    %708 = vmatpush1.msra.mxu0 0.0
    %709 = vmatprep.mubr.f32.mxu0 0.0
    %710 = vmatmul.mubr.f32.gmra.mrb[0].mxu0 %v640
    %v711 = vpop.f32.mrb[0].mxu0
    %v712 = vadd.f32 0.0, %v711
    %v713 = vpop.f32.mrb[0].mxu0
    %714 = vmatprep.mubr.f32.mxu0 0.0
    %715 = vmatmul.mubr.f32.gmra.mrb[0].mxu0 %v643
    %v716 = vpop.f32.mrb[0].mxu0
    %v717 = vadd.f32 0.0, %v716
    %v718 = vpop.f32.mrb[0].mxu0
    %719 = vdwg.mxu0
    %725 = vrot.lane.b32.xlu0 %v526, 32
    %v726 = vpop.permute.xlu0 %725
    %727 = vrot.lane.b32.xlu0 %v531, 32
    %v728 = vpop.permute.xlu0 %727
    %729 = vrot.lane.b32.xlu0 %v712, 32
    %v730 = vpop.permute.xlu0 %729
    %731 = vrot.lane.b32.xlu0 %v717, 32
    %v732 = vpop.permute.xlu0 %731
    %733 = vrot.lane.b32.xlu0 0.0, 32
    %v734 = vpop.permute.xlu0 %733
    %746 = vrot.lane.b32.xlu0 %v159, 64
    %v747 = vpop.permute.xlu0 %746
    %748 = vrot.lane.b32.xlu0 %v164, 64
    %v749 = vpop.permute.xlu0 %748
    %750 = vrot.lane.b32.xlu0 %v169, 64
    %v751 = vpop.permute.xlu0 %750
    %752 = vrot.lane.b32.xlu0 %v174, 64
    %v753 = vpop.permute.xlu0 %752
    %754 = vrot.lane.b32.xlu0 %v261, 64
    %v755 = vpop.permute.xlu0 %754
    %756 = vrot.lane.b32.xlu0 %v266, 64
    %v757 = vpop.permute.xlu0 %756
    %764 = vrot.lane.b32.xlu0 %v159, 96
    %v765 = vpop.permute.xlu0 %764
    %766 = vrot.lane.b32.xlu0 %v164, 96
    %v767 = vpop.permute.xlu0 %766
    %768 = vrot.lane.b32.xlu0 %v169, 96
    %v769 = vpop.permute.xlu0 %768
    %770 = vrot.lane.b32.xlu0 %v174, 96
    %v771 = vpop.permute.xlu0 %770
    %772 = vrot.lane.b32.xlu0 %v261, 96
    %v773 = vpop.permute.xlu0 %772
    %774 = vrot.lane.b32.xlu0 %v266, 96
    %v775 = vpop.permute.xlu0 %774
    %vm782 = vcmask 261120
    %v783 = vsel %vm782, %v450, %v726
    %v784 = vsel %vm782, %v636, %v728
    %v785 = vsel %vm782, 0.0, %v730
    %v786 = vsel %vm782, 0.0, %v732
    %v787 = vsel %vm782, 0.0, %v734
    %vm788 = vcmask 523264
    %v789 = vsel %vm788, %v783, %v747
    %v790 = vsel %vm788, %v784, %v749
    %v791 = vsel %vm788, %v785, %v751
    %v792 = vsel %vm788, %v786, %v753
    %v793 = vsel %vm788, %v787, %v755
    %v794 = vsel %vm788, %v787, %v757
    %vm795 = vcmask 785408
    %v796 = vsel %vm795, %v789, %v765
    %v797 = vsel %vm795, %v790, %v767
    %v798 = vsel %vm795, %v791, %v769
    %v799 = vsel %vm795, %v792, %v771
    %v800 = vsel %vm795, %v793, %v773
    %v801 = vsel %vm795, %v794, %v775
    %v803 = vlaneseq
    %v804 = vshrl.u32 %v803, 7
    %v805 = vsub.s32 0, %v804
    %v806 = vrot.slane %v347, %v805
    %808 = vmatprep.subr.mxu0 0.0
    %809 = vmatpush1.msra.mxu0 %v331
    %810 = vmatprep.subr.mxu0 0.0
    %811 = vmatpush1.msra.mxu0 %v332
    %812 = vmatprep.subr.mxu0 0.0
    %813 = vmatpush1.msra.mxu0 %v333
    %814 = vmatprep.subr.mxu0 0.0
    %815 = vmatpush1.msra.mxu0 %v334
    %816 = vmatprep.subr.mxu0 0.0
    %817 = vmatpush1.msra.mxu0 %v335
    %818 = vmatprep.subr.mxu0 0.0
    %819 = vmatpush1.msra.mxu0 %v336
    %820 = vmatprep.subr.mxu0 0.0
    %821 = vmatpush1.msra.mxu0 %v337
    %822 = vmatprep.subr.mxu0 0.0
    %823 = vmatpush1.msra.mxu0 %v338
    %824 = vmatprep.subr.mxu0 0.0
    %825 = vmatpush1.msra.mxu0 %v339
    %826 = vmatprep.subr.mxu0 0.0
    %827 = vmatpush1.msra.mxu0 %v340
    %828 = vmatprep.subr.mxu0 0.0
    %829 = vmatpush1.msra.mxu0 %v341
    %830 = vmatprep.subr.mxu0 0.0
    %831 = vmatpush1.msra.mxu0 %v342
    %832 = vmatprep.subr.mxu0 0.0
    %833 = vmatpush1.msra.mxu0 %v343
    %834 = vmatprep.subr.mxu0 0.0
    %835 = vmatpush1.msra.mxu0 %v344
    %836 = vmatprep.subr.mxu0 0.0
    %837 = vmatpush1.msra.mxu0 %v345
    %838 = vmatprep.subr.mxu0 0.0
    %839 = vmatpush1.msra.mxu0 %v346
    %840 = vmatprep.subr.mxu0 0.0
    %841 = vmatpush1.msra.mxu0 0.0
    %842 = vmatprep.subr.mxu0 0.0
    %843 = vmatpush1.msra.mxu0 0.0
    %844 = vmatprep.subr.mxu0 0.0
    %845 = vmatpush1.msra.mxu0 0.0
    %846 = vmatprep.subr.mxu0 0.0
    %847 = vmatpush1.msra.mxu0 0.0
    %848 = vmatprep.subr.mxu0 0.0
    %849 = vmatpush1.msra.mxu0 0.0
    %850 = vmatprep.subr.mxu0 0.0
    %851 = vmatpush1.msra.mxu0 0.0
    %852 = vmatprep.subr.mxu0 0.0
    %853 = vmatpush1.msra.mxu0 0.0
    %854 = vmatprep.subr.mxu0 0.0
    %855 = vmatpush1.msra.mxu0 0.0
    %856 = vmatprep.subr.mxu0 0.0
    %857 = vmatpush1.msra.mxu0 0.0
    %858 = vmatprep.subr.mxu0 0.0
    %859 = vmatpush1.msra.mxu0 0.0
    %860 = vmatprep.subr.mxu0 0.0
    %861 = vmatpush1.msra.mxu0 0.0
    %862 = vmatprep.subr.mxu0 0.0
    %863 = vmatpush1.msra.mxu0 0.0
    %864 = vmatprep.subr.mxu0 0.0
    %865 = vmatpush1.msra.mxu0 0.0
    %866 = vmatprep.subr.mxu0 0.0
    %867 = vmatpush1.msra.mxu0 0.0
    %868 = vmatprep.subr.mxu0 0.0
    %869 = vmatpush1.msra.mxu0 0.0
    %870 = vmatprep.subr.mxu0 0.0
    %871 = vmatpush1.msra.mxu0 0.0
    %872 = vmatprep.mubr.f32.mxu0 0.0
    %873 = vmatmul.mubr.f32.gmra.mrb[0].mxu0 %v796
    %v874 = vpop.f32.mrb[0].mxu0
    %v875 = vadd.f32 %v806, %v874
    %v876 = vpop.f32.mrb[0].mxu0
    %877 = vmatprep.mubr.f32.mxu0 0.0
    %878 = vmatmul.mubr.f32.gmra.mrb[0].mxu0 %v797
    %v879 = vpop.f32.mrb[0].mxu0
    %v880 = vadd.f32 %v806, %v879
    %v881 = vpop.f32.mrb[0].mxu0
    %882 = vmatprep.mubr.f32.mxu0 0.0
    %883 = vmatmul.mubr.f32.gmra.mrb[0].mxu0 %v798
    %v884 = vpop.f32.mrb[0].mxu0
    %v885 = vadd.f32 %v806, %v884
    %v886 = vpop.f32.mrb[0].mxu0
    %887 = vmatprep.mubr.f32.mxu0 0.0
    %888 = vmatmul.mubr.f32.gmra.mrb[0].mxu0 %v799
    %v889 = vpop.f32.mrb[0].mxu0
    %v890 = vadd.f32 %v806, %v889
    %v891 = vpop.f32.mrb[0].mxu0
    %892 = vmatprep.mubr.f32.mxu0 0.0
    %893 = vmatmul.mubr.f32.gmra.mrb[0].mxu0 %v800
    %v894 = vpop.f32.mrb[0].mxu0
    %v895 = vadd.f32 %v806, %v894
    %v896 = vpop.f32.mrb[0].mxu0
    %897 = vmatprep.mubr.f32.mxu0 0.0
    %898 = vmatmul.mubr.f32.gmra.mrb[0].mxu0 %v801
    %v899 = vpop.f32.mrb[0].mxu0
    %v900 = vadd.f32 %v806, %v899
    %v901 = vpop.f32.mrb[0].mxu0
    %902 = vdwg.mxu0
    %v903 = vmul.f32 %v875, %v875
    %v904 = vmul.f32 %v880, %v880
    %v905 = vmul.f32 %v885, %v885
    %v906 = vmul.f32 %v890, %v890
    %v907 = vmul.f32 %v895, %v895
    %v908 = vmul.f32 %v900, %v900
    %v909 = vsel %vm782, %v903, 0.0
    %910 = vadd.xlane.f32.xlu0 %v909
    %v911 = vpop.xlane.xlu0 %910
    %v912 = vsel %vm782, %v904, 0.0
    %913 = vadd.xlane.f32.xlu0 %v912
    %v914 = vpop.xlane.xlu0 %913
    %v915 = vsel %vm782, %v905, 0.0
    %916 = vadd.xlane.f32.xlu0 %v915
    %v917 = vpop.xlane.xlu0 %916
    %v918 = vsel %vm782, %v906, 0.0
    %919 = vadd.xlane.f32.xlu0 %v918
    %v920 = vpop.xlane.xlu0 %919
    %v921 = vsel %vm782, %v907, 0.0
    %922 = vadd.xlane.f32.xlu0 %v921
    %v923 = vpop.xlane.xlu0 %922
    %v924 = vsel %vm782, %v908, 0.0
    %925 = vadd.xlane.f32.xlu0 %v924
    %v926 = vpop.xlane.xlu0 %925
    %v927 = vmax.f32 %v911, 1e-24
    %v928 = vmax.f32 %v914, 1e-24
    %v929 = vmax.f32 %v917, 1e-24
    %v930 = vmax.f32 %v920, 1e-24
    %v931 = vmax.f32 %v923, 1e-24
    %v932 = vmax.f32 %v926, 1e-24
    %v933 = vrsqrt.pop %v927
    %v934 = vrsqrt.pop %v928
    %v935 = vrsqrt.pop %v929
    %v936 = vrsqrt.pop %v930
    %v937 = vrsqrt.pop %v931
    %v938 = vrsqrt.pop %v932
    %v939 = vmul.f32 %v875, %v933
    %v940 = vmul.f32 %v880, %v934
    %v941 = vmul.f32 %v885, %v935
    %v942 = vmul.f32 %v890, %v936
    %v943 = vmul.f32 %v895, %v937
    %v944 = vmul.f32 %v900, %v938
    %v945 = vmax.f32 %v939, 0.0
    %v946 = vmax.f32 %v940, 0.0
    %v947 = vmax.f32 %v941, 0.0
    %v948 = vmax.f32 %v942, 0.0
    %v949 = vmax.f32 %v943, 0.0
    %v950 = vmax.f32 %v944, 0.0
    %957 = vrot.lane.b32.xlu0 %v903, 96
    %v958 = vpop.permute.xlu0 %957
    %959 = vrot.lane.b32.xlu0 %v904, 96
    %v960 = vpop.permute.xlu0 %959
    %961 = vrot.lane.b32.xlu0 %v905, 96
    %v962 = vpop.permute.xlu0 %961
    %963 = vrot.lane.b32.xlu0 %v906, 96
    %v964 = vpop.permute.xlu0 %963
    %965 = vrot.lane.b32.xlu0 %v907, 96
    %v966 = vpop.permute.xlu0 %965
    %967 = vrot.lane.b32.xlu0 %v908, 96
    %v968 = vpop.permute.xlu0 %967
    %v975 = vsel %vm782, %v958, 0.0
    %976 = vadd.xlane.f32.xlu0 %v975
    %v977 = vpop.xlane.xlu0 %976
    %v978 = vsel %vm782, %v960, 0.0
    %979 = vadd.xlane.f32.xlu0 %v978
    %v980 = vpop.xlane.xlu0 %979
    %v981 = vsel %vm782, %v962, 0.0
    %982 = vadd.xlane.f32.xlu0 %v981
    %v983 = vpop.xlane.xlu0 %982
    %v984 = vsel %vm782, %v964, 0.0
    %985 = vadd.xlane.f32.xlu0 %v984
    %v986 = vpop.xlane.xlu0 %985
    %v987 = vsel %vm782, %v966, 0.0
    %988 = vadd.xlane.f32.xlu0 %v987
    %v989 = vpop.xlane.xlu0 %988
    %v990 = vsel %vm782, %v968, 0.0
    %991 = vadd.xlane.f32.xlu0 %v990
    %v992 = vpop.xlane.xlu0 %991
    %v993 = vmax.f32 %v977, 1e-24
    %v994 = vmax.f32 %v980, 1e-24
    %v995 = vmax.f32 %v983, 1e-24
    %v996 = vmax.f32 %v986, 1e-24
    %v997 = vmax.f32 %v989, 1e-24
    %v998 = vmax.f32 %v992, 1e-24
    %v999 = vrsqrt.pop %v993
    %v1000 = vrsqrt.pop %v994
    %v1001 = vrsqrt.pop %v995
    %v1002 = vrsqrt.pop %v996
    %v1003 = vrsqrt.pop %v997
    %v1004 = vrsqrt.pop %v998
    %v1005 = vmul.f32 %v875, %v999
    %v1006 = vmul.f32 %v880, %v1000
    %v1007 = vmul.f32 %v885, %v1001
    %v1008 = vmul.f32 %v890, %v1002
    %v1009 = vmul.f32 %v895, %v1003
    %v1010 = vmul.f32 %v900, %v1004
    %v1011 = vmax.f32 %v1005, 0.0
    %v1012 = vmax.f32 %v1006, 0.0
    %v1013 = vmax.f32 %v1007, 0.0
    %v1014 = vmax.f32 %v1008, 0.0
    %v1015 = vmax.f32 %v1009, 0.0
    %v1016 = vmax.f32 %v1010, 0.0
    %v1017 = vld [vmem:[%s9] sm:$0xff]
    %v1018 = vld [vmem:[%s9 + $0x8] sm:$0xff]
    %v1019 = vld [vmem:[%s9 + $0x10] sm:$0xff]
    %v1020 = vld [vmem:[%s9 + $0x18] sm:$0xff]
    %v1021 = vld [vmem:[%s9 + $0x20] sm:$0xff]
    %v1022 = vld [vmem:[%s9 + $0x28] sm:$0xff]
    %v1023 = vld [vmem:[%s9 + $0x30] sm:$0xff]
    %v1024 = vld [vmem:[%s9 + $0x38] sm:$0xff]
    %v1025 = vld [vmem:[%s9 + $0x40] sm:$0xff]
    %v1026 = vld [vmem:[%s9 + $0x48] sm:$0xff]
    %v1027 = vld [vmem:[%s9 + $0x50] sm:$0xff]
    %v1028 = vld [vmem:[%s9 + $0x58] sm:$0xff]
    %v1029 = vld [vmem:[%s9 + $0x60] sm:$0xff]
    %v1030 = vld [vmem:[%s9 + $0x68] sm:$0xff]
    %v1031 = vld [vmem:[%s9 + $0x70] sm:$0xff]
    %v1032 = vld [vmem:[%s9 + $0x78] sm:$0xff]
    %v1033 = vld [vmem:[%s10] sm:$0x1]
    %1034 = vmatprep.subr.mxu0 0.0
    %1035 = vmatpush1.msra.mxu0 %v945
    %1036 = vmatprep.subr.mxu0 0.0
    %1037 = vmatpush1.msra.mxu0 %v946
    %1038 = vmatprep.subr.mxu0 0.0
    %1039 = vmatpush1.msra.mxu0 0.0
    %1040 = vmatprep.subr.mxu0 0.0
    %1041 = vmatpush1.msra.mxu0 0.0
    %1042 = vmatprep.subr.mxu0 0.0
    %1043 = vmatpush1.msra.mxu0 0.0
    %1044 = vmatprep.subr.mxu0 0.0
    %1045 = vmatpush1.msra.mxu0 0.0
    %1046 = vmatprep.subr.mxu0 0.0
    %1047 = vmatpush1.msra.mxu0 0.0
    %1048 = vmatprep.subr.mxu0 0.0
    %1049 = vmatpush1.msra.mxu0 0.0
    %1050 = vmatprep.subr.mxu0 0.0
    %1051 = vmatpush1.msra.mxu0 0.0
    %1052 = vmatprep.subr.mxu0 0.0
    %1053 = vmatpush1.msra.mxu0 0.0
    %1054 = vmatprep.subr.mxu0 0.0
    %1055 = vmatpush1.msra.mxu0 0.0
    %1056 = vmatprep.subr.mxu0 0.0
    %1057 = vmatpush1.msra.mxu0 0.0
    %1058 = vmatprep.subr.mxu0 0.0
    %1059 = vmatpush1.msra.mxu0 0.0
    %1060 = vmatprep.subr.mxu0 0.0
    %1061 = vmatpush1.msra.mxu0 0.0
    %1062 = vmatprep.subr.mxu0 0.0
    %1063 = vmatpush1.msra.mxu0 0.0
    %1064 = vmatprep.subr.mxu0 0.0
    %1065 = vmatpush1.msra.mxu0 0.0
    %1066 = vmatprep.subr.mxu0 0.0
    %1067 = vmatpush1.msra.mxu0 0.0
    %1068 = vmatprep.subr.mxu0 0.0
    %1069 = vmatpush1.msra.mxu0 0.0
    %1070 = vmatprep.subr.mxu0 0.0
    %1071 = vmatpush1.msra.mxu0 0.0
    %1072 = vmatprep.subr.mxu0 0.0
    %1073 = vmatpush1.msra.mxu0 0.0
    %1074 = vmatprep.subr.mxu0 0.0
    %1075 = vmatpush1.msra.mxu0 0.0
    %1076 = vmatprep.subr.mxu0 0.0
    %1077 = vmatpush1.msra.mxu0 0.0
    %1078 = vmatprep.subr.mxu0 0.0
    %1079 = vmatpush1.msra.mxu0 0.0
    %1080 = vmatprep.subr.mxu0 0.0
    %1081 = vmatpush1.msra.mxu0 0.0
    %1082 = vmatprep.subr.mxu0 0.0
    %1083 = vmatpush1.msra.mxu0 0.0
    %1084 = vmatprep.subr.mxu0 0.0
    %1085 = vmatpush1.msra.mxu0 0.0
    %1086 = vmatprep.subr.mxu0 0.0
    %1087 = vmatpush1.msra.mxu0 0.0
    %1088 = vmatprep.subr.mxu0 0.0
    %1089 = vmatpush1.msra.mxu0 0.0
    %1090 = vmatprep.subr.mxu0 0.0
    %1091 = vmatpush1.msra.mxu0 0.0
    %1092 = vmatprep.subr.mxu0 0.0
    %1093 = vmatpush1.msra.mxu0 0.0
    %1094 = vmatprep.subr.mxu0 0.0
    %1095 = vmatpush1.msra.mxu0 0.0
    %1096 = vmatprep.subr.mxu0 0.0
    %1097 = vmatpush1.msra.mxu0 0.0
    %1098 = vmatprep.mubr.f32.mxu0 0.0
    %1099 = vmatmul.mubr.f32.gmra.mrb[0].mxu0 %v381
    %v1100 = vpop.f32.mrb[0].mxu0
    %v1101 = vadd.f32 0.0, %v1100
    %v1102 = vpop.f32.mrb[0].mxu0
    %1103 = vdwg.mxu0
    %1105 = vrot.lane.b32.xlu0 %v1011, 96
    %v1106 = vpop.permute.xlu0 %1105
    %1108 = vmatprep.subr.mxu0 0.0
    %1109 = vmatpush1.msra.mxu0 %v1106
    %1110 = vmatprep.subr.mxu0 0.0
    %1111 = vmatpush1.msra.mxu0 0.0
    %1112 = vmatprep.subr.mxu0 0.0
    %1113 = vmatpush1.msra.mxu0 0.0
    %1114 = vmatprep.subr.mxu0 0.0
    %1115 = vmatpush1.msra.mxu0 0.0
    %1116 = vmatprep.subr.mxu0 0.0
    %1117 = vmatpush1.msra.mxu0 0.0
    %1118 = vmatprep.subr.mxu0 0.0
    %1119 = vmatpush1.msra.mxu0 0.0
    %1120 = vmatprep.subr.mxu0 0.0
    %1121 = vmatpush1.msra.mxu0 0.0
    %1122 = vmatprep.subr.mxu0 0.0
    %1123 = vmatpush1.msra.mxu0 0.0
    %1124 = vmatprep.subr.mxu0 0.0
    %1125 = vmatpush1.msra.mxu0 0.0
    %1126 = vmatprep.subr.mxu0 0.0
    %1127 = vmatpush1.msra.mxu0 0.0
    %1128 = vmatprep.subr.mxu0 0.0
    %1129 = vmatpush1.msra.mxu0 0.0
    %1130 = vmatprep.subr.mxu0 0.0
    %1131 = vmatpush1.msra.mxu0 0.0
    %1132 = vmatprep.subr.mxu0 0.0
    %1133 = vmatpush1.msra.mxu0 0.0
    %1134 = vmatprep.subr.mxu0 0.0
    %1135 = vmatpush1.msra.mxu0 0.0
    %1136 = vmatprep.subr.mxu0 0.0
    %1137 = vmatpush1.msra.mxu0 0.0
    %1138 = vmatprep.subr.mxu0 0.0
    %1139 = vmatpush1.msra.mxu0 0.0
    %1140 = vmatprep.subr.mxu0 0.0
    %1141 = vmatpush1.msra.mxu0 0.0
    %1142 = vmatprep.subr.mxu0 0.0
    %1143 = vmatpush1.msra.mxu0 0.0
    %1144 = vmatprep.subr.mxu0 0.0
    %1145 = vmatpush1.msra.mxu0 0.0
    %1146 = vmatprep.subr.mxu0 0.0
    %1147 = vmatpush1.msra.mxu0 0.0
    %1148 = vmatprep.subr.mxu0 0.0
    %1149 = vmatpush1.msra.mxu0 0.0
    %1150 = vmatprep.subr.mxu0 0.0
    %1151 = vmatpush1.msra.mxu0 0.0
    %1152 = vmatprep.subr.mxu0 0.0
    %1153 = vmatpush1.msra.mxu0 0.0
    %1154 = vmatprep.subr.mxu0 0.0
    %1155 = vmatpush1.msra.mxu0 0.0
    %1156 = vmatprep.subr.mxu0 0.0
    %1157 = vmatpush1.msra.mxu0 0.0
    %1158 = vmatprep.subr.mxu0 0.0
    %1159 = vmatpush1.msra.mxu0 0.0
    %1160 = vmatprep.subr.mxu0 0.0
    %1161 = vmatpush1.msra.mxu0 0.0
    %1162 = vmatprep.subr.mxu0 0.0
    %1163 = vmatpush1.msra.mxu0 0.0
    %1164 = vmatprep.subr.mxu0 0.0
    %1165 = vmatpush1.msra.mxu0 0.0
    %1166 = vmatprep.subr.mxu0 0.0
    %1167 = vmatpush1.msra.mxu0 0.0
    %1168 = vmatprep.subr.mxu0 0.0
    %1169 = vmatpush1.msra.mxu0 0.0
    %1170 = vmatprep.subr.mxu0 0.0
    %1171 = vmatpush1.msra.mxu0 0.0
    %1172 = vmatprep.mubr.f32.mxu0 0.0
    %1173 = vmatmul.mubr.f32.gmra.mrb[0].mxu0 %v454
    %v1174 = vpop.f32.mrb[0].mxu0
    %v1175 = vadd.f32 0.0, %v1174
    %v1176 = vpop.f32.mrb[0].mxu0
    %1177 = vmatprep.mubr.f32.mxu0 0.0
    %1178 = vmatmul.mubr.f32.gmra.mrb[0].mxu0 %v457
    %v1179 = vpop.f32.mrb[0].mxu0
    %v1180 = vadd.f32 0.0, %v1179
    %v1181 = vpop.f32.mrb[0].mxu0
    %1182 = vdwg.mxu0
    %1183 = vmatprep.subr.mxu0 0.0
    %1184 = vmatpush1.msra.mxu0 %v947
    %1185 = vmatprep.subr.mxu0 0.0
    %1186 = vmatpush1.msra.mxu0 %v948
    %1187 = vmatprep.subr.mxu0 0.0
    %1188 = vmatpush1.msra.mxu0 0.0
    %1189 = vmatprep.subr.mxu0 0.0
    %1190 = vmatpush1.msra.mxu0 0.0
    %1191 = vmatprep.subr.mxu0 0.0
    %1192 = vmatpush1.msra.mxu0 0.0
    %1193 = vmatprep.subr.mxu0 0.0
    %1194 = vmatpush1.msra.mxu0 0.0
    %1195 = vmatprep.subr.mxu0 0.0
    %1196 = vmatpush1.msra.mxu0 0.0
    %1197 = vmatprep.subr.mxu0 0.0
    %1198 = vmatpush1.msra.mxu0 0.0
    %1199 = vmatprep.subr.mxu0 0.0
    %1200 = vmatpush1.msra.mxu0 0.0
    %1201 = vmatprep.subr.mxu0 0.0
    %1202 = vmatpush1.msra.mxu0 0.0
    %1203 = vmatprep.subr.mxu0 0.0
    %1204 = vmatpush1.msra.mxu0 0.0
    %1205 = vmatprep.subr.mxu0 0.0
    %1206 = vmatpush1.msra.mxu0 0.0
    %1207 = vmatprep.subr.mxu0 0.0
    %1208 = vmatpush1.msra.mxu0 0.0
    %1209 = vmatprep.subr.mxu0 0.0
    %1210 = vmatpush1.msra.mxu0 0.0
    %1211 = vmatprep.subr.mxu0 0.0
    %1212 = vmatpush1.msra.mxu0 0.0
    %1213 = vmatprep.subr.mxu0 0.0
    %1214 = vmatpush1.msra.mxu0 0.0
    %1215 = vmatprep.subr.mxu0 0.0
    %1216 = vmatpush1.msra.mxu0 0.0
    %1217 = vmatprep.subr.mxu0 0.0
    %1218 = vmatpush1.msra.mxu0 0.0
    %1219 = vmatprep.subr.mxu0 0.0
    %1220 = vmatpush1.msra.mxu0 0.0
    %1221 = vmatprep.subr.mxu0 0.0
    %1222 = vmatpush1.msra.mxu0 0.0
    %1223 = vmatprep.subr.mxu0 0.0
    %1224 = vmatpush1.msra.mxu0 0.0
    %1225 = vmatprep.subr.mxu0 0.0
    %1226 = vmatpush1.msra.mxu0 0.0
    %1227 = vmatprep.subr.mxu0 0.0
    %1228 = vmatpush1.msra.mxu0 0.0
    %1229 = vmatprep.subr.mxu0 0.0
    %1230 = vmatpush1.msra.mxu0 0.0
    %1231 = vmatprep.subr.mxu0 0.0
    %1232 = vmatpush1.msra.mxu0 0.0
    %1233 = vmatprep.subr.mxu0 0.0
    %1234 = vmatpush1.msra.mxu0 0.0
    %1235 = vmatprep.subr.mxu0 0.0
    %1236 = vmatpush1.msra.mxu0 0.0
    %1237 = vmatprep.subr.mxu0 0.0
    %1238 = vmatpush1.msra.mxu0 0.0
    %1239 = vmatprep.subr.mxu0 0.0
    %1240 = vmatpush1.msra.mxu0 0.0
    %1241 = vmatprep.subr.mxu0 0.0
    %1242 = vmatpush1.msra.mxu0 0.0
    %1243 = vmatprep.subr.mxu0 0.0
    %1244 = vmatpush1.msra.mxu0 0.0
    %1245 = vmatprep.subr.mxu0 0.0
    %1246 = vmatpush1.msra.mxu0 0.0
    %1247 = vmatprep.mubr.f32.mxu0 0.0
    %1248 = vmatmul.mubr.f32.gmra.mrb[0].mxu0 %v567
    %v1249 = vpop.f32.mrb[0].mxu0
    %v1250 = vadd.f32 0.0, %v1249
    %v1251 = vpop.f32.mrb[0].mxu0
    %1252 = vdwg.mxu0
    %1254 = vrot.lane.b32.xlu0 %v1012, 96
    %v1255 = vpop.permute.xlu0 %1254
    %1257 = vmatprep.subr.mxu0 0.0
    %1258 = vmatpush1.msra.mxu0 %v1255
    %1259 = vmatprep.subr.mxu0 0.0
    %1260 = vmatpush1.msra.mxu0 0.0
    %1261 = vmatprep.subr.mxu0 0.0
    %1262 = vmatpush1.msra.mxu0 0.0
    %1263 = vmatprep.subr.mxu0 0.0
    %1264 = vmatpush1.msra.mxu0 0.0
    %1265 = vmatprep.subr.mxu0 0.0
    %1266 = vmatpush1.msra.mxu0 0.0
    %1267 = vmatprep.subr.mxu0 0.0
    %1268 = vmatpush1.msra.mxu0 0.0
    %1269 = vmatprep.subr.mxu0 0.0
    %1270 = vmatpush1.msra.mxu0 0.0
    %1271 = vmatprep.subr.mxu0 0.0
    %1272 = vmatpush1.msra.mxu0 0.0
    %1273 = vmatprep.subr.mxu0 0.0
    %1274 = vmatpush1.msra.mxu0 0.0
    %1275 = vmatprep.subr.mxu0 0.0
    %1276 = vmatpush1.msra.mxu0 0.0
    %1277 = vmatprep.subr.mxu0 0.0
    %1278 = vmatpush1.msra.mxu0 0.0
    %1279 = vmatprep.subr.mxu0 0.0
    %1280 = vmatpush1.msra.mxu0 0.0
    %1281 = vmatprep.subr.mxu0 0.0
    %1282 = vmatpush1.msra.mxu0 0.0
    %1283 = vmatprep.subr.mxu0 0.0
    %1284 = vmatpush1.msra.mxu0 0.0
    %1285 = vmatprep.subr.mxu0 0.0
    %1286 = vmatpush1.msra.mxu0 0.0
    %1287 = vmatprep.subr.mxu0 0.0
    %1288 = vmatpush1.msra.mxu0 0.0
    %1289 = vmatprep.subr.mxu0 0.0
    %1290 = vmatpush1.msra.mxu0 0.0
    %1291 = vmatprep.subr.mxu0 0.0
    %1292 = vmatpush1.msra.mxu0 0.0
    %1293 = vmatprep.subr.mxu0 0.0
    %1294 = vmatpush1.msra.mxu0 0.0
    %1295 = vmatprep.subr.mxu0 0.0
    %1296 = vmatpush1.msra.mxu0 0.0
    %1297 = vmatprep.subr.mxu0 0.0
    %1298 = vmatpush1.msra.mxu0 0.0
    %1299 = vmatprep.subr.mxu0 0.0
    %1300 = vmatpush1.msra.mxu0 0.0
    %1301 = vmatprep.subr.mxu0 0.0
    %1302 = vmatpush1.msra.mxu0 0.0
    %1303 = vmatprep.subr.mxu0 0.0
    %1304 = vmatpush1.msra.mxu0 0.0
    %1305 = vmatprep.subr.mxu0 0.0
    %1306 = vmatpush1.msra.mxu0 0.0
    %1307 = vmatprep.subr.mxu0 0.0
    %1308 = vmatpush1.msra.mxu0 0.0
    %1309 = vmatprep.subr.mxu0 0.0
    %1310 = vmatpush1.msra.mxu0 0.0
    %1311 = vmatprep.subr.mxu0 0.0
    %1312 = vmatpush1.msra.mxu0 0.0
    %1313 = vmatprep.subr.mxu0 0.0
    %1314 = vmatpush1.msra.mxu0 0.0
    %1315 = vmatprep.subr.mxu0 0.0
    %1316 = vmatpush1.msra.mxu0 0.0
    %1317 = vmatprep.subr.mxu0 0.0
    %1318 = vmatpush1.msra.mxu0 0.0
    %1319 = vmatprep.subr.mxu0 0.0
    %1320 = vmatpush1.msra.mxu0 0.0
    %1321 = vmatprep.mubr.f32.mxu0 0.0
    %1322 = vmatmul.mubr.f32.gmra.mrb[0].mxu0 %v640
    %v1323 = vpop.f32.mrb[0].mxu0
    %v1324 = vadd.f32 0.0, %v1323
    %v1325 = vpop.f32.mrb[0].mxu0
    %1326 = vmatprep.mubr.f32.mxu0 0.0
    %1327 = vmatmul.mubr.f32.gmra.mrb[0].mxu0 %v643
    %v1328 = vpop.f32.mrb[0].mxu0
    %v1329 = vadd.f32 0.0, %v1328
    %v1330 = vpop.f32.mrb[0].mxu0
    %1331 = vdwg.mxu0
    %1336 = vrot.lane.b32.xlu0 %v1175, 32
    %v1337 = vpop.permute.xlu0 %1336
    %1338 = vrot.lane.b32.xlu0 %v1180, 32
    %v1339 = vpop.permute.xlu0 %1338
    %1340 = vrot.lane.b32.xlu0 %v1324, 32
    %v1341 = vpop.permute.xlu0 %1340
    %1342 = vrot.lane.b32.xlu0 %v1329, 32
    %v1343 = vpop.permute.xlu0 %1342
    %1354 = vrot.lane.b32.xlu0 %v945, 64
    %v1355 = vpop.permute.xlu0 %1354
    %1356 = vrot.lane.b32.xlu0 %v946, 64
    %v1357 = vpop.permute.xlu0 %1356
    %1358 = vrot.lane.b32.xlu0 %v947, 64
    %v1359 = vpop.permute.xlu0 %1358
    %1360 = vrot.lane.b32.xlu0 %v948, 64
    %v1361 = vpop.permute.xlu0 %1360
    %1362 = vrot.lane.b32.xlu0 %v949, 64
    %v1363 = vpop.permute.xlu0 %1362
    %1364 = vrot.lane.b32.xlu0 %v950, 64
    %v1365 = vpop.permute.xlu0 %1364
    %1376 = vrot.lane.b32.xlu0 %v1011, 64
    %v1377 = vpop.permute.xlu0 %1376
    %1378 = vrot.lane.b32.xlu0 %v1012, 64
    %v1379 = vpop.permute.xlu0 %1378
    %1380 = vrot.lane.b32.xlu0 %v1013, 64
    %v1381 = vpop.permute.xlu0 %1380
    %1382 = vrot.lane.b32.xlu0 %v1014, 64
    %v1383 = vpop.permute.xlu0 %1382
    %1384 = vrot.lane.b32.xlu0 %v1015, 64
    %v1385 = vpop.permute.xlu0 %1384
    %1386 = vrot.lane.b32.xlu0 %v1016, 64
    %v1387 = vpop.permute.xlu0 %1386
    %v1394 = vsel %vm782, %v1101, %v1337
    %v1395 = vsel %vm782, %v1250, %v1339
    %v1396 = vsel %vm782, 0.0, %v1341
    %v1397 = vsel %vm782, 0.0, %v1343
    %v1398 = vsel %vm788, %v1394, %v1355
    %v1399 = vsel %vm788, %v1395, %v1357
    %v1400 = vsel %vm788, %v1396, %v1359
    %v1401 = vsel %vm788, %v1397, %v1361
    %v1402 = vsel %vm788, %v787, %v1363
    %v1403 = vsel %vm788, %v787, %v1365
    %v1404 = vsel %vm795, %v1398, %v1377
    %v1405 = vsel %vm795, %v1399, %v1379
    %v1406 = vsel %vm795, %v1400, %v1381
    %v1407 = vsel %vm795, %v1401, %v1383
    %v1408 = vsel %vm795, %v1402, %v1385
    %v1409 = vsel %vm795, %v1403, %v1387
    %v1411 = vlaneseq
    %v1412 = vshrl.u32 %v1411, 7
    %v1413 = vsub.s32 0, %v1412
    %v1414 = vrot.slane %v1033, %v1413
    %1416 = vmatprep.subr.mxu0 0.0
    %1417 = vmatpush1.msra.mxu0 %v1017
    %1418 = vmatprep.subr.mxu0 0.0
    %1419 = vmatpush1.msra.mxu0 %v1018
    %1420 = vmatprep.subr.mxu0 0.0
    %1421 = vmatpush1.msra.mxu0 %v1019
    %1422 = vmatprep.subr.mxu0 0.0
    %1423 = vmatpush1.msra.mxu0 %v1020
    %1424 = vmatprep.subr.mxu0 0.0
    %1425 = vmatpush1.msra.mxu0 %v1021
    %1426 = vmatprep.subr.mxu0 0.0
    %1427 = vmatpush1.msra.mxu0 %v1022
    %1428 = vmatprep.subr.mxu0 0.0
    %1429 = vmatpush1.msra.mxu0 %v1023
    %1430 = vmatprep.subr.mxu0 0.0
    %1431 = vmatpush1.msra.mxu0 %v1024
    %1432 = vmatprep.subr.mxu0 0.0
    %1433 = vmatpush1.msra.mxu0 %v1025
    %1434 = vmatprep.subr.mxu0 0.0
    %1435 = vmatpush1.msra.mxu0 %v1026
    %1436 = vmatprep.subr.mxu0 0.0
    %1437 = vmatpush1.msra.mxu0 %v1027
    %1438 = vmatprep.subr.mxu0 0.0
    %1439 = vmatpush1.msra.mxu0 %v1028
    %1440 = vmatprep.subr.mxu0 0.0
    %1441 = vmatpush1.msra.mxu0 %v1029
    %1442 = vmatprep.subr.mxu0 0.0
    %1443 = vmatpush1.msra.mxu0 %v1030
    %1444 = vmatprep.subr.mxu0 0.0
    %1445 = vmatpush1.msra.mxu0 %v1031
    %1446 = vmatprep.subr.mxu0 0.0
    %1447 = vmatpush1.msra.mxu0 %v1032
    %1448 = vmatprep.subr.mxu0 0.0
    %1449 = vmatpush1.msra.mxu0 0.0
    %1450 = vmatprep.subr.mxu0 0.0
    %1451 = vmatpush1.msra.mxu0 0.0
    %1452 = vmatprep.subr.mxu0 0.0
    %1453 = vmatpush1.msra.mxu0 0.0
    %1454 = vmatprep.subr.mxu0 0.0
    %1455 = vmatpush1.msra.mxu0 0.0
    %1456 = vmatprep.subr.mxu0 0.0
    %1457 = vmatpush1.msra.mxu0 0.0
    %1458 = vmatprep.subr.mxu0 0.0
    %1459 = vmatpush1.msra.mxu0 0.0
    %1460 = vmatprep.subr.mxu0 0.0
    %1461 = vmatpush1.msra.mxu0 0.0
    %1462 = vmatprep.subr.mxu0 0.0
    %1463 = vmatpush1.msra.mxu0 0.0
    %1464 = vmatprep.subr.mxu0 0.0
    %1465 = vmatpush1.msra.mxu0 0.0
    %1466 = vmatprep.subr.mxu0 0.0
    %1467 = vmatpush1.msra.mxu0 0.0
    %1468 = vmatprep.subr.mxu0 0.0
    %1469 = vmatpush1.msra.mxu0 0.0
    %1470 = vmatprep.subr.mxu0 0.0
    %1471 = vmatpush1.msra.mxu0 0.0
    %1472 = vmatprep.subr.mxu0 0.0
    %1473 = vmatpush1.msra.mxu0 0.0
    %1474 = vmatprep.subr.mxu0 0.0
    %1475 = vmatpush1.msra.mxu0 0.0
    %1476 = vmatprep.subr.mxu0 0.0
    %1477 = vmatpush1.msra.mxu0 0.0
    %1478 = vmatprep.subr.mxu0 0.0
    %1479 = vmatpush1.msra.mxu0 0.0
    %1480 = vmatprep.mubr.f32.mxu0 0.0
    %1481 = vmatmul.mubr.f32.gmra.mrb[0].mxu0 %v1404
    %v1482 = vpop.f32.mrb[0].mxu0
    %v1483 = vadd.f32 %v1414, %v1482
    %v1484 = vpop.f32.mrb[0].mxu0
    %1485 = vmatprep.mubr.f32.mxu0 0.0
    %1486 = vmatmul.mubr.f32.gmra.mrb[0].mxu0 %v1405
    %v1487 = vpop.f32.mrb[0].mxu0
    %v1488 = vadd.f32 %v1414, %v1487
    %v1489 = vpop.f32.mrb[0].mxu0
    %1490 = vmatprep.mubr.f32.mxu0 0.0
    %1491 = vmatmul.mubr.f32.gmra.mrb[0].mxu0 %v1406
    %v1492 = vpop.f32.mrb[0].mxu0
    %v1493 = vadd.f32 %v1414, %v1492
    %v1494 = vpop.f32.mrb[0].mxu0
    %1495 = vmatprep.mubr.f32.mxu0 0.0
    %1496 = vmatmul.mubr.f32.gmra.mrb[0].mxu0 %v1407
    %v1497 = vpop.f32.mrb[0].mxu0
    %v1498 = vadd.f32 %v1414, %v1497
    %v1499 = vpop.f32.mrb[0].mxu0
    %1500 = vmatprep.mubr.f32.mxu0 0.0
    %1501 = vmatmul.mubr.f32.gmra.mrb[0].mxu0 %v1408
    %v1502 = vpop.f32.mrb[0].mxu0
    %v1503 = vadd.f32 %v1414, %v1502
    %v1504 = vpop.f32.mrb[0].mxu0
    %1505 = vmatprep.mubr.f32.mxu0 0.0
    %1506 = vmatmul.mubr.f32.gmra.mrb[0].mxu0 %v1409
    %v1507 = vpop.f32.mrb[0].mxu0
    %v1508 = vadd.f32 %v1414, %v1507
    %v1509 = vpop.f32.mrb[0].mxu0
    %1510 = vdwg.mxu0
    %v1511 = vmul.f32 %v1483, %v1483
    %v1512 = vmul.f32 %v1488, %v1488
    %v1513 = vmul.f32 %v1493, %v1493
    %v1514 = vmul.f32 %v1498, %v1498
    %v1515 = vsel %vm782, %v1511, 0.0
    %1516 = vadd.xlane.f32.xlu0 %v1515
    %v1517 = vpop.xlane.xlu0 %1516
    %v1518 = vsel %vm782, %v1512, 0.0
    %1519 = vadd.xlane.f32.xlu0 %v1518
    %v1520 = vpop.xlane.xlu0 %1519
    %v1521 = vsel %vm782, %v1513, 0.0
    %1522 = vadd.xlane.f32.xlu0 %v1521
    %v1523 = vpop.xlane.xlu0 %1522
    %v1524 = vsel %vm782, %v1514, 0.0
    %1525 = vadd.xlane.f32.xlu0 %v1524
    %v1526 = vpop.xlane.xlu0 %1525
    %v1527 = vmax.f32 %v1517, 1e-24
    %v1528 = vmax.f32 %v1520, 1e-24
    %v1529 = vmax.f32 %v1523, 1e-24
    %v1530 = vmax.f32 %v1526, 1e-24
    %v1531 = vrsqrt.pop %v1527
    %v1532 = vrsqrt.pop %v1528
    %v1533 = vrsqrt.pop %v1529
    %v1534 = vrsqrt.pop %v1530
    %v1535 = vmul.f32 %v1483, %v1531
    %v1536 = vmul.f32 %v1488, %v1532
    %v1537 = vmul.f32 %v1493, %v1533
    %v1538 = vmul.f32 %v1498, %v1534
    %v1539 = vmax.f32 %v1535, 0.0
    %v1540 = vmax.f32 %v1536, 0.0
    %v1541 = vmax.f32 %v1537, 0.0
    %v1542 = vmax.f32 %v1538, 0.0
    %v1543 = vmul.f32 %v1503, %v1503
    %v1544 = vmul.f32 %v1508, %v1508
    %1547 = vrot.lane.b32.xlu0 %v1543, 96
    %v1548 = vpop.permute.xlu0 %1547
    %1549 = vrot.lane.b32.xlu0 %v1544, 96
    %v1550 = vpop.permute.xlu0 %1549
    %v1553 = vsel %vm782, %v1548, 0.0
    %1554 = vadd.xlane.f32.xlu0 %v1553
    %v1555 = vpop.xlane.xlu0 %1554
    %v1556 = vsel %vm782, %v1550, 0.0
    %1557 = vadd.xlane.f32.xlu0 %v1556
    %v1558 = vpop.xlane.xlu0 %1557
    %v1559 = vmax.f32 %v1555, 1e-24
    %v1560 = vmax.f32 %v1558, 1e-24
    %v1561 = vrsqrt.pop %v1559
    %v1562 = vrsqrt.pop %v1560
    %v1563 = vmul.f32 %v1503, %v1561
    %v1564 = vmul.f32 %v1508, %v1562
    %v1565 = vmax.f32 %v1563, 0.0
    %v1566 = vmax.f32 %v1564, 0.0
    %v1568 = vsel %vm187, %v269, 0
    %v1571 = vsel %vm187, %v270, 0
    %1573 = vmatprep.subr.mxu0 0.0
    %1574 = vmatpush1.msra.mxu0 %v261
    %1575 = vmatprep.subr.mxu0 0.0
    %1576 = vmatpush1.msra.mxu0 0.0
    %1577 = vmatprep.subr.mxu0 0.0
    %1578 = vmatpush1.msra.mxu0 0.0
    %1579 = vmatprep.subr.mxu0 0.0
    %1580 = vmatpush1.msra.mxu0 0.0
    %1581 = vmatprep.subr.mxu0 0.0
    %1582 = vmatpush1.msra.mxu0 0.0
    %1583 = vmatprep.subr.mxu0 0.0
    %1584 = vmatpush1.msra.mxu0 0.0
    %1585 = vmatprep.subr.mxu0 0.0
    %1586 = vmatpush1.msra.mxu0 0.0
    %1587 = vmatprep.subr.mxu0 0.0
    %1588 = vmatpush1.msra.mxu0 0.0
    %1589 = vmatprep.subr.mxu0 0.0
    %1590 = vmatpush1.msra.mxu0 0.0
    %1591 = vmatprep.subr.mxu0 0.0
    %1592 = vmatpush1.msra.mxu0 0.0
    %1593 = vmatprep.subr.mxu0 0.0
    %1594 = vmatpush1.msra.mxu0 0.0
    %1595 = vmatprep.subr.mxu0 0.0
    %1596 = vmatpush1.msra.mxu0 0.0
    %1597 = vmatprep.subr.mxu0 0.0
    %1598 = vmatpush1.msra.mxu0 0.0
    %1599 = vmatprep.subr.mxu0 0.0
    %1600 = vmatpush1.msra.mxu0 0.0
    %1601 = vmatprep.subr.mxu0 0.0
    %1602 = vmatpush1.msra.mxu0 0.0
    %1603 = vmatprep.subr.mxu0 0.0
    %1604 = vmatpush1.msra.mxu0 0.0
    %1605 = vmatprep.subr.mxu0 0.0
    %1606 = vmatpush1.msra.mxu0 0.0
    %1607 = vmatprep.subr.mxu0 0.0
    %1608 = vmatpush1.msra.mxu0 0.0
    %1609 = vmatprep.subr.mxu0 0.0
    %1610 = vmatpush1.msra.mxu0 0.0
    %1611 = vmatprep.subr.mxu0 0.0
    %1612 = vmatpush1.msra.mxu0 0.0
    %1613 = vmatprep.subr.mxu0 0.0
    %1614 = vmatpush1.msra.mxu0 0.0
    %1615 = vmatprep.subr.mxu0 0.0
    %1616 = vmatpush1.msra.mxu0 0.0
    %1617 = vmatprep.subr.mxu0 0.0
    %1618 = vmatpush1.msra.mxu0 0.0
    %1619 = vmatprep.subr.mxu0 0.0
    %1620 = vmatpush1.msra.mxu0 0.0
    %1621 = vmatprep.subr.mxu0 0.0
    %1622 = vmatpush1.msra.mxu0 0.0
    %1623 = vmatprep.subr.mxu0 0.0
    %1624 = vmatpush1.msra.mxu0 0.0
    %1625 = vmatprep.subr.mxu0 0.0
    %1626 = vmatpush1.msra.mxu0 0.0
    %1627 = vmatprep.subr.mxu0 0.0
    %1628 = vmatpush1.msra.mxu0 0.0
    %1629 = vmatprep.subr.mxu0 0.0
    %1630 = vmatpush1.msra.mxu0 0.0
    %1631 = vmatprep.subr.mxu0 0.0
    %1632 = vmatpush1.msra.mxu0 0.0
    %1633 = vmatprep.subr.mxu0 0.0
    %1634 = vmatpush1.msra.mxu0 0.0
    %1635 = vmatprep.subr.mxu0 0.0
    %1636 = vmatpush1.msra.mxu0 0.0
    %1637 = vmatprep.mubr.f32.mxu0 0.0
    %1638 = vmatmul.mubr.f32.gmra.mrb[0].mxu0 %v1568
    %v1639 = vpop.f32.mrb[0].mxu0
    %v1640 = vadd.f32 0.0, %v1639
    %v1641 = vpop.f32.mrb[0].mxu0
    %1642 = vmatprep.mubr.f32.mxu0 0.0
    %1643 = vmatmul.mubr.f32.gmra.mrb[0].mxu0 %v1571
    %v1644 = vpop.f32.mrb[0].mxu0
    %v1645 = vadd.f32 0.0, %v1644
    %v1646 = vpop.f32.mrb[0].mxu0
    %1647 = vdwg.mxu0
    %1648 = vxpose.xlu0.b32.start [1/16] %v269, 128
    %1649 = vxpose.xlu0.b32.cont [2/16] %v270, 128
    %1650 = vxpose.xlu0.b32.cont [3/16] 0.0, 128
    %1651 = vxpose.xlu0.b32.cont [4/16] 0.0, 128
    %1652 = vxpose.xlu0.b32.cont [5/16] 0.0, 128
    %1653 = vxpose.xlu0.b32.cont [6/16] 0.0, 128
    %1654 = vxpose.xlu0.b32.cont [7/16] 0.0, 128
    %1655 = vxpose.xlu0.b32.cont [8/16] 0.0, 128
    %1656 = vxpose.xlu0.b32.cont [9/16] 0.0, 128
    %1657 = vxpose.xlu0.b32.cont [10/16] 0.0, 128
    %1658 = vxpose.xlu0.b32.cont [11/16] 0.0, 128
    %1659 = vxpose.xlu0.b32.cont [12/16] 0.0, 128
    %1660 = vxpose.xlu0.b32.cont [13/16] 0.0, 128
    %1661 = vxpose.xlu0.b32.cont [14/16] 0.0, 128
    %1662 = vxpose.xlu0.b32.cont [15/16] 0.0, 128
    %1663 = vxpose.xlu0.b32.end [16/16] 0.0, 128
    %v1664 = vpop.trf.xlu0
    %v1665 = vpop.trf.xlu0
    %v1666 = vpop.trf.xlu0
    %v1667 = vpop.trf.xlu0
    %v1668 = vpop.trf.xlu0
    %v1669 = vpop.trf.xlu0
    %v1670 = vpop.trf.xlu0
    %v1671 = vpop.trf.xlu0
    %v1672 = vpop.trf.xlu0
    %v1673 = vpop.trf.xlu0
    %v1674 = vpop.trf.xlu0
    %v1675 = vpop.trf.xlu0
    %v1676 = vpop.trf.xlu0
    %v1677 = vpop.trf.xlu0
    %v1678 = vpop.trf.xlu0
    %v1679 = vpop.trf.xlu0
    %v1681 = vsel %vm79, %v1664, 0
    %1683 = vmatprep.subr.mxu0 0.0
    %1684 = vmatpush1.msra.mxu0 %v159
    %1685 = vmatprep.subr.mxu0 0.0
    %1686 = vmatpush1.msra.mxu0 %v164
    %1687 = vmatprep.subr.mxu0 0.0
    %1688 = vmatpush1.msra.mxu0 0.0
    %1689 = vmatprep.subr.mxu0 0.0
    %1690 = vmatpush1.msra.mxu0 0.0
    %1691 = vmatprep.subr.mxu0 0.0
    %1692 = vmatpush1.msra.mxu0 0.0
    %1693 = vmatprep.subr.mxu0 0.0
    %1694 = vmatpush1.msra.mxu0 0.0
    %1695 = vmatprep.subr.mxu0 0.0
    %1696 = vmatpush1.msra.mxu0 0.0
    %1697 = vmatprep.subr.mxu0 0.0
    %1698 = vmatpush1.msra.mxu0 0.0
    %1699 = vmatprep.subr.mxu0 0.0
    %1700 = vmatpush1.msra.mxu0 0.0
    %1701 = vmatprep.subr.mxu0 0.0
    %1702 = vmatpush1.msra.mxu0 0.0
    %1703 = vmatprep.subr.mxu0 0.0
    %1704 = vmatpush1.msra.mxu0 0.0
    %1705 = vmatprep.subr.mxu0 0.0
    %1706 = vmatpush1.msra.mxu0 0.0
    %1707 = vmatprep.subr.mxu0 0.0
    %1708 = vmatpush1.msra.mxu0 0.0
    %1709 = vmatprep.subr.mxu0 0.0
    %1710 = vmatpush1.msra.mxu0 0.0
    %1711 = vmatprep.subr.mxu0 0.0
    %1712 = vmatpush1.msra.mxu0 0.0
    %1713 = vmatprep.subr.mxu0 0.0
    %1714 = vmatpush1.msra.mxu0 0.0
    %1715 = vmatprep.subr.mxu0 0.0
    %1716 = vmatpush1.msra.mxu0 0.0
    %1717 = vmatprep.subr.mxu0 0.0
    %1718 = vmatpush1.msra.mxu0 0.0
    %1719 = vmatprep.subr.mxu0 0.0
    %1720 = vmatpush1.msra.mxu0 0.0
    %1721 = vmatprep.subr.mxu0 0.0
    %1722 = vmatpush1.msra.mxu0 0.0
    %1723 = vmatprep.subr.mxu0 0.0
    %1724 = vmatpush1.msra.mxu0 0.0
    %1725 = vmatprep.subr.mxu0 0.0
    %1726 = vmatpush1.msra.mxu0 0.0
    %1727 = vmatprep.subr.mxu0 0.0
    %1728 = vmatpush1.msra.mxu0 0.0
    %1729 = vmatprep.subr.mxu0 0.0
    %1730 = vmatpush1.msra.mxu0 0.0
    %1731 = vmatprep.subr.mxu0 0.0
    %1732 = vmatpush1.msra.mxu0 0.0
    %1733 = vmatprep.subr.mxu0 0.0
    %1734 = vmatpush1.msra.mxu0 0.0
    %1735 = vmatprep.subr.mxu0 0.0
    %1736 = vmatpush1.msra.mxu0 0.0
    %1737 = vmatprep.subr.mxu0 0.0
    %1738 = vmatpush1.msra.mxu0 0.0
    %1739 = vmatprep.subr.mxu0 0.0
    %1740 = vmatpush1.msra.mxu0 0.0
    %1741 = vmatprep.subr.mxu0 0.0
    %1742 = vmatpush1.msra.mxu0 0.0
    %1743 = vmatprep.subr.mxu0 0.0
    %1744 = vmatpush1.msra.mxu0 0.0
    %1745 = vmatprep.subr.mxu0 0.0
    %1746 = vmatpush1.msra.mxu0 0.0
    %1747 = vmatprep.mubr.f32.mxu0 0.0
    %1748 = vmatmul.mubr.f32.gmra.mrb[0].mxu0 %v1681
    %v1749 = vpop.f32.mrb[0].mxu0
    %v1750 = vadd.f32 0.0, %v1749
    %v1751 = vpop.f32.mrb[0].mxu0
    %1752 = vdwg.mxu0
    %v1754 = vsel %vm187, %v271, 0
    %v1757 = vsel %vm187, %v272, 0
    %1759 = vmatprep.subr.mxu0 0.0
    %1760 = vmatpush1.msra.mxu0 %v266
    %1761 = vmatprep.subr.mxu0 0.0
    %1762 = vmatpush1.msra.mxu0 0.0
    %1763 = vmatprep.subr.mxu0 0.0
    %1764 = vmatpush1.msra.mxu0 0.0
    %1765 = vmatprep.subr.mxu0 0.0
    %1766 = vmatpush1.msra.mxu0 0.0
    %1767 = vmatprep.subr.mxu0 0.0
    %1768 = vmatpush1.msra.mxu0 0.0
    %1769 = vmatprep.subr.mxu0 0.0
    %1770 = vmatpush1.msra.mxu0 0.0
    %1771 = vmatprep.subr.mxu0 0.0
    %1772 = vmatpush1.msra.mxu0 0.0
    %1773 = vmatprep.subr.mxu0 0.0
    %1774 = vmatpush1.msra.mxu0 0.0
    %1775 = vmatprep.subr.mxu0 0.0
    %1776 = vmatpush1.msra.mxu0 0.0
    %1777 = vmatprep.subr.mxu0 0.0
    %1778 = vmatpush1.msra.mxu0 0.0
    %1779 = vmatprep.subr.mxu0 0.0
    %1780 = vmatpush1.msra.mxu0 0.0
    %1781 = vmatprep.subr.mxu0 0.0
    %1782 = vmatpush1.msra.mxu0 0.0
    %1783 = vmatprep.subr.mxu0 0.0
    %1784 = vmatpush1.msra.mxu0 0.0
    %1785 = vmatprep.subr.mxu0 0.0
    %1786 = vmatpush1.msra.mxu0 0.0
    %1787 = vmatprep.subr.mxu0 0.0
    %1788 = vmatpush1.msra.mxu0 0.0
    %1789 = vmatprep.subr.mxu0 0.0
    %1790 = vmatpush1.msra.mxu0 0.0
    %1791 = vmatprep.subr.mxu0 0.0
    %1792 = vmatpush1.msra.mxu0 0.0
    %1793 = vmatprep.subr.mxu0 0.0
    %1794 = vmatpush1.msra.mxu0 0.0
    %1795 = vmatprep.subr.mxu0 0.0
    %1796 = vmatpush1.msra.mxu0 0.0
    %1797 = vmatprep.subr.mxu0 0.0
    %1798 = vmatpush1.msra.mxu0 0.0
    %1799 = vmatprep.subr.mxu0 0.0
    %1800 = vmatpush1.msra.mxu0 0.0
    %1801 = vmatprep.subr.mxu0 0.0
    %1802 = vmatpush1.msra.mxu0 0.0
    %1803 = vmatprep.subr.mxu0 0.0
    %1804 = vmatpush1.msra.mxu0 0.0
    %1805 = vmatprep.subr.mxu0 0.0
    %1806 = vmatpush1.msra.mxu0 0.0
    %1807 = vmatprep.subr.mxu0 0.0
    %1808 = vmatpush1.msra.mxu0 0.0
    %1809 = vmatprep.subr.mxu0 0.0
    %1810 = vmatpush1.msra.mxu0 0.0
    %1811 = vmatprep.subr.mxu0 0.0
    %1812 = vmatpush1.msra.mxu0 0.0
    %1813 = vmatprep.subr.mxu0 0.0
    %1814 = vmatpush1.msra.mxu0 0.0
    %1815 = vmatprep.subr.mxu0 0.0
    %1816 = vmatpush1.msra.mxu0 0.0
    %1817 = vmatprep.subr.mxu0 0.0
    %1818 = vmatpush1.msra.mxu0 0.0
    %1819 = vmatprep.subr.mxu0 0.0
    %1820 = vmatpush1.msra.mxu0 0.0
    %1821 = vmatprep.subr.mxu0 0.0
    %1822 = vmatpush1.msra.mxu0 0.0
    %1823 = vmatprep.mubr.f32.mxu0 0.0
    %1824 = vmatmul.mubr.f32.gmra.mrb[0].mxu0 %v1754
    %v1825 = vpop.f32.mrb[0].mxu0
    %v1826 = vadd.f32 0.0, %v1825
    %v1827 = vpop.f32.mrb[0].mxu0
    %1828 = vmatprep.mubr.f32.mxu0 0.0
    %1829 = vmatmul.mubr.f32.gmra.mrb[0].mxu0 %v1757
    %v1830 = vpop.f32.mrb[0].mxu0
    %v1831 = vadd.f32 0.0, %v1830
    %v1832 = vpop.f32.mrb[0].mxu0
    %1833 = vdwg.mxu0
    %1834 = vxpose.xlu0.b32.start [1/16] %v271, 128
    %1835 = vxpose.xlu0.b32.cont [2/16] %v272, 128
    %1836 = vxpose.xlu0.b32.cont [3/16] 0.0, 128
    %1837 = vxpose.xlu0.b32.cont [4/16] 0.0, 128
    %1838 = vxpose.xlu0.b32.cont [5/16] 0.0, 128
    %1839 = vxpose.xlu0.b32.cont [6/16] 0.0, 128
    %1840 = vxpose.xlu0.b32.cont [7/16] 0.0, 128
    %1841 = vxpose.xlu0.b32.cont [8/16] 0.0, 128
    %1842 = vxpose.xlu0.b32.cont [9/16] 0.0, 128
    %1843 = vxpose.xlu0.b32.cont [10/16] 0.0, 128
    %1844 = vxpose.xlu0.b32.cont [11/16] 0.0, 128
    %1845 = vxpose.xlu0.b32.cont [12/16] 0.0, 128
    %1846 = vxpose.xlu0.b32.cont [13/16] 0.0, 128
    %1847 = vxpose.xlu0.b32.cont [14/16] 0.0, 128
    %1848 = vxpose.xlu0.b32.cont [15/16] 0.0, 128
    %1849 = vxpose.xlu0.b32.end [16/16] 0.0, 128
    %v1850 = vpop.trf.xlu0
    %v1851 = vpop.trf.xlu0
    %v1852 = vpop.trf.xlu0
    %v1853 = vpop.trf.xlu0
    %v1854 = vpop.trf.xlu0
    %v1855 = vpop.trf.xlu0
    %v1856 = vpop.trf.xlu0
    %v1857 = vpop.trf.xlu0
    %v1858 = vpop.trf.xlu0
    %v1859 = vpop.trf.xlu0
    %v1860 = vpop.trf.xlu0
    %v1861 = vpop.trf.xlu0
    %v1862 = vpop.trf.xlu0
    %v1863 = vpop.trf.xlu0
    %v1864 = vpop.trf.xlu0
    %v1865 = vpop.trf.xlu0
    %v1867 = vsel %vm79, %v1850, 0
    %1869 = vmatprep.subr.mxu0 0.0
    %1870 = vmatpush1.msra.mxu0 %v169
    %1871 = vmatprep.subr.mxu0 0.0
    %1872 = vmatpush1.msra.mxu0 %v174
    %1873 = vmatprep.subr.mxu0 0.0
    %1874 = vmatpush1.msra.mxu0 0.0
    %1875 = vmatprep.subr.mxu0 0.0
    %1876 = vmatpush1.msra.mxu0 0.0
    %1877 = vmatprep.subr.mxu0 0.0
    %1878 = vmatpush1.msra.mxu0 0.0
    %1879 = vmatprep.subr.mxu0 0.0
    %1880 = vmatpush1.msra.mxu0 0.0
    %1881 = vmatprep.subr.mxu0 0.0
    %1882 = vmatpush1.msra.mxu0 0.0
    %1883 = vmatprep.subr.mxu0 0.0
    %1884 = vmatpush1.msra.mxu0 0.0
    %1885 = vmatprep.subr.mxu0 0.0
    %1886 = vmatpush1.msra.mxu0 0.0
    %1887 = vmatprep.subr.mxu0 0.0
    %1888 = vmatpush1.msra.mxu0 0.0
    %1889 = vmatprep.subr.mxu0 0.0
    %1890 = vmatpush1.msra.mxu0 0.0
    %1891 = vmatprep.subr.mxu0 0.0
    %1892 = vmatpush1.msra.mxu0 0.0
    %1893 = vmatprep.subr.mxu0 0.0
    %1894 = vmatpush1.msra.mxu0 0.0
    %1895 = vmatprep.subr.mxu0 0.0
    %1896 = vmatpush1.msra.mxu0 0.0
    %1897 = vmatprep.subr.mxu0 0.0
    %1898 = vmatpush1.msra.mxu0 0.0
    %1899 = vmatprep.subr.mxu0 0.0
    %1900 = vmatpush1.msra.mxu0 0.0
    %1901 = vmatprep.subr.mxu0 0.0
    %1902 = vmatpush1.msra.mxu0 0.0
    %1903 = vmatprep.subr.mxu0 0.0
    %1904 = vmatpush1.msra.mxu0 0.0
    %1905 = vmatprep.subr.mxu0 0.0
    %1906 = vmatpush1.msra.mxu0 0.0
    %1907 = vmatprep.subr.mxu0 0.0
    %1908 = vmatpush1.msra.mxu0 0.0
    %1909 = vmatprep.subr.mxu0 0.0
    %1910 = vmatpush1.msra.mxu0 0.0
    %1911 = vmatprep.subr.mxu0 0.0
    %1912 = vmatpush1.msra.mxu0 0.0
    %1913 = vmatprep.subr.mxu0 0.0
    %1914 = vmatpush1.msra.mxu0 0.0
    %1915 = vmatprep.subr.mxu0 0.0
    %1916 = vmatpush1.msra.mxu0 0.0
    %1917 = vmatprep.subr.mxu0 0.0
    %1918 = vmatpush1.msra.mxu0 0.0
    %1919 = vmatprep.subr.mxu0 0.0
    %1920 = vmatpush1.msra.mxu0 0.0
    %1921 = vmatprep.subr.mxu0 0.0
    %1922 = vmatpush1.msra.mxu0 0.0
    %1923 = vmatprep.subr.mxu0 0.0
    %1924 = vmatpush1.msra.mxu0 0.0
    %1925 = vmatprep.subr.mxu0 0.0
    %1926 = vmatpush1.msra.mxu0 0.0
    %1927 = vmatprep.subr.mxu0 0.0
    %1928 = vmatpush1.msra.mxu0 0.0
    %1929 = vmatprep.subr.mxu0 0.0
    %1930 = vmatpush1.msra.mxu0 0.0
    %1931 = vmatprep.subr.mxu0 0.0
    %1932 = vmatpush1.msra.mxu0 0.0
    %1933 = vmatprep.mubr.f32.mxu0 0.0
    %1934 = vmatmul.mubr.f32.gmra.mrb[0].mxu0 %v1867
    %v1935 = vpop.f32.mrb[0].mxu0
    %v1936 = vadd.f32 0.0, %v1935
    %v1937 = vpop.f32.mrb[0].mxu0
    %1938 = vdwg.mxu0
    %v1939 = vld [vmem:[%s11] sm:$0xff]
    %v1940 = vld [vmem:[%s11 + $0x8] sm:$0xff]
    %v1941 = vld [vmem:[%s11 + $0x10] sm:$0xff]
    %v1942 = vld [vmem:[%s11 + $0x18] sm:$0xff]
    %v1943 = vld [vmem:[%s11 + $0x20] sm:$0xff]
    %v1944 = vld [vmem:[%s11 + $0x28] sm:$0xff]
    %v1945 = vld [vmem:[%s11 + $0x30] sm:$0xff]
    %v1946 = vld [vmem:[%s11 + $0x38] sm:$0xff]
    %v1947 = vld [vmem:[%s11 + $0x40] sm:$0xff]
    %v1948 = vld [vmem:[%s11 + $0x48] sm:$0xff]
    %v1949 = vld [vmem:[%s11 + $0x50] sm:$0xff]
    %v1950 = vld [vmem:[%s11 + $0x58] sm:$0xff]
    %v1952 = vsel %vm782, %v1539, 0
    %v1955 = vsel %vm782, %v1540, 0
    %v1958 = vsel %vm782, %v1541, 0
    %v1961 = vsel %vm782, %v1542, 0
    %1963 = vmatprep.subr.mxu0 0.0
    %1964 = vmatpush1.msra.mxu0 %v1943
    %1965 = vmatprep.subr.mxu0 0.0
    %1966 = vmatpush1.msra.mxu0 %v1944
    %1967 = vmatprep.subr.mxu0 0.0
    %1968 = vmatpush1.msra.mxu0 %v1945
    %1969 = vmatprep.subr.mxu0 0.0
    %1970 = vmatpush1.msra.mxu0 %v1946
    %1971 = vmatprep.subr.mxu0 0.0
    %1972 = vmatpush1.msra.mxu0 0.0
    %1973 = vmatprep.subr.mxu0 0.0
    %1974 = vmatpush1.msra.mxu0 0.0
    %1975 = vmatprep.subr.mxu0 0.0
    %1976 = vmatpush1.msra.mxu0 0.0
    %1977 = vmatprep.subr.mxu0 0.0
    %1978 = vmatpush1.msra.mxu0 0.0
    %1979 = vmatprep.subr.mxu0 0.0
    %1980 = vmatpush1.msra.mxu0 0.0
    %1981 = vmatprep.subr.mxu0 0.0
    %1982 = vmatpush1.msra.mxu0 0.0
    %1983 = vmatprep.subr.mxu0 0.0
    %1984 = vmatpush1.msra.mxu0 0.0
    %1985 = vmatprep.subr.mxu0 0.0
    %1986 = vmatpush1.msra.mxu0 0.0
    %1987 = vmatprep.subr.mxu0 0.0
    %1988 = vmatpush1.msra.mxu0 0.0
    %1989 = vmatprep.subr.mxu0 0.0
    %1990 = vmatpush1.msra.mxu0 0.0
    %1991 = vmatprep.subr.mxu0 0.0
    %1992 = vmatpush1.msra.mxu0 0.0
    %1993 = vmatprep.subr.mxu0 0.0
    %1994 = vmatpush1.msra.mxu0 0.0
    %1995 = vmatprep.subr.mxu0 0.0
    %1996 = vmatpush1.msra.mxu0 0.0
    %1997 = vmatprep.subr.mxu0 0.0
    %1998 = vmatpush1.msra.mxu0 0.0
    %1999 = vmatprep.subr.mxu0 0.0
    %2000 = vmatpush1.msra.mxu0 0.0
    %2001 = vmatprep.subr.mxu0 0.0
    %2002 = vmatpush1.msra.mxu0 0.0
    %2003 = vmatprep.subr.mxu0 0.0
    %2004 = vmatpush1.msra.mxu0 0.0
    %2005 = vmatprep.subr.mxu0 0.0
    %2006 = vmatpush1.msra.mxu0 0.0
    %2007 = vmatprep.subr.mxu0 0.0
    %2008 = vmatpush1.msra.mxu0 0.0
    %2009 = vmatprep.subr.mxu0 0.0
    %2010 = vmatpush1.msra.mxu0 0.0
    %2011 = vmatprep.subr.mxu0 0.0
    %2012 = vmatpush1.msra.mxu0 0.0
    %2013 = vmatprep.subr.mxu0 0.0
    %2014 = vmatpush1.msra.mxu0 0.0
    %2015 = vmatprep.subr.mxu0 0.0
    %2016 = vmatpush1.msra.mxu0 0.0
    %2017 = vmatprep.subr.mxu0 0.0
    %2018 = vmatpush1.msra.mxu0 0.0
    %2019 = vmatprep.subr.mxu0 0.0
    %2020 = vmatpush1.msra.mxu0 0.0
    %2021 = vmatprep.subr.mxu0 0.0
    %2022 = vmatpush1.msra.mxu0 0.0
    %2023 = vmatprep.subr.mxu0 0.0
    %2024 = vmatpush1.msra.mxu0 0.0
    %2025 = vmatprep.subr.mxu0 0.0
    %2026 = vmatpush1.msra.mxu0 0.0
    %2027 = vmatprep.mubr.f32.mxu0 0.0
    %2028 = vmatmul.mubr.f32.gmra.mrb[0].mxu0 %v1952
    %v2029 = vpop.f32.mrb[0].mxu0
    %v2030 = vadd.f32 0.0, %v2029
    %v2031 = vpop.f32.mrb[0].mxu0
    %2032 = vmatprep.mubr.f32.mxu0 0.0
    %2033 = vmatmul.mubr.f32.gmra.mrb[0].mxu0 %v1955
    %v2034 = vpop.f32.mrb[0].mxu0
    %v2035 = vadd.f32 0.0, %v2034
    %v2036 = vpop.f32.mrb[0].mxu0
    %2037 = vmatprep.mubr.f32.mxu0 0.0
    %2038 = vmatmul.mubr.f32.gmra.mrb[0].mxu0 %v1958
    %v2039 = vpop.f32.mrb[0].mxu0
    %v2040 = vadd.f32 0.0, %v2039
    %v2041 = vpop.f32.mrb[0].mxu0
    %2042 = vmatprep.mubr.f32.mxu0 0.0
    %2043 = vmatmul.mubr.f32.gmra.mrb[0].mxu0 %v1961
    %v2044 = vpop.f32.mrb[0].mxu0
    %v2045 = vadd.f32 0.0, %v2044
    %v2046 = vpop.f32.mrb[0].mxu0
    %2047 = vdwg.mxu0
    %v2048 = vsel %vm782, %v159, 0
    %v2050 = vsel %vm782, %v164, 0
    %v2052 = vsel %vm782, %v169, 0
    %v2054 = vsel %vm782, %v174, 0
    %2056 = vmatprep.subr.mxu0 0.0
    %2057 = vmatpush1.msra.mxu0 %v1939
    %2058 = vmatprep.subr.mxu0 0.0
    %2059 = vmatpush1.msra.mxu0 %v1940
    %2060 = vmatprep.subr.mxu0 0.0
    %2061 = vmatpush1.msra.mxu0 %v1941
    %2062 = vmatprep.subr.mxu0 0.0
    %2063 = vmatpush1.msra.mxu0 %v1942
    %2064 = vmatprep.subr.mxu0 0.0
    %2065 = vmatpush1.msra.mxu0 0.0
    %2066 = vmatprep.subr.mxu0 0.0
    %2067 = vmatpush1.msra.mxu0 0.0
    %2068 = vmatprep.subr.mxu0 0.0
    %2069 = vmatpush1.msra.mxu0 0.0
    %2070 = vmatprep.subr.mxu0 0.0
    %2071 = vmatpush1.msra.mxu0 0.0
    %2072 = vmatprep.subr.mxu0 0.0
    %2073 = vmatpush1.msra.mxu0 0.0
    %2074 = vmatprep.subr.mxu0 0.0
    %2075 = vmatpush1.msra.mxu0 0.0
    %2076 = vmatprep.subr.mxu0 0.0
    %2077 = vmatpush1.msra.mxu0 0.0
    %2078 = vmatprep.subr.mxu0 0.0
    %2079 = vmatpush1.msra.mxu0 0.0
    %2080 = vmatprep.subr.mxu0 0.0
    %2081 = vmatpush1.msra.mxu0 0.0
    %2082 = vmatprep.subr.mxu0 0.0
    %2083 = vmatpush1.msra.mxu0 0.0
    %2084 = vmatprep.subr.mxu0 0.0
    %2085 = vmatpush1.msra.mxu0 0.0
    %2086 = vmatprep.subr.mxu0 0.0
    %2087 = vmatpush1.msra.mxu0 0.0
    %2088 = vmatprep.subr.mxu0 0.0
    %2089 = vmatpush1.msra.mxu0 0.0
    %2090 = vmatprep.subr.mxu0 0.0
    %2091 = vmatpush1.msra.mxu0 0.0
    %2092 = vmatprep.subr.mxu0 0.0
    %2093 = vmatpush1.msra.mxu0 0.0
    %2094 = vmatprep.subr.mxu0 0.0
    %2095 = vmatpush1.msra.mxu0 0.0
    %2096 = vmatprep.subr.mxu0 0.0
    %2097 = vmatpush1.msra.mxu0 0.0
    %2098 = vmatprep.subr.mxu0 0.0
    %2099 = vmatpush1.msra.mxu0 0.0
    %2100 = vmatprep.subr.mxu0 0.0
    %2101 = vmatpush1.msra.mxu0 0.0
    %2102 = vmatprep.subr.mxu0 0.0
    %2103 = vmatpush1.msra.mxu0 0.0
    %2104 = vmatprep.subr.mxu0 0.0
    %2105 = vmatpush1.msra.mxu0 0.0
    %2106 = vmatprep.subr.mxu0 0.0
    %2107 = vmatpush1.msra.mxu0 0.0
    %2108 = vmatprep.subr.mxu0 0.0
    %2109 = vmatpush1.msra.mxu0 0.0
    %2110 = vmatprep.subr.mxu0 0.0
    %2111 = vmatpush1.msra.mxu0 0.0
    %2112 = vmatprep.subr.mxu0 0.0
    %2113 = vmatpush1.msra.mxu0 0.0
    %2114 = vmatprep.subr.mxu0 0.0
    %2115 = vmatpush1.msra.mxu0 0.0
    %2116 = vmatprep.subr.mxu0 0.0
    %2117 = vmatpush1.msra.mxu0 0.0
    %2118 = vmatprep.subr.mxu0 0.0
    %2119 = vmatpush1.msra.mxu0 0.0
    %2120 = vmatprep.mubr.f32.mxu0 0.0
    %2121 = vmatmul.mubr.f32.gmra.mrb[0].mxu0 %v2048
    %v2122 = vpop.f32.mrb[0].mxu0
    %v2123 = vadd.f32 %v2030, %v2122
    %v2124 = vpop.f32.mrb[0].mxu0
    %2125 = vmatprep.mubr.f32.mxu0 0.0
    %2126 = vmatmul.mubr.f32.gmra.mrb[0].mxu0 %v2050
    %v2127 = vpop.f32.mrb[0].mxu0
    %v2128 = vadd.f32 %v2035, %v2127
    %v2129 = vpop.f32.mrb[0].mxu0
    %2130 = vmatprep.mubr.f32.mxu0 0.0
    %2131 = vmatmul.mubr.f32.gmra.mrb[0].mxu0 %v2052
    %v2132 = vpop.f32.mrb[0].mxu0
    %v2133 = vadd.f32 %v2040, %v2132
    %v2134 = vpop.f32.mrb[0].mxu0
    %2135 = vmatprep.mubr.f32.mxu0 0.0
    %2136 = vmatmul.mubr.f32.gmra.mrb[0].mxu0 %v2054
    %v2137 = vpop.f32.mrb[0].mxu0
    %v2138 = vadd.f32 %v2045, %v2137
    %v2139 = vpop.f32.mrb[0].mxu0
    %2140 = vdwg.mxu0
    %v2142 = vsel %vm782, %v1640, 0
    %v2145 = vsel %vm782, %v1645, 0
    %v2148 = vsel %vm782, %v1826, 0
    %v2151 = vsel %vm782, %v1831, 0
    %2153 = vmatprep.subr.mxu0 0.0
    %2154 = vmatpush1.msra.mxu0 %v1947
    %2155 = vmatprep.subr.mxu0 0.0
    %2156 = vmatpush1.msra.mxu0 %v1948
    %2157 = vmatprep.subr.mxu0 0.0
    %2158 = vmatpush1.msra.mxu0 %v1949
    %2159 = vmatprep.subr.mxu0 0.0
    %2160 = vmatpush1.msra.mxu0 %v1950
    %2161 = vmatprep.subr.mxu0 0.0
    %2162 = vmatpush1.msra.mxu0 0.0
    %2163 = vmatprep.subr.mxu0 0.0
    %2164 = vmatpush1.msra.mxu0 0.0
    %2165 = vmatprep.subr.mxu0 0.0
    %2166 = vmatpush1.msra.mxu0 0.0
    %2167 = vmatprep.subr.mxu0 0.0
    %2168 = vmatpush1.msra.mxu0 0.0
    %2169 = vmatprep.subr.mxu0 0.0
    %2170 = vmatpush1.msra.mxu0 0.0
    %2171 = vmatprep.subr.mxu0 0.0
    %2172 = vmatpush1.msra.mxu0 0.0
    %2173 = vmatprep.subr.mxu0 0.0
    %2174 = vmatpush1.msra.mxu0 0.0
    %2175 = vmatprep.subr.mxu0 0.0
    %2176 = vmatpush1.msra.mxu0 0.0
    %2177 = vmatprep.subr.mxu0 0.0
    %2178 = vmatpush1.msra.mxu0 0.0
    %2179 = vmatprep.subr.mxu0 0.0
    %2180 = vmatpush1.msra.mxu0 0.0
    %2181 = vmatprep.subr.mxu0 0.0
    %2182 = vmatpush1.msra.mxu0 0.0
    %2183 = vmatprep.subr.mxu0 0.0
    %2184 = vmatpush1.msra.mxu0 0.0
    %2185 = vmatprep.subr.mxu0 0.0
    %2186 = vmatpush1.msra.mxu0 0.0
    %2187 = vmatprep.subr.mxu0 0.0
    %2188 = vmatpush1.msra.mxu0 0.0
    %2189 = vmatprep.subr.mxu0 0.0
    %2190 = vmatpush1.msra.mxu0 0.0
    %2191 = vmatprep.subr.mxu0 0.0
    %2192 = vmatpush1.msra.mxu0 0.0
    %2193 = vmatprep.subr.mxu0 0.0
    %2194 = vmatpush1.msra.mxu0 0.0
    %2195 = vmatprep.subr.mxu0 0.0
    %2196 = vmatpush1.msra.mxu0 0.0
    %2197 = vmatprep.subr.mxu0 0.0
    %2198 = vmatpush1.msra.mxu0 0.0
    %2199 = vmatprep.subr.mxu0 0.0
    %2200 = vmatpush1.msra.mxu0 0.0
    %2201 = vmatprep.subr.mxu0 0.0
    %2202 = vmatpush1.msra.mxu0 0.0
    %2203 = vmatprep.subr.mxu0 0.0
    %2204 = vmatpush1.msra.mxu0 0.0
    %2205 = vmatprep.subr.mxu0 0.0
    %2206 = vmatpush1.msra.mxu0 0.0
    %2207 = vmatprep.subr.mxu0 0.0
    %2208 = vmatpush1.msra.mxu0 0.0
    %2209 = vmatprep.subr.mxu0 0.0
    %2210 = vmatpush1.msra.mxu0 0.0
    %2211 = vmatprep.subr.mxu0 0.0
    %2212 = vmatpush1.msra.mxu0 0.0
    %2213 = vmatprep.subr.mxu0 0.0
    %2214 = vmatpush1.msra.mxu0 0.0
    %2215 = vmatprep.subr.mxu0 0.0
    %2216 = vmatpush1.msra.mxu0 0.0
    %2217 = vmatprep.mubr.f32.mxu0 0.0
    %2218 = vmatmul.mubr.f32.gmra.mrb[0].mxu0 %v2142
    %v2219 = vpop.f32.mrb[0].mxu0
    %v2220 = vadd.f32 0.0, %v2219
    %v2221 = vpop.f32.mrb[0].mxu0
    %2222 = vmatprep.mubr.f32.mxu0 0.0
    %2223 = vmatmul.mubr.f32.gmra.mrb[0].mxu0 %v2145
    %v2224 = vpop.f32.mrb[0].mxu0
    %v2225 = vadd.f32 0.0, %v2224
    %v2226 = vpop.f32.mrb[0].mxu0
    %2227 = vmatprep.mubr.f32.mxu0 0.0
    %2228 = vmatmul.mubr.f32.gmra.mrb[0].mxu0 %v2148
    %v2229 = vpop.f32.mrb[0].mxu0
    %v2230 = vadd.f32 0.0, %v2229
    %v2231 = vpop.f32.mrb[0].mxu0
    %2232 = vmatprep.mubr.f32.mxu0 0.0
    %2233 = vmatmul.mubr.f32.gmra.mrb[0].mxu0 %v2151
    %v2234 = vpop.f32.mrb[0].mxu0
    %v2235 = vadd.f32 0.0, %v2234
    %v2236 = vpop.f32.mrb[0].mxu0
    %2237 = vdwg.mxu0
    %v2238 = vadd.f32 %v2123, %v2220
    %v2239 = vadd.f32 %v2128, %v2225
    %v2240 = vadd.f32 %v2133, %v2230
    %v2241 = vadd.f32 %v2138, %v2235
    %v2242 = vld [vmem:[%s12] sm:$0x1]
    %v2244 = vlaneseq
    %v2245 = vshrl.u32 %v2244, 7
    %v2246 = vsub.s32 0, %v2245
    %v2247 = vrot.slane %v2242, %v2246
    %v2249 = vadd.f32 %v2238, %v2247
    %v2250 = vadd.f32 %v2239, %v2247
    %v2251 = vadd.f32 %v2240, %v2247
    %v2252 = vadd.f32 %v2241, %v2247
    %v2253 = vld [vmem:[%s15] sm:$0x1]
    %v2254 = vld [vmem:[%s16] sm:$0x1]
    %v2255 = vsel %vm782, %v2249, 0.0
    %2256 = vadd.xlane.f32.xlu0 %v2255
    %v2257 = vpop.xlane.xlu0 %2256
    %v2258 = vsel %vm782, %v2250, 0.0
    %2259 = vadd.xlane.f32.xlu0 %v2258
    %v2260 = vpop.xlane.xlu0 %2259
    %v2261 = vsel %vm782, %v2251, 0.0
    %2262 = vadd.xlane.f32.xlu0 %v2261
    %v2263 = vpop.xlane.xlu0 %2262
    %v2264 = vsel %vm782, %v2252, 0.0
    %2265 = vadd.xlane.f32.xlu0 %v2264
    %v2266 = vpop.xlane.xlu0 %2265
    %v2267 = vrcp.pop 32.0
    %v2268 = vmul.f32 %v2257, %v2267
    %v2269 = vmul.f32 %v2260, %v2267
    %v2270 = vmul.f32 %v2263, %v2267
    %v2271 = vmul.f32 %v2266, %v2267
    %v2272 = vsub.f32 %v2249, %v2268
    %v2273 = vsub.f32 %v2250, %v2269
    %v2274 = vsub.f32 %v2251, %v2270
    %v2275 = vsub.f32 %v2252, %v2271
    %v2276 = vmul.f32 %v2272, %v2272
    %v2277 = vmul.f32 %v2273, %v2273
    %v2278 = vmul.f32 %v2274, %v2274
    %v2279 = vmul.f32 %v2275, %v2275
    %v2280 = vsel %vm782, %v2276, 0.0
    %2281 = vadd.xlane.f32.xlu0 %v2280
    %v2282 = vpop.xlane.xlu0 %2281
    %v2283 = vsel %vm782, %v2277, 0.0
    %2284 = vadd.xlane.f32.xlu0 %v2283
    %v2285 = vpop.xlane.xlu0 %2284
    %v2286 = vsel %vm782, %v2278, 0.0
    %2287 = vadd.xlane.f32.xlu0 %v2286
    %v2288 = vpop.xlane.xlu0 %2287
    %v2289 = vsel %vm782, %v2279, 0.0
    %2290 = vadd.xlane.f32.xlu0 %v2289
    %v2291 = vpop.xlane.xlu0 %2290
    %v2292 = vmul.f32 %v2282, %v2267
    %v2293 = vmul.f32 %v2285, %v2267
    %v2294 = vmul.f32 %v2288, %v2267
    %v2295 = vmul.f32 %v2291, %v2267
    %v2296 = vadd.f32 %v2292, 1e-05
    %v2297 = vadd.f32 %v2293, 1e-05
    %v2298 = vadd.f32 %v2294, 1e-05
    %v2299 = vadd.f32 %v2295, 1e-05
    %v2300 = vrsqrt.pop %v2296
    %v2301 = vrsqrt.pop %v2297
    %v2302 = vrsqrt.pop %v2298
    %v2303 = vrsqrt.pop %v2299
    %v2304 = vmul.f32 %v2272, %v2300
    %v2305 = vmul.f32 %v2273, %v2301
    %v2306 = vmul.f32 %v2274, %v2302
    %v2307 = vmul.f32 %v2275, %v2303
    %v2309 = vlaneseq
    %v2310 = vshrl.u32 %v2309, 7
    %v2311 = vsub.s32 0, %v2310
    %v2312 = vrot.slane %v2253, %v2311
    %v2314 = vmul.f32 %v2304, %v2312
    %v2315 = vmul.f32 %v2305, %v2312
    %v2316 = vmul.f32 %v2306, %v2312
    %v2317 = vmul.f32 %v2307, %v2312
    %v2319 = vlaneseq
    %v2320 = vshrl.u32 %v2319, 7
    %v2321 = vsub.s32 0, %v2320
    %v2322 = vrot.slane %v2254, %v2321
    %v2324 = vadd.f32 %v2314, %v2322
    %v2325 = vadd.f32 %v2315, %v2322
    %v2326 = vadd.f32 %v2316, %v2322
    %v2327 = vadd.f32 %v2317, %v2322
    %v2328 = vmax.f32 %v2324, 0.0
    %v2329 = vmax.f32 %v2325, 0.0
    %v2330 = vmax.f32 %v2326, 0.0
    %v2331 = vmax.f32 %v2327, 0.0
    %2332 = vst.msk [vmem:[#allocation2] sm:$0xff] %vm782, %v2328
    %2333 = vst.msk [vmem:[#allocation2 + $0x8] sm:$0xff] %vm782, %v2329
    %2334 = vst.msk [vmem:[#allocation2 + $0x10] sm:$0xff] %vm782, %v2330
    %2335 = vst.msk [vmem:[#allocation2 + $0x18] sm:$0xff] %vm782, %v2331
    %v2336 = vld [vmem:[%s13] sm:$0xff]
    %v2337 = vld [vmem:[%s13 + $0x8] sm:$0xff]
    %v2338 = vld [vmem:[%s13 + $0x10] sm:$0xff]
    %v2339 = vld [vmem:[%s13 + $0x18] sm:$0xff]
    %v2340 = vld [vmem:[%s13 + $0x20] sm:$0xff]
    %v2341 = vld [vmem:[%s13 + $0x28] sm:$0xff]
    %v2342 = vld [vmem:[%s13 + $0x30] sm:$0xff]
    %v2343 = vld [vmem:[%s13 + $0x38] sm:$0xff]
    %v2344 = vld [vmem:[%s13 + $0x40] sm:$0xff]
    %v2345 = vld [vmem:[%s13 + $0x48] sm:$0xff]
    %v2346 = vld [vmem:[%s13 + $0x50] sm:$0xff]
    %v2347 = vld [vmem:[%s13 + $0x58] sm:$0xff]
    %2350 = vrot.lane.b32.xlu0 %v1565, 96
    %v2351 = vpop.permute.xlu0 %2350
    %2352 = vrot.lane.b32.xlu0 %v1566, 96
    %v2353 = vpop.permute.xlu0 %2352
    %v2354 = vsel %vm782, %v2351, 0
    %v2356 = vsel %vm782, %v2353, 0
    %2358 = vmatprep.subr.mxu0 0.0
    %2359 = vmatpush1.msra.mxu0 %v2340
    %2360 = vmatprep.subr.mxu0 0.0
    %2361 = vmatpush1.msra.mxu0 %v2341
    %2362 = vmatprep.subr.mxu0 0.0
    %2363 = vmatpush1.msra.mxu0 %v2342
    %2364 = vmatprep.subr.mxu0 0.0
    %2365 = vmatpush1.msra.mxu0 %v2343
    %2366 = vmatprep.subr.mxu0 0.0
    %2367 = vmatpush1.msra.mxu0 0.0
    %2368 = vmatprep.subr.mxu0 0.0
    %2369 = vmatpush1.msra.mxu0 0.0
    %2370 = vmatprep.subr.mxu0 0.0
    %2371 = vmatpush1.msra.mxu0 0.0
    %2372 = vmatprep.subr.mxu0 0.0
    %2373 = vmatpush1.msra.mxu0 0.0
    %2374 = vmatprep.subr.mxu0 0.0
    %2375 = vmatpush1.msra.mxu0 0.0
    %2376 = vmatprep.subr.mxu0 0.0
    %2377 = vmatpush1.msra.mxu0 0.0
    %2378 = vmatprep.subr.mxu0 0.0
    %2379 = vmatpush1.msra.mxu0 0.0
    %2380 = vmatprep.subr.mxu0 0.0
    %2381 = vmatpush1.msra.mxu0 0.0
    %2382 = vmatprep.subr.mxu0 0.0
    %2383 = vmatpush1.msra.mxu0 0.0
    %2384 = vmatprep.subr.mxu0 0.0
    %2385 = vmatpush1.msra.mxu0 0.0
    %2386 = vmatprep.subr.mxu0 0.0
    %2387 = vmatpush1.msra.mxu0 0.0
    %2388 = vmatprep.subr.mxu0 0.0
    %2389 = vmatpush1.msra.mxu0 0.0
    %2390 = vmatprep.subr.mxu0 0.0
    %2391 = vmatpush1.msra.mxu0 0.0
    %2392 = vmatprep.subr.mxu0 0.0
    %2393 = vmatpush1.msra.mxu0 0.0
    %2394 = vmatprep.subr.mxu0 0.0
    %2395 = vmatpush1.msra.mxu0 0.0
    %2396 = vmatprep.subr.mxu0 0.0
    %2397 = vmatpush1.msra.mxu0 0.0
    %2398 = vmatprep.subr.mxu0 0.0
    %2399 = vmatpush1.msra.mxu0 0.0
    %2400 = vmatprep.subr.mxu0 0.0
    %2401 = vmatpush1.msra.mxu0 0.0
    %2402 = vmatprep.subr.mxu0 0.0
    %2403 = vmatpush1.msra.mxu0 0.0
    %2404 = vmatprep.subr.mxu0 0.0
    %2405 = vmatpush1.msra.mxu0 0.0
    %2406 = vmatprep.subr.mxu0 0.0
    %2407 = vmatpush1.msra.mxu0 0.0
    %2408 = vmatprep.subr.mxu0 0.0
    %2409 = vmatpush1.msra.mxu0 0.0
    %2410 = vmatprep.subr.mxu0 0.0
    %2411 = vmatpush1.msra.mxu0 0.0
    %2412 = vmatprep.subr.mxu0 0.0
    %2413 = vmatpush1.msra.mxu0 0.0
    %2414 = vmatprep.subr.mxu0 0.0
    %2415 = vmatpush1.msra.mxu0 0.0
    %2416 = vmatprep.subr.mxu0 0.0
    %2417 = vmatpush1.msra.mxu0 0.0
    %2418 = vmatprep.subr.mxu0 0.0
    %2419 = vmatpush1.msra.mxu0 0.0
    %2420 = vmatprep.subr.mxu0 0.0
    %2421 = vmatpush1.msra.mxu0 0.0
    %2422 = vmatprep.mubr.f32.mxu0 0.0
    %2423 = vmatmul.mubr.f32.gmra.mrb[0].mxu0 %v2354
    %v2424 = vpop.f32.mrb[0].mxu0
    %v2425 = vadd.f32 0.0, %v2424
    %v2426 = vpop.f32.mrb[0].mxu0
    %2427 = vmatprep.mubr.f32.mxu0 0.0
    %2428 = vmatmul.mubr.f32.gmra.mrb[0].mxu0 %v2356
    %v2429 = vpop.f32.mrb[0].mxu0
    %v2430 = vadd.f32 0.0, %v2429
    %v2431 = vpop.f32.mrb[0].mxu0
    %2432 = vdwg.mxu0
    %v2433 = vsel %vm782, %v261, 0
    %v2435 = vsel %vm782, %v266, 0
    %2437 = vmatprep.subr.mxu0 0.0
    %2438 = vmatpush1.msra.mxu0 %v2336
    %2439 = vmatprep.subr.mxu0 0.0
    %2440 = vmatpush1.msra.mxu0 %v2337
    %2441 = vmatprep.subr.mxu0 0.0
    %2442 = vmatpush1.msra.mxu0 %v2338
    %2443 = vmatprep.subr.mxu0 0.0
    %2444 = vmatpush1.msra.mxu0 %v2339
    %2445 = vmatprep.subr.mxu0 0.0
    %2446 = vmatpush1.msra.mxu0 0.0
    %2447 = vmatprep.subr.mxu0 0.0
    %2448 = vmatpush1.msra.mxu0 0.0
    %2449 = vmatprep.subr.mxu0 0.0
    %2450 = vmatpush1.msra.mxu0 0.0
    %2451 = vmatprep.subr.mxu0 0.0
    %2452 = vmatpush1.msra.mxu0 0.0
    %2453 = vmatprep.subr.mxu0 0.0
    %2454 = vmatpush1.msra.mxu0 0.0
    %2455 = vmatprep.subr.mxu0 0.0
    %2456 = vmatpush1.msra.mxu0 0.0
    %2457 = vmatprep.subr.mxu0 0.0
    %2458 = vmatpush1.msra.mxu0 0.0
    %2459 = vmatprep.subr.mxu0 0.0
    %2460 = vmatpush1.msra.mxu0 0.0
    %2461 = vmatprep.subr.mxu0 0.0
    %2462 = vmatpush1.msra.mxu0 0.0
    %2463 = vmatprep.subr.mxu0 0.0
    %2464 = vmatpush1.msra.mxu0 0.0
    %2465 = vmatprep.subr.mxu0 0.0
    %2466 = vmatpush1.msra.mxu0 0.0
    %2467 = vmatprep.subr.mxu0 0.0
    %2468 = vmatpush1.msra.mxu0 0.0
    %2469 = vmatprep.subr.mxu0 0.0
    %2470 = vmatpush1.msra.mxu0 0.0
    %2471 = vmatprep.subr.mxu0 0.0
    %2472 = vmatpush1.msra.mxu0 0.0
    %2473 = vmatprep.subr.mxu0 0.0
    %2474 = vmatpush1.msra.mxu0 0.0
    %2475 = vmatprep.subr.mxu0 0.0
    %2476 = vmatpush1.msra.mxu0 0.0
    %2477 = vmatprep.subr.mxu0 0.0
    %2478 = vmatpush1.msra.mxu0 0.0
    %2479 = vmatprep.subr.mxu0 0.0
    %2480 = vmatpush1.msra.mxu0 0.0
    %2481 = vmatprep.subr.mxu0 0.0
    %2482 = vmatpush1.msra.mxu0 0.0
    %2483 = vmatprep.subr.mxu0 0.0
    %2484 = vmatpush1.msra.mxu0 0.0
    %2485 = vmatprep.subr.mxu0 0.0
    %2486 = vmatpush1.msra.mxu0 0.0
    %2487 = vmatprep.subr.mxu0 0.0
    %2488 = vmatpush1.msra.mxu0 0.0
    %2489 = vmatprep.subr.mxu0 0.0
    %2490 = vmatpush1.msra.mxu0 0.0
    %2491 = vmatprep.subr.mxu0 0.0
    %2492 = vmatpush1.msra.mxu0 0.0
    %2493 = vmatprep.subr.mxu0 0.0
    %2494 = vmatpush1.msra.mxu0 0.0
    %2495 = vmatprep.subr.mxu0 0.0
    %2496 = vmatpush1.msra.mxu0 0.0
    %2497 = vmatprep.subr.mxu0 0.0
    %2498 = vmatpush1.msra.mxu0 0.0
    %2499 = vmatprep.subr.mxu0 0.0
    %2500 = vmatpush1.msra.mxu0 0.0
    %2501 = vmatprep.mubr.f32.mxu0 0.0
    %2502 = vmatmul.mubr.f32.gmra.mrb[0].mxu0 %v2433
    %v2503 = vpop.f32.mrb[0].mxu0
    %v2504 = vadd.f32 %v2425, %v2503
    %v2505 = vpop.f32.mrb[0].mxu0
    %2506 = vmatprep.mubr.f32.mxu0 0.0
    %2507 = vmatmul.mubr.f32.gmra.mrb[0].mxu0 %v2435
    %v2508 = vpop.f32.mrb[0].mxu0
    %v2509 = vadd.f32 %v2430, %v2508
    %v2510 = vpop.f32.mrb[0].mxu0
    %2511 = vdwg.mxu0
    %v2513 = vsel %vm782, %v1750, 0
    %v2516 = vsel %vm782, %v1936, 0
    %2518 = vmatprep.subr.mxu0 0.0
    %2519 = vmatpush1.msra.mxu0 %v2344
    %2520 = vmatprep.subr.mxu0 0.0
    %2521 = vmatpush1.msra.mxu0 %v2345
    %2522 = vmatprep.subr.mxu0 0.0
    %2523 = vmatpush1.msra.mxu0 %v2346
    %2524 = vmatprep.subr.mxu0 0.0
    %2525 = vmatpush1.msra.mxu0 %v2347
    %2526 = vmatprep.subr.mxu0 0.0
    %2527 = vmatpush1.msra.mxu0 0.0
    %2528 = vmatprep.subr.mxu0 0.0
    %2529 = vmatpush1.msra.mxu0 0.0
    %2530 = vmatprep.subr.mxu0 0.0
    %2531 = vmatpush1.msra.mxu0 0.0
    %2532 = vmatprep.subr.mxu0 0.0
    %2533 = vmatpush1.msra.mxu0 0.0
    %2534 = vmatprep.subr.mxu0 0.0
    %2535 = vmatpush1.msra.mxu0 0.0
    %2536 = vmatprep.subr.mxu0 0.0
    %2537 = vmatpush1.msra.mxu0 0.0
    %2538 = vmatprep.subr.mxu0 0.0
    %2539 = vmatpush1.msra.mxu0 0.0
    %2540 = vmatprep.subr.mxu0 0.0
    %2541 = vmatpush1.msra.mxu0 0.0
    %2542 = vmatprep.subr.mxu0 0.0
    %2543 = vmatpush1.msra.mxu0 0.0
    %2544 = vmatprep.subr.mxu0 0.0
    %2545 = vmatpush1.msra.mxu0 0.0
    %2546 = vmatprep.subr.mxu0 0.0
    %2547 = vmatpush1.msra.mxu0 0.0
    %2548 = vmatprep.subr.mxu0 0.0
    %2549 = vmatpush1.msra.mxu0 0.0
    %2550 = vmatprep.subr.mxu0 0.0
    %2551 = vmatpush1.msra.mxu0 0.0
    %2552 = vmatprep.subr.mxu0 0.0
    %2553 = vmatpush1.msra.mxu0 0.0
    %2554 = vmatprep.subr.mxu0 0.0
    %2555 = vmatpush1.msra.mxu0 0.0
    %2556 = vmatprep.subr.mxu0 0.0
    %2557 = vmatpush1.msra.mxu0 0.0
    %2558 = vmatprep.subr.mxu0 0.0
    %2559 = vmatpush1.msra.mxu0 0.0
    %2560 = vmatprep.subr.mxu0 0.0
    %2561 = vmatpush1.msra.mxu0 0.0
    %2562 = vmatprep.subr.mxu0 0.0
    %2563 = vmatpush1.msra.mxu0 0.0
    %2564 = vmatprep.subr.mxu0 0.0
    %2565 = vmatpush1.msra.mxu0 0.0
    %2566 = vmatprep.subr.mxu0 0.0
    %2567 = vmatpush1.msra.mxu0 0.0
    %2568 = vmatprep.subr.mxu0 0.0
    %2569 = vmatpush1.msra.mxu0 0.0
    %2570 = vmatprep.subr.mxu0 0.0
    %2571 = vmatpush1.msra.mxu0 0.0
    %2572 = vmatprep.subr.mxu0 0.0
    %2573 = vmatpush1.msra.mxu0 0.0
    %2574 = vmatprep.subr.mxu0 0.0
    %2575 = vmatpush1.msra.mxu0 0.0
    %2576 = vmatprep.subr.mxu0 0.0
    %2577 = vmatpush1.msra.mxu0 0.0
    %2578 = vmatprep.subr.mxu0 0.0
    %2579 = vmatpush1.msra.mxu0 0.0
    %2580 = vmatprep.subr.mxu0 0.0
    %2581 = vmatpush1.msra.mxu0 0.0
    %2582 = vmatprep.mubr.f32.mxu0 0.0
    %2583 = vmatmul.mubr.f32.gmra.mrb[0].mxu0 %v2513
    %v2584 = vpop.f32.mrb[0].mxu0
    %v2585 = vadd.f32 0.0, %v2584
    %v2586 = vpop.f32.mrb[0].mxu0
    %2587 = vmatprep.mubr.f32.mxu0 0.0
    %2588 = vmatmul.mubr.f32.gmra.mrb[0].mxu0 %v2516
    %v2589 = vpop.f32.mrb[0].mxu0
    %v2590 = vadd.f32 0.0, %v2589
    %v2591 = vpop.f32.mrb[0].mxu0
    %2592 = vdwg.mxu0
    %v2593 = vadd.f32 %v2504, %v2585
    %v2594 = vadd.f32 %v2509, %v2590
    %v2595 = vld [vmem:[%s14] sm:$0x1]
    %v2597 = vlaneseq
    %v2598 = vshrl.u32 %v2597, 7
    %v2599 = vsub.s32 0, %v2598
    %v2600 = vrot.slane %v2595, %v2599
    %v2602 = vadd.f32 %v2593, %v2600
    %v2603 = vadd.f32 %v2594, %v2600
    %v2604 = vld [vmem:[%s17] sm:$0x1]
    %v2605 = vld [vmem:[%s18] sm:$0x1]
    %v2606 = vsel %vm782, %v2602, 0.0
    %2607 = vadd.xlane.f32.xlu0 %v2606
    %v2608 = vpop.xlane.xlu0 %2607
    %v2609 = vsel %vm782, %v2603, 0.0
    %2610 = vadd.xlane.f32.xlu0 %v2609
    %v2611 = vpop.xlane.xlu0 %2610
    %v2612 = vmul.f32 %v2608, %v2267
    %v2613 = vmul.f32 %v2611, %v2267
    %v2614 = vsub.f32 %v2602, %v2612
    %v2615 = vsub.f32 %v2603, %v2613
    %v2616 = vmul.f32 %v2614, %v2614
    %v2617 = vmul.f32 %v2615, %v2615
    %v2618 = vsel %vm782, %v2616, 0.0
    %2619 = vadd.xlane.f32.xlu0 %v2618
    %v2620 = vpop.xlane.xlu0 %2619
    %v2621 = vsel %vm782, %v2617, 0.0
    %2622 = vadd.xlane.f32.xlu0 %v2621
    %v2623 = vpop.xlane.xlu0 %2622
    %v2624 = vmul.f32 %v2620, %v2267
    %v2625 = vmul.f32 %v2623, %v2267
    %v2626 = vadd.f32 %v2624, 1e-05
    %v2627 = vadd.f32 %v2625, 1e-05
    %v2628 = vrsqrt.pop %v2626
    %v2629 = vrsqrt.pop %v2627
    %v2630 = vmul.f32 %v2614, %v2628
    %v2631 = vmul.f32 %v2615, %v2629
    %v2633 = vlaneseq
    %v2634 = vshrl.u32 %v2633, 7
    %v2635 = vsub.s32 0, %v2634
    %v2636 = vrot.slane %v2604, %v2635
    %v2638 = vmul.f32 %v2630, %v2636
    %v2639 = vmul.f32 %v2631, %v2636
    %v2641 = vlaneseq
    %v2642 = vshrl.u32 %v2641, 7
    %v2643 = vsub.s32 0, %v2642
    %v2644 = vrot.slane %v2605, %v2643
    %v2646 = vadd.f32 %v2638, %v2644
    %v2647 = vadd.f32 %v2639, %v2644
    %v2648 = vmax.f32 %v2646, 0.0
    %v2649 = vmax.f32 %v2647, 0.0
    %2650 = vst.msk [vmem:[#allocation4] sm:$0xff] %vm782, %v2648
    %2651 = vst.msk [vmem:[#allocation4 + $0x8] sm:$0xff] %vm782, %v2649
    // Predicated region
    $region78: #{bm3_forward.1} parent=1 // pred_check
      _
    $region79: #{bm3_forward.1} parent=1 // pred_check_branch
      %2653 = sbr.rel (0) target = $region81
    $region80: #{bm3_forward.1} parent=1 // pred_region
      %s2655 = ssub.s32 512, 512
      %2656 = vsyncadd [#allocation3], %s2655
      %s2657 = sshll.u32 [#allocation2], 4
      %s2658 = int_to_ptr.vmem [resolvable:$true] %s2657
      %2663 = dma.vmem_to_hbm [thread:$0]  %s2658, 512, %s19, [#allocation3], 128, 128, 8
    $region81: #{bm3_forward.1} parent=1 // pred_fallthru
      _
    // Predicated region
    $region82: #{bm3_forward.1} parent=1 // pred_check
      _
    $region83: #{bm3_forward.1} parent=1 // pred_check_branch
      %2665 = sbr.rel (0) target = $region85
    $region84: #{bm3_forward.1} parent=1 // pred_region
      %s2667 = ssub.s32 256, 256
      %2668 = vsyncadd [#allocation5], %s2667
      %s2669 = sshll.u32 [#allocation4], 4
      %s2670 = int_to_ptr.vmem [resolvable:$true] %s2669
      %2675 = dma.vmem_to_hbm [thread:$0]  %s2670, 256, %s20, [#allocation5], 128, 128, 8
    $region85: #{bm3_forward.1} parent=1 // pred_fallthru
      _
    // Predicated region
    $region86: #{bm3_forward.1} parent=1 // pred_check
      _
    $region87: #{bm3_forward.1} parent=1 // pred_check_branch
      %2677 = sbr.rel (0) target = $region89
    $region88: #{bm3_forward.1} parent=1 // pred_region
      %2678 = dma.done [#allocation3], 512
    $region89: #{bm3_forward.1} parent=1 // pred_fallthru
      _
    // Predicated region
    $region90: #{bm3_forward.1} parent=1 // pred_check
      _
    $region91: #{bm3_forward.1} parent=1 // pred_check_branch
      %2680 = sbr.rel (0) target = $region93
    $region92: #{bm3_forward.1} parent=1 // pred_region
      %2681 = dma.done [#allocation5], 256
    $region93: #{bm3_forward.1} parent=1 // pred_fallthru
      _
    %2682 = vsyncpa [#allocation3], 1
    %2683 = vsyncpa [#allocation5], 1

</llo_original>
